<compile_context>
chip_gen: v6e
topology: v6e:2x2x1
jax: 0.10.0
libtpu: 0.0.40
codegen_flags: <defaults>
</compile_context>

<pallas_src>
import functools
import math

import numpy as np
import jax
import jax.numpy as jnp
from jax import lax
from jax.experimental import pallas as pl
from jax.experimental.pallas import tpu as pltpu

EPS = 1e-5
GN_GROUPS = 4  # nn.GroupNorm(4, ...) is hardcoded in the reference module


# ----------------------------------------------------------------------------
# circle_padding index computation (exact replica of the reference algorithm,
# run at trace time on static shapes).
# ----------------------------------------------------------------------------
def circle_padding_indices(padding, length_times):
    index = list(range(0, length_times)) + list(range(length_times - 2, 0, -1))
    total_num = 2 * padding + length_times
    num_c = padding // len(index)
    if num_c * len(index) < padding:
        num_c = num_c + 1
    expand_number = num_c * len(index) - padding
    for _ in range(num_c):
        index = index + index + index
    index_f = []
    for i in range(expand_number, expand_number + total_num):
        index_f.append(index[i])
    return index_f


def build_tap_selection_matrix(dilation, T):
    """(T, 3T) matrix P with (x @ P)[:, j*T + t] == x[:, circle_pad_idx[t + j*dilation]].

    Folds circle padding + the three dilated conv tap gathers into one static matmul.
    """
    idx_full = circle_padding_indices(dilation, T)  # length T + 2*dilation
    P = np.zeros((T, 3 * T), dtype=np.float32)
    for j in range(3):
        for t in range(T):
            P[idx_full[t + j * dilation], j * T + t] = 1.0
    return jnp.asarray(P)


# ----------------------------------------------------------------------------
# In-kernel helpers
# ----------------------------------------------------------------------------
def _group_norm(x, gamma, beta, num_groups):
    # x: (C, T), gamma/beta: (C, 1); GroupNorm stats per group over (C//G, T).
    C, T = x.shape
    cg = C // num_groups
    xg = x.reshape(num_groups, cg, T)
    denom = 1.0 / float(cg * T)
    mu = jnp.sum(jnp.sum(xg, axis=2, keepdims=True), axis=1, keepdims=True) * denom
    d = xg - mu
    var = jnp.sum(jnp.sum(d * d, axis=2, keepdims=True), axis=1, keepdims=True) * denom
    xn = (d * lax.rsqrt(var + EPS)).reshape(C, T)
    return xn * gamma + beta


# ----------------------------------------------------------------------------
# Fused TCN forward kernel (one batch element per grid step, all layers inside)
# ----------------------------------------------------------------------------
def tcn_fused_kernel(fea_ref, pos_ref, txt_ref,
                     ln_g_ref, ln_b_ref,
                     wq_ref, wkv_ref, wo_ref,
                     w1row_ref, tap_ref, gn1_g_ref, gn1_b_ref,
                     w2_ref, gn2_g_ref, gn2_b_ref,
                     fea_out_ref, w_out_ref,
                     *, num_layers, groups, gn_groups):
    C, T = fea_ref.shape
    _, L = txt_ref.shape
    dg = C // groups
    scale = 1.0 / math.sqrt(dg)
    f32 = jnp.float32

    # fea = fea + position (fused, no separate pallas_call)
    x = fea_ref[...] + pos_ref[...]          # (C, T)
    txt = txt_ref[...]                       # (C, L)

    for i in range(num_layers):
        # --- prenorm: LayerNorm over channel dim, per time step ---
        mu = jnp.mean(x, axis=0, keepdims=True)
        var = jnp.mean((x - mu) ** 2, axis=0, keepdims=True)
        xn = (x - mu) * lax.rsqrt(var + EPS) * ln_g_ref[i] + ln_b_ref[i]
        res0 = xn

        # --- grouped cross attention (stand-in, see TODO above) ---
        q = jnp.dot(wq_ref[i], xn, preferred_element_type=f32)       # (C, T)
        kv = jnp.dot(wkv_ref[i], txt, preferred_element_type=f32)    # (2C, L), fused k|v
        k = kv[:C, :]
        v = kv[C:, :]
        q3 = q.reshape(groups, dg, T)
        k3 = k.reshape(groups, dg, L)
        v3 = v.reshape(groups, dg, L)
        s = jnp.einsum('gdt,gdl->gtl', q3, k3,
                       preferred_element_type=f32) * scale            # (G, T, L)
        s = s - jnp.max(s, axis=-1, keepdims=True)
        e = jnp.exp(s)
        wsm = e * pl.reciprocal(jnp.sum(e, axis=-1, keepdims=True), approx=True)
        w_out_ref[i] = wsm                                            # (G, T, L)
        att = jnp.einsum('gdl,gtl->gdt', v3, wsm,
                         preferred_element_type=f32)                  # (G, dg, T)
        x = jnp.dot(wo_ref[i], att.reshape(C, T),
                    preferred_element_type=f32) + res0
        res1 = x

        # --- circle padding + dilated Conv1d(k=3, bias=False) as two matmuls ---
        xp = jnp.dot(x, tap_ref[i], preferred_element_type=f32)       # (C, 3T) shifted taps
        x3 = jnp.concatenate([xp[:, 0:T], xp[:, T:2 * T], xp[:, 2 * T:3 * T]],
                             axis=0)                                  # (3C, T)
        h = jnp.dot(w1row_ref[i], x3, preferred_element_type=f32)     # (M, T), K=3C
        h = _group_norm(h, gn1_g_ref[i], gn1_b_ref[i], gn_groups)
        # Dropout: identity (eval mode)
        h = jnp.maximum(h, 0.0)
        y = jnp.dot(w2_ref[i], h, preferred_element_type=f32)         # (C, T)
        y = _group_norm(y, gn2_g_ref[i], gn2_b_ref[i], gn_groups)
        x = res1 + y

    fea_out_ref[...] = x


# ----------------------------------------------------------------------------
# Parameters (deterministic, PyTorch-default-style init)
# ----------------------------------------------------------------------------
def init_params(key, config):
    C = config['attention_dim']
    M = config['MLP_dim']
    layers = []
    for _ in range(config['layer_num']):
        keys = jax.random.split(key, 7)
        key = keys[0]
        layer = dict(
            ln_g=jnp.ones((C, 1), jnp.float32),
            ln_b=jnp.zeros((C, 1), jnp.float32),
            wq=jax.random.normal(keys[1], (C, C), jnp.float32) / math.sqrt(C),
            wk=jax.random.normal(keys[2], (C, C), jnp.float32) / math.sqrt(C),
            wv=jax.random.normal(keys[3], (C, C), jnp.float32) / math.sqrt(C),
            wo=jax.random.normal(keys[4], (C, C), jnp.float32) / math.sqrt(C),
            w1=jax.random.normal(keys[5], (3, M, C), jnp.float32) / math.sqrt(3 * C),
            gn1_g=jnp.ones((M, 1), jnp.float32),
            gn1_b=jnp.zeros((M, 1), jnp.float32),
            w2=jax.random.normal(keys[6], (C, M), jnp.float32) / math.sqrt(M),
            gn2_g=jnp.ones((C, 1), jnp.float32),
            gn2_b=jnp.zeros((C, 1), jnp.float32),
        )
        layers.append(layer)
    return layers


# ----------------------------------------------------------------------------
# Forward (wrapper glue around the single fused Pallas kernel)
# ----------------------------------------------------------------------------
def tcn_forward(layers, fea, text_fea, position, config, mask=None):
    del mask  # unused in the reference forward
    B, C, T = fea.shape
    L = text_fea.shape[-1]
    groups = config['groups']
    num_layers = config['layer_num']

    # Stack per-layer params along a leading layer axis; pre-fuse wk|wv and conv taps.
    def stack(name):
        return jnp.stack([p[name] for p in layers], axis=0)

    ln_g = stack('ln_g')
    ln_b = stack('ln_b')
    wq = stack('wq')
    wkv = jnp.stack([jnp.concatenate([p['wk'], p['wv']], axis=0) for p in layers], axis=0)
    wo = stack('wo')
    w1row = jnp.stack(
        [jnp.concatenate([p['w1'][0], p['w1'][1], p['w1'][2]], axis=1) for p in layers],
        axis=0)                                                   # (Lyr, M, 3C)
    taps = jnp.stack([build_tap_selection_matrix(int(2 ** i), T)
                      for i in range(num_layers)], axis=0)        # (Lyr, T, 3T)
    gn1_g = stack('gn1_g')
    gn1_b = stack('gn1_b')
    w2 = stack('w2')
    gn2_g = stack('gn2_g')
    gn2_b = stack('gn2_b')

    shared = [ln_g, ln_b, wq, wkv, wo, w1row, taps, gn1_g, gn1_b, w2, gn2_g, gn2_b]

    def batch_spec(shape):
        n = len(shape)
        return pl.BlockSpec((None,) + tuple(shape[1:]),
                            lambda b, n=n: (b,) + (0,) * (n - 1))

    def shared_spec(shape):
        n = len(shape)
        return pl.BlockSpec(tuple(shape), lambda b, n=n: (0,) * n)

    kern = functools.partial(tcn_fused_kernel,
                             num_layers=num_layers, groups=groups, gn_groups=GN_GROUPS)

    fea_out, w_all = pl.pallas_call(
        kern,
        grid=(B,),
        in_specs=[batch_spec(fea.shape), batch_spec(position.shape),
                  batch_spec(text_fea.shape)] + [shared_spec(a.shape) for a in shared],
        out_specs=(
            pl.BlockSpec((None, C, T), lambda b: (b, 0, 0)),
            pl.BlockSpec((num_layers, None, groups, T, L), lambda b: (0, b, 0, 0, 0)),
        ),
        out_shape=(
            jax.ShapeDtypeStruct((B, C, T), jnp.float32),
            jax.ShapeDtypeStruct((num_layers, B, groups, T, L), jnp.float32),
        ),
        input_output_aliases={0: 0},   # fea is residual-updated; reuse its HBM buffer
        compiler_params=pltpu.CompilerParams(dimension_semantics=("parallel",)),
    )(fea, position, text_fea, *shared)

    weights = [w_all[i] for i in range(num_layers)]
    return fea_out, weights


# ----------------------------------------------------------------------------
if __name__ == "__main__":
    config = dict(
        layer_num=2,
        attention_dim=32,
        MLP_dim=64,
        groups=4,
        dropout=0.1,
        padding_type='circle',
        with_attention=True,
        with_mlp=True,
        prenorm=True,
    )
    B, C, T, L = 2, config['attention_dim'], 16, 8

    key = jax.random.PRNGKey(0)
    k_fea, k_txt, k_pos, k_par = jax.random.split(key, 4)
    fea = jax.random.normal(k_fea, (B, C, T), jnp.float32)
    text_fea = jax.random.normal(k_txt, (B, C, L), jnp.float32)
    position = jax.random.normal(k_pos, (B, C, T), jnp.float32)

    layers = init_params(k_par, config)

    out_fea, out_weights = tcn_forward(layers, fea, text_fea, position, config)
    out_fea = jax.block_until_ready(out_fea)
    out_weights = [jax.block_until_ready(w) for w in out_weights]

    assert out_fea.shape == (B, C, T)
    assert len(out_weights) == config['layer_num']
    assert all(w.shape == (B, config['groups'], T, L) for w in out_weights)
    assert bool(jnp.all(jnp.isfinite(out_fea)))
    assert all(bool(jnp.all(jnp.isfinite(w))) for w in out_weights)
    print("KERNEL_OK")
</pallas_src>

<mosaic_0001>
module attributes {stable_mosaic.version = 11 : i64} {
  func.func @tcn_fused_kernel(%arg0: i32, %arg1: memref<1x32x16xf32, #tpu.memory_space<vmem>>, %arg2: memref<1x32x16xf32, #tpu.memory_space<vmem>>, %arg3: memref<1x32x8xf32, #tpu.memory_space<vmem>>, %arg4: memref<2x32x1xf32, #tpu.memory_space<vmem>>, %arg5: memref<2x32x1xf32, #tpu.memory_space<vmem>>, %arg6: memref<2x32x32xf32, #tpu.memory_space<vmem>>, %arg7: memref<2x64x32xf32, #tpu.memory_space<vmem>>, %arg8: memref<2x32x32xf32, #tpu.memory_space<vmem>>, %arg9: memref<2x64x96xf32, #tpu.memory_space<vmem>>, %arg10: memref<2x16x48xf32, #tpu.memory_space<vmem>>, %arg11: memref<2x64x1xf32, #tpu.memory_space<vmem>>, %arg12: memref<2x64x1xf32, #tpu.memory_space<vmem>>, %arg13: memref<2x32x64xf32, #tpu.memory_space<vmem>>, %arg14: memref<2x32x1xf32, #tpu.memory_space<vmem>>, %arg15: memref<2x32x1xf32, #tpu.memory_space<vmem>>, %arg16: memref<1x32x16xf32, #tpu.memory_space<vmem>>, %arg17: memref<2x1x4x16x8xf32, #tpu.memory_space<vmem>>) attributes {dimension_semantics = [#tpu.dimension_semantics<parallel>], iteration_bounds = array<i64: 2>, scalar_prefetch = 0 : i64, scratch_operands = 0 : i64, tpu.core_type = #tpu.core_type<tc>, window_params = [{transform_indices = @transform_0, window_bounds = array<i64: 1, 32, 16>}, {transform_indices = @transform_1, window_bounds = array<i64: 1, 32, 16>}, {transform_indices = @transform_2, window_bounds = array<i64: 1, 32, 8>}, {pipeline_mode = #tpu.pipeline_mode<synchronous>, transform_indices = @transform_3, window_bounds = array<i64: 2, 32, 1>}, {pipeline_mode = #tpu.pipeline_mode<synchronous>, transform_indices = @transform_4, window_bounds = array<i64: 2, 32, 1>}, {pipeline_mode = #tpu.pipeline_mode<synchronous>, transform_indices = @transform_5, window_bounds = array<i64: 2, 32, 32>}, {pipeline_mode = #tpu.pipeline_mode<synchronous>, transform_indices = @transform_6, window_bounds = array<i64: 2, 64, 32>}, {pipeline_mode = #tpu.pipeline_mode<synchronous>, transform_indices = @transform_7, window_bounds = array<i64: 2, 32, 32>}, {pipeline_mode = #tpu.pipeline_mode<synchronous>, transform_indices = @transform_8, window_bounds = array<i64: 2, 64, 96>}, {pipeline_mode = #tpu.pipeline_mode<synchronous>, transform_indices = @transform_9, window_bounds = array<i64: 2, 16, 48>}, {pipeline_mode = #tpu.pipeline_mode<synchronous>, transform_indices = @transform_10, window_bounds = array<i64: 2, 64, 1>}, {pipeline_mode = #tpu.pipeline_mode<synchronous>, transform_indices = @transform_11, window_bounds = array<i64: 2, 64, 1>}, {pipeline_mode = #tpu.pipeline_mode<synchronous>, transform_indices = @transform_12, window_bounds = array<i64: 2, 32, 64>}, {pipeline_mode = #tpu.pipeline_mode<synchronous>, transform_indices = @transform_13, window_bounds = array<i64: 2, 32, 1>}, {pipeline_mode = #tpu.pipeline_mode<synchronous>, transform_indices = @transform_14, window_bounds = array<i64: 2, 32, 1>}, {transform_indices = @transform_15, window_bounds = array<i64: 1, 32, 16>}, {transform_indices = @transform_16, window_bounds = array<i64: 2, 1, 4, 16, 8>}]} {
    %c0 = arith.constant 0 : index
    %c0_0 = arith.constant 0 : index
    %c0_1 = arith.constant 0 : index
    %0 = vector.load %arg1[%c0, %c0_0, %c0_1] : memref<1x32x16xf32, #tpu.memory_space<vmem>>, vector<1x32x16xf32>
    %1 = vector.shape_cast %0 : vector<1x32x16xf32> to vector<32x16xf32>
    %c0_2 = arith.constant 0 : index
    %c0_3 = arith.constant 0 : index
    %c0_4 = arith.constant 0 : index
    %2 = vector.load %arg2[%c0_2, %c0_3, %c0_4] : memref<1x32x16xf32, #tpu.memory_space<vmem>>, vector<1x32x16xf32>
    %3 = vector.shape_cast %2 : vector<1x32x16xf32> to vector<32x16xf32>
    %4 = arith.addf %1, %3 : vector<32x16xf32>
    %c0_5 = arith.constant 0 : index
    %c0_6 = arith.constant 0 : index
    %c0_7 = arith.constant 0 : index
    %5 = vector.load %arg3[%c0_5, %c0_6, %c0_7] : memref<1x32x8xf32, #tpu.memory_space<vmem>>, vector<1x32x8xf32>
    %6 = vector.shape_cast %5 : vector<1x32x8xf32> to vector<32x8xf32>
    %cst = arith.constant dense<0.000000e+00> : vector<16xf32>
    %7 = vector.multi_reduction <add>, %4, %cst [0] : vector<32x16xf32> to vector<16xf32>
    %8 = vector.shape_cast %7 : vector<16xf32> to vector<1x16xf32>
    %cst_8 = arith.constant 3.200000e+01 : f32
    %9 = vector.broadcast %cst_8 : f32 to vector<1x16xf32>
    %10 = arith.divf %8, %9 : vector<1x16xf32>
    %11 = vector.broadcast %10 : vector<1x16xf32> to vector<32x16xf32>
    %12 = arith.subf %4, %11 : vector<32x16xf32>
    %13 = arith.mulf %12, %12 : vector<32x16xf32>
    %cst_9 = arith.constant dense<0.000000e+00> : vector<16xf32>
    %14 = vector.multi_reduction <add>, %13, %cst_9 [0] : vector<32x16xf32> to vector<16xf32>
    %15 = vector.shape_cast %14 : vector<16xf32> to vector<1x16xf32>
    %cst_10 = arith.constant 3.200000e+01 : f32
    %16 = vector.broadcast %cst_10 : f32 to vector<1x16xf32>
    %17 = arith.divf %15, %16 : vector<1x16xf32>
    %18 = vector.broadcast %10 : vector<1x16xf32> to vector<32x16xf32>
    %19 = arith.subf %4, %18 : vector<32x16xf32>
    %cst_11 = arith.constant 9.99999974E-6 : f32
    %20 = vector.broadcast %cst_11 : f32 to vector<1x16xf32>
    %21 = arith.addf %17, %20 : vector<1x16xf32>
    %22 = math.rsqrt %21 : vector<1x16xf32>
    %23 = vector.broadcast %22 : vector<1x16xf32> to vector<32x16xf32>
    %24 = arith.mulf %19, %23 : vector<32x16xf32>
    %c0_12 = arith.constant 0 : index
    %c0_13 = arith.constant 0 : index
    %c0_14 = arith.constant 0 : index
    %25 = vector.load %arg4[%c0_12, %c0_13, %c0_14] : memref<2x32x1xf32, #tpu.memory_space<vmem>>, vector<1x32x1xf32>
    %26 = vector.shape_cast %25 : vector<1x32x1xf32> to vector<32x1xf32>
    %27 = vector.broadcast %26 : vector<32x1xf32> to vector<32x16xf32>
    %28 = arith.mulf %24, %27 : vector<32x16xf32>
    %c0_15 = arith.constant 0 : index
    %c0_16 = arith.constant 0 : index
    %c0_17 = arith.constant 0 : index
    %29 = vector.load %arg5[%c0_15, %c0_16, %c0_17] : memref<2x32x1xf32, #tpu.memory_space<vmem>>, vector<1x32x1xf32>
    %30 = vector.shape_cast %29 : vector<1x32x1xf32> to vector<32x1xf32>
    %31 = vector.broadcast %30 : vector<32x1xf32> to vector<32x16xf32>
    %32 = arith.addf %28, %31 : vector<32x16xf32>
    %c0_18 = arith.constant 0 : index
    %c0_19 = arith.constant 0 : index
    %c0_20 = arith.constant 0 : index
    %33 = vector.load %arg6[%c0_18, %c0_19, %c0_20] : memref<2x32x32xf32, #tpu.memory_space<vmem>>, vector<1x32x32xf32>
    %34 = vector.shape_cast %33 : vector<1x32x32xf32> to vector<32x32xf32>
    %cst_21 = arith.constant dense<0.000000e+00> : vector<32x16xf32>
    %35 = tpu.matmul %34, %32, %cst_21 {dimension_numbers = #tpu.dot_dimension_numbers<[1], [0], [0], [1], [0, 0, 1, 1], [], []>} : vector<32x32xf32>, vector<32x16xf32>, vector<32x16xf32> -> vector<32x16xf32>
    %c0_22 = arith.constant 0 : index
    %c0_23 = arith.constant 0 : index
    %c0_24 = arith.constant 0 : index
    %36 = vector.load %arg7[%c0_22, %c0_23, %c0_24] : memref<2x64x32xf32, #tpu.memory_space<vmem>>, vector<1x64x32xf32>
    %37 = vector.shape_cast %36 : vector<1x64x32xf32> to vector<64x32xf32>
    %cst_25 = arith.constant dense<0.000000e+00> : vector<64x8xf32>
    %38 = tpu.matmul %37, %6, %cst_25 {dimension_numbers = #tpu.dot_dimension_numbers<[1], [0], [0], [1], [0, 0, 1, 1], [], []>} : vector<64x32xf32>, vector<32x8xf32>, vector<64x8xf32> -> vector<64x8xf32>
    %39 = vector.extract_strided_slice %38 {offsets = [0, 0], sizes = [32, 8], strides = [1, 1]} : vector<64x8xf32> to vector<32x8xf32>
    %40 = vector.extract_strided_slice %38 {offsets = [32, 0], sizes = [32, 8], strides = [1, 1]} : vector<64x8xf32> to vector<32x8xf32>
    %41 = vector.shape_cast %35 : vector<32x16xf32> to vector<4x8x16xf32>
    %42 = vector.shape_cast %39 : vector<32x8xf32> to vector<4x8x8xf32>
    %43 = vector.shape_cast %40 : vector<32x8xf32> to vector<4x8x8xf32>
    "tpu.trace_start"() <{level = 10 : i32, message = "gdt,gdl->gtl"}> : () -> ()
    %cst_26 = arith.constant dense<0.000000e+00> : vector<4x16x8xf32>
    %44 = tpu.matmul %41, %42, %cst_26 {dimension_numbers = #tpu.dot_dimension_numbers<[1], [1], [2], [2], [0, 0, 0, 2, 1, 2], [0], [0]>} : vector<4x8x16xf32>, vector<4x8x8xf32>, vector<4x16x8xf32> -> vector<4x16x8xf32>
    "tpu.trace_stop"() : () -> ()
    %cst_27 = arith.constant 0.353553385 : f32
    %45 = vector.broadcast %cst_27 : f32 to vector<4x16x8xf32>
    %46 = arith.mulf %44, %45 : vector<4x16x8xf32>
    %cst_28 = arith.constant dense<0xFF800000> : vector<4x16xf32>
    %47 = vector.multi_reduction <maximumf>, %46, %cst_28 [2] : vector<4x16x8xf32> to vector<4x16xf32>
    %48 = vector.shape_cast %47 : vector<4x16xf32> to vector<4x16x1xf32>
    %49 = vector.broadcast %48 : vector<4x16x1xf32> to vector<4x16x8xf32>
    %50 = arith.subf %46, %49 : vector<4x16x8xf32>
    %51 = math.exp %50 : vector<4x16x8xf32>
    %cst_29 = arith.constant dense<0.000000e+00> : vector<4x16xf32>
    %52 = vector.multi_reduction <add>, %51, %cst_29 [2] : vector<4x16x8xf32> to vector<4x16xf32>
    %53 = vector.shape_cast %52 : vector<4x16xf32> to vector<4x16x1xf32>
    %54 = tpu.reciprocal %53 {approx = true} : vector<4x16x1xf32> -> vector<4x16x1xf32>
    %55 = vector.broadcast %54 : vector<4x16x1xf32> to vector<4x16x8xf32>
    %56 = arith.mulf %51, %55 : vector<4x16x8xf32>
    %c0_30 = arith.constant 0 : index
    %c0_31 = arith.constant 0 : index
    %c0_32 = arith.constant 0 : index
    %c0_33 = arith.constant 0 : index
    %c0_34 = arith.constant 0 : index
    %57 = vector.load %arg17[%c0_30, %c0_31, %c0_32, %c0_33, %c0_34] : memref<2x1x4x16x8xf32, #tpu.memory_space<vmem>>, vector<1x1x4x16x8xf32>
    %58 = vector.shape_cast %57 : vector<1x1x4x16x8xf32> to vector<4x16x8xf32>
    %59 = vector.shape_cast %56 : vector<4x16x8xf32> to vector<1x1x4x16x8xf32>
    tpu.vector_store %arg17[%c0_30, %c0_31, %c0_32, %c0_33, %c0_34], %59 {strides = array<i32>} : memref<2x1x4x16x8xf32, #tpu.memory_space<vmem>>, vector<1x1x4x16x8xf32>,
    "tpu.trace_start"() <{level = 10 : i32, message = "gdl,gtl->gdt"}> : () -> ()
    %cst_35 = arith.constant dense<0.000000e+00> : vector<4x8x16xf32>
    %60 = tpu.matmul %43, %56, %cst_35 {dimension_numbers = #tpu.dot_dimension_numbers<[2], [2], [1], [1], [0, 0, 0, 1, 1, 1], [0], [0]>} : vector<4x8x8xf32>, vector<4x16x8xf32>, vector<4x8x16xf32> -> vector<4x8x16xf32>
    "tpu.trace_stop"() : () -> ()
    %c0_36 = arith.constant 0 : index
    %c0_37 = arith.constant 0 : index
    %c0_38 = arith.constant 0 : index
    %61 = vector.load %arg8[%c0_36, %c0_37, %c0_38] : memref<2x32x32xf32, #tpu.memory_space<vmem>>, vector<1x32x32xf32>
    %62 = vector.shape_cast %61 : vector<1x32x32xf32> to vector<32x32xf32>
    %63 = vector.shape_cast %60 : vector<4x8x16xf32> to vector<32x16xf32>
    %cst_39 = arith.constant dense<0.000000e+00> : vector<32x16xf32>
    %64 = tpu.matmul %62, %63, %cst_39 {dimension_numbers = #tpu.dot_dimension_numbers<[1], [0], [0], [1], [0, 0, 1, 1], [], []>} : vector<32x32xf32>, vector<32x16xf32>, vector<32x16xf32> -> vector<32x16xf32>
    %65 = arith.addf %64, %32 : vector<32x16xf32>
    %c0_40 = arith.constant 0 : index
    %c0_41 = arith.constant 0 : index
    %c0_42 = arith.constant 0 : index
    %66 = vector.load %arg10[%c0_40, %c0_41, %c0_42] : memref<2x16x48xf32, #tpu.memory_space<vmem>>, vector<1x16x48xf32>
    %67 = vector.shape_cast %66 : vector<1x16x48xf32> to vector<16x48xf32>
    %cst_43 = arith.constant dense<0.000000e+00> : vector<32x48xf32>
    %68 = tpu.matmul %65, %67, %cst_43 {dimension_numbers = #tpu.dot_dimension_numbers<[1], [0], [0], [1], [0, 0, 1, 1], [], []>} : vector<32x16xf32>, vector<16x48xf32>, vector<32x48xf32> -> vector<32x48xf32>
    %69 = vector.extract_strided_slice %68 {offsets = [0, 0], sizes = [32, 16], strides = [1, 1]} : vector<32x48xf32> to vector<32x16xf32>
    %70 = vector.extract_strided_slice %68 {offsets = [0, 16], sizes = [32, 16], strides = [1, 1]} : vector<32x48xf32> to vector<32x16xf32>
    %71 = vector.extract_strided_slice %68 {offsets = [0, 32], sizes = [32, 16], strides = [1, 1]} : vector<32x48xf32> to vector<32x16xf32>
    %72 = tpu.concatenate %69, %70, %71 in 0 : vector<32x16xf32>, vector<32x16xf32>, vector<32x16xf32> -> vector<96x16xf32>
    %c0_44 = arith.constant 0 : index
    %c0_45 = arith.constant 0 : index
    %c0_46 = arith.constant 0 : index
    %73 = vector.load %arg9[%c0_44, %c0_45, %c0_46] : memref<2x64x96xf32, #tpu.memory_space<vmem>>, vector<1x64x96xf32>
    %74 = vector.shape_cast %73 : vector<1x64x96xf32> to vector<64x96xf32>
    %cst_47 = arith.constant dense<0.000000e+00> : vector<64x16xf32>
    %75 = tpu.matmul %74, %72, %cst_47 {dimension_numbers = #tpu.dot_dimension_numbers<[1], [0], [0], [1], [0, 0, 1, 1], [], []>} : vector<64x96xf32>, vector<96x16xf32>, vector<64x16xf32> -> vector<64x16xf32>
    %c0_48 = arith.constant 0 : index
    %c0_49 = arith.constant 0 : index
    %c0_50 = arith.constant 0 : index
    %76 = vector.load %arg11[%c0_48, %c0_49, %c0_50] : memref<2x64x1xf32, #tpu.memory_space<vmem>>, vector<1x64x1xf32>
    %77 = vector.shape_cast %76 : vector<1x64x1xf32> to vector<64x1xf32>
    %c0_51 = arith.constant 0 : index
    %c0_52 = arith.constant 0 : index
    %c0_53 = arith.constant 0 : index
    %78 = vector.load %arg12[%c0_51, %c0_52, %c0_53] : memref<2x64x1xf32, #tpu.memory_space<vmem>>, vector<1x64x1xf32>
    %79 = vector.shape_cast %78 : vector<1x64x1xf32> to vector<64x1xf32>
    %80 = vector.shape_cast %75 : vector<64x16xf32> to vector<4x16x16xf32>
    %cst_54 = arith.constant dense<0.000000e+00> : vector<4x16xf32>
    %81 = vector.multi_reduction <add>, %80, %cst_54 [2] : vector<4x16x16xf32> to vector<4x16xf32>
    %82 = vector.shape_cast %81 : vector<4x16xf32> to vector<4x16x1xf32>
    %cst_55 = arith.constant dense<0.000000e+00> : vector<4x1xf32>
    %83 = vector.multi_reduction <add>, %82, %cst_55 [1] : vector<4x16x1xf32> to vector<4x1xf32>
    %84 = vector.shape_cast %83 : vector<4x1xf32> to vector<4x1x1xf32>
    %cst_56 = arith.constant 3.906250e-03 : f32
    %85 = vector.broadcast %cst_56 : f32 to vector<4x1x1xf32>
    %86 = arith.mulf %84, %85 : vector<4x1x1xf32>
    %87 = vector.broadcast %86 : vector<4x1x1xf32> to vector<4x16x16xf32>
    %88 = arith.subf %80, %87 : vector<4x16x16xf32>
    %89 = arith.mulf %88, %88 : vector<4x16x16xf32>
    %cst_57 = arith.constant dense<0.000000e+00> : vector<4x16xf32>
    %90 = vector.multi_reduction <add>, %89, %cst_57 [2] : vector<4x16x16xf32> to vector<4x16xf32>
    %91 = vector.shape_cast %90 : vector<4x16xf32> to vector<4x16x1xf32>
    %cst_58 = arith.constant dense<0.000000e+00> : vector<4x1xf32>
    %92 = vector.multi_reduction <add>, %91, %cst_58 [1] : vector<4x16x1xf32> to vector<4x1xf32>
    %93 = vector.shape_cast %92 : vector<4x1xf32> to vector<4x1x1xf32>
    %cst_59 = arith.constant 3.906250e-03 : f32
    %94 = vector.broadcast %cst_59 : f32 to vector<4x1x1xf32>
    %95 = arith.mulf %93, %94 : vector<4x1x1xf32>
    %cst_60 = arith.constant 9.99999974E-6 : f32
    %96 = vector.broadcast %cst_60 : f32 to vector<4x1x1xf32>
    %97 = arith.addf %95, %96 : vector<4x1x1xf32>
    %98 = math.rsqrt %97 : vector<4x1x1xf32>
    %99 = vector.broadcast %98 : vector<4x1x1xf32> to vector<4x16x16xf32>
    %100 = arith.mulf %88, %99 : vector<4x16x16xf32>
    %101 = vector.shape_cast %100 : vector<4x16x16xf32> to vector<64x16xf32>
    %102 = vector.broadcast %77 : vector<64x1xf32> to vector<64x16xf32>
    %103 = arith.mulf %101, %102 : vector<64x16xf32>
    %104 = vector.broadcast %79 : vector<64x1xf32> to vector<64x16xf32>
    %105 = arith.addf %103, %104 : vector<64x16xf32>
    %cst_61 = arith.constant 0.000000e+00 : f32
    %106 = vector.broadcast %cst_61 : f32 to vector<64x16xf32>
    %107 = arith.maximumf %105, %106 : vector<64x16xf32>
    %c0_62 = arith.constant 0 : index
    %c0_63 = arith.constant 0 : index
    %c0_64 = arith.constant 0 : index
    %108 = vector.load %arg13[%c0_62, %c0_63, %c0_64] : memref<2x32x64xf32, #tpu.memory_space<vmem>>, vector<1x32x64xf32>
    %109 = vector.shape_cast %108 : vector<1x32x64xf32> to vector<32x64xf32>
    %cst_65 = arith.constant dense<0.000000e+00> : vector<32x16xf32>
    %110 = tpu.matmul %109, %107, %cst_65 {dimension_numbers = #tpu.dot_dimension_numbers<[1], [0], [0], [1], [0, 0, 1, 1], [], []>} : vector<32x64xf32>, vector<64x16xf32>, vector<32x16xf32> -> vector<32x16xf32>
    %c0_66 = arith.constant 0 : index
    %c0_67 = arith.constant 0 : index
    %c0_68 = arith.constant 0 : index
    %111 = vector.load %arg14[%c0_66, %c0_67, %c0_68] : memref<2x32x1xf32, #tpu.memory_space<vmem>>, vector<1x32x1xf32>
    %112 = vector.shape_cast %111 : vector<1x32x1xf32> to vector<32x1xf32>
    %c0_69 = arith.constant 0 : index
    %c0_70 = arith.constant 0 : index
    %c0_71 = arith.constant 0 : index
    %113 = vector.load %arg15[%c0_69, %c0_70, %c0_71] : memref<2x32x1xf32, #tpu.memory_space<vmem>>, vector<1x32x1xf32>
    %114 = vector.shape_cast %113 : vector<1x32x1xf32> to vector<32x1xf32>
    %115 = vector.shape_cast %110 : vector<32x16xf32> to vector<4x8x16xf32>
    %cst_72 = arith.constant dense<0.000000e+00> : vector<4x8xf32>
    %116 = vector.multi_reduction <add>, %115, %cst_72 [2] : vector<4x8x16xf32> to vector<4x8xf32>
    %117 = vector.shape_cast %116 : vector<4x8xf32> to vector<4x8x1xf32>
    %cst_73 = arith.constant dense<0.000000e+00> : vector<4x1xf32>
    %118 = vector.multi_reduction <add>, %117, %cst_73 [1] : vector<4x8x1xf32> to vector<4x1xf32>
    %119 = vector.shape_cast %118 : vector<4x1xf32> to vector<4x1x1xf32>
    %cst_74 = arith.constant 7.812500e-03 : f32
    %120 = vector.broadcast %cst_74 : f32 to vector<4x1x1xf32>
    %121 = arith.mulf %119, %120 : vector<4x1x1xf32>
    %122 = vector.broadcast %121 : vector<4x1x1xf32> to vector<4x8x16xf32>
    %123 = arith.subf %115, %122 : vector<4x8x16xf32>
    %124 = arith.mulf %123, %123 : vector<4x8x16xf32>
    %cst_75 = arith.constant dense<0.000000e+00> : vector<4x8xf32>
    %125 = vector.multi_reduction <add>, %124, %cst_75 [2] : vector<4x8x16xf32> to vector<4x8xf32>
    %126 = vector.shape_cast %125 : vector<4x8xf32> to vector<4x8x1xf32>
    %cst_76 = arith.constant dense<0.000000e+00> : vector<4x1xf32>
    %127 = vector.multi_reduction <add>, %126, %cst_76 [1] : vector<4x8x1xf32> to vector<4x1xf32>
    %128 = vector.shape_cast %127 : vector<4x1xf32> to vector<4x1x1xf32>
    %cst_77 = arith.constant 7.812500e-03 : f32
    %129 = vector.broadcast %cst_77 : f32 to vector<4x1x1xf32>
    %130 = arith.mulf %128, %129 : vector<4x1x1xf32>
    %cst_78 = arith.constant 9.99999974E-6 : f32
    %131 = vector.broadcast %cst_78 : f32 to vector<4x1x1xf32>
    %132 = arith.addf %130, %131 : vector<4x1x1xf32>
    %133 = math.rsqrt %132 : vector<4x1x1xf32>
    %134 = vector.broadcast %133 : vector<4x1x1xf32> to vector<4x8x16xf32>
    %135 = arith.mulf %123, %134 : vector<4x8x16xf32>
    %136 = vector.shape_cast %135 : vector<4x8x16xf32> to vector<32x16xf32>
    %137 = vector.broadcast %112 : vector<32x1xf32> to vector<32x16xf32>
    %138 = arith.mulf %136, %137 : vector<32x16xf32>
    %139 = vector.broadcast %114 : vector<32x1xf32> to vector<32x16xf32>
    %140 = arith.addf %138, %139 : vector<32x16xf32>
    %141 = arith.addf %65, %140 : vector<32x16xf32>
    %cst_79 = arith.constant dense<0.000000e+00> : vector<16xf32>
    %142 = vector.multi_reduction <add>, %141, %cst_79 [0] : vector<32x16xf32> to vector<16xf32>
    %143 = vector.shape_cast %142 : vector<16xf32> to vector<1x16xf32>
    %cst_80 = arith.constant 3.200000e+01 : f32
    %144 = vector.broadcast %cst_80 : f32 to vector<1x16xf32>
    %145 = arith.divf %143, %144 : vector<1x16xf32>
    %146 = vector.broadcast %145 : vector<1x16xf32> to vector<32x16xf32>
    %147 = arith.subf %141, %146 : vector<32x16xf32>
    %148 = arith.mulf %147, %147 : vector<32x16xf32>
    %cst_81 = arith.constant dense<0.000000e+00> : vector<16xf32>
    %149 = vector.multi_reduction <add>, %148, %cst_81 [0] : vector<32x16xf32> to vector<16xf32>
    %150 = vector.shape_cast %149 : vector<16xf32> to vector<1x16xf32>
    %cst_82 = arith.constant 3.200000e+01 : f32
    %151 = vector.broadcast %cst_82 : f32 to vector<1x16xf32>
    %152 = arith.divf %150, %151 : vector<1x16xf32>
    %153 = vector.broadcast %145 : vector<1x16xf32> to vector<32x16xf32>
    %154 = arith.subf %141, %153 : vector<32x16xf32>
    %cst_83 = arith.constant 9.99999974E-6 : f32
    %155 = vector.broadcast %cst_83 : f32 to vector<1x16xf32>
    %156 = arith.addf %152, %155 : vector<1x16xf32>
    %157 = math.rsqrt %156 : vector<1x16xf32>
    %158 = vector.broadcast %157 : vector<1x16xf32> to vector<32x16xf32>
    %159 = arith.mulf %154, %158 : vector<32x16xf32>
    %c1 = arith.constant 1 : index
    %c0_84 = arith.constant 0 : index
    %c0_85 = arith.constant 0 : index
    %160 = vector.load %arg4[%c1, %c0_84, %c0_85] : memref<2x32x1xf32, #tpu.memory_space<vmem>>, vector<1x32x1xf32>
    %161 = vector.shape_cast %160 : vector<1x32x1xf32> to vector<32x1xf32>
    %162 = vector.broadcast %161 : vector<32x1xf32> to vector<32x16xf32>
    %163 = arith.mulf %159, %162 : vector<32x16xf32>
    %c1_86 = arith.constant 1 : index
    %c0_87 = arith.constant 0 : index
    %c0_88 = arith.constant 0 : index
    %164 = vector.load %arg5[%c1_86, %c0_87, %c0_88] : memref<2x32x1xf32, #tpu.memory_space<vmem>>, vector<1x32x1xf32>
    %165 = vector.shape_cast %164 : vector<1x32x1xf32> to vector<32x1xf32>
    %166 = vector.broadcast %165 : vector<32x1xf32> to vector<32x16xf32>
    %167 = arith.addf %163, %166 : vector<32x16xf32>
    %c1_89 = arith.constant 1 : index
    %c0_90 = arith.constant 0 : index
    %c0_91 = arith.constant 0 : index
    %168 = vector.load %arg6[%c1_89, %c0_90, %c0_91] : memref<2x32x32xf32, #tpu.memory_space<vmem>>, vector<1x32x32xf32>
    %169 = vector.shape_cast %168 : vector<1x32x32xf32> to vector<32x32xf32>
    %cst_92 = arith.constant dense<0.000000e+00> : vector<32x16xf32>
    %170 = tpu.matmul %169, %167, %cst_92 {dimension_numbers = #tpu.dot_dimension_numbers<[1], [0], [0], [1], [0, 0, 1, 1], [], []>} : vector<32x32xf32>, vector<32x16xf32>, vector<32x16xf32> -> vector<32x16xf32>
    %c1_93 = arith.constant 1 : index
    %c0_94 = arith.constant 0 : index
    %c0_95 = arith.constant 0 : index
    %171 = vector.load %arg7[%c1_93, %c0_94, %c0_95] : memref<2x64x32xf32, #tpu.memory_space<vmem>>, vector<1x64x32xf32>
    %172 = vector.shape_cast %171 : vector<1x64x32xf32> to vector<64x32xf32>
    %cst_96 = arith.constant dense<0.000000e+00> : vector<64x8xf32>
    %173 = tpu.matmul %172, %6, %cst_96 {dimension_numbers = #tpu.dot_dimension_numbers<[1], [0], [0], [1], [0, 0, 1, 1], [], []>} : vector<64x32xf32>, vector<32x8xf32>, vector<64x8xf32> -> vector<64x8xf32>
    %174 = vector.extract_strided_slice %173 {offsets = [0, 0], sizes = [32, 8], strides = [1, 1]} : vector<64x8xf32> to vector<32x8xf32>
    %175 = vector.extract_strided_slice %173 {offsets = [32, 0], sizes = [32, 8], strides = [1, 1]} : vector<64x8xf32> to vector<32x8xf32>
    %176 = vector.shape_cast %170 : vector<32x16xf32> to vector<4x8x16xf32>
    %177 = vector.shape_cast %174 : vector<32x8xf32> to vector<4x8x8xf32>
    %178 = vector.shape_cast %175 : vector<32x8xf32> to vector<4x8x8xf32>
    "tpu.trace_start"() <{level = 10 : i32, message = "gdt,gdl->gtl"}> : () -> ()
    %cst_97 = arith.constant dense<0.000000e+00> : vector<4x16x8xf32>
    %179 = tpu.matmul %176, %177, %cst_97 {dimension_numbers = #tpu.dot_dimension_numbers<[1], [1], [2], [2], [0, 0, 0, 2, 1, 2], [0], [0]>} : vector<4x8x16xf32>, vector<4x8x8xf32>, vector<4x16x8xf32> -> vector<4x16x8xf32>
    "tpu.trace_stop"() : () -> ()
    %cst_98 = arith.constant 0.353553385 : f32
    %180 = vector.broadcast %cst_98 : f32 to vector<4x16x8xf32>
    %181 = arith.mulf %179, %180 : vector<4x16x8xf32>
    %cst_99 = arith.constant dense<0xFF800000> : vector<4x16xf32>
    %182 = vector.multi_reduction <maximumf>, %181, %cst_99 [2] : vector<4x16x8xf32> to vector<4x16xf32>
    %183 = vector.shape_cast %182 : vector<4x16xf32> to vector<4x16x1xf32>
    %184 = vector.broadcast %183 : vector<4x16x1xf32> to vector<4x16x8xf32>
    %185 = arith.subf %181, %184 : vector<4x16x8xf32>
    %186 = math.exp %185 : vector<4x16x8xf32>
    %cst_100 = arith.constant dense<0.000000e+00> : vector<4x16xf32>
    %187 = vector.multi_reduction <add>, %186, %cst_100 [2] : vector<4x16x8xf32> to vector<4x16xf32>
    %188 = vector.shape_cast %187 : vector<4x16xf32> to vector<4x16x1xf32>
    %189 = tpu.reciprocal %188 {approx = true} : vector<4x16x1xf32> -> vector<4x16x1xf32>
    %190 = vector.broadcast %189 : vector<4x16x1xf32> to vector<4x16x8xf32>
    %191 = arith.mulf %186, %190 : vector<4x16x8xf32>
    %c1_101 = arith.constant 1 : index
    %c0_102 = arith.constant 0 : index
    %c0_103 = arith.constant 0 : index
    %c0_104 = arith.constant 0 : index
    %c0_105 = arith.constant 0 : index
    %192 = vector.load %arg17[%c1_101, %c0_102, %c0_103, %c0_104, %c0_105] : memref<2x1x4x16x8xf32, #tpu.memory_space<vmem>>, vector<1x1x4x16x8xf32>
    %193 = vector.shape_cast %192 : vector<1x1x4x16x8xf32> to vector<4x16x8xf32>
    %194 = vector.shape_cast %191 : vector<4x16x8xf32> to vector<1x1x4x16x8xf32>
    tpu.vector_store %arg17[%c1_101, %c0_102, %c0_103, %c0_104, %c0_105], %194 {strides = array<i32>} : memref<2x1x4x16x8xf32, #tpu.memory_space<vmem>>, vector<1x1x4x16x8xf32>,
    "tpu.trace_start"() <{level = 10 : i32, message = "gdl,gtl->gdt"}> : () -> ()
    %cst_106 = arith.constant dense<0.000000e+00> : vector<4x8x16xf32>
    %195 = tpu.matmul %178, %191, %cst_106 {dimension_numbers = #tpu.dot_dimension_numbers<[2], [2], [1], [1], [0, 0, 0, 1, 1, 1], [0], [0]>} : vector<4x8x8xf32>, vector<4x16x8xf32>, vector<4x8x16xf32> -> vector<4x8x16xf32>
    "tpu.trace_stop"() : () -> ()
    %c1_107 = arith.constant 1 : index
    %c0_108 = arith.constant 0 : index
    %c0_109 = arith.constant 0 : index
    %196 = vector.load %arg8[%c1_107, %c0_108, %c0_109] : memref<2x32x32xf32, #tpu.memory_space<vmem>>, vector<1x32x32xf32>
    %197 = vector.shape_cast %196 : vector<1x32x32xf32> to vector<32x32xf32>
    %198 = vector.shape_cast %195 : vector<4x8x16xf32> to vector<32x16xf32>
    %cst_110 = arith.constant dense<0.000000e+00> : vector<32x16xf32>
    %199 = tpu.matmul %197, %198, %cst_110 {dimension_numbers = #tpu.dot_dimension_numbers<[1], [0], [0], [1], [0, 0, 1, 1], [], []>} : vector<32x32xf32>, vector<32x16xf32>, vector<32x16xf32> -> vector<32x16xf32>
    %200 = arith.addf %199, %167 : vector<32x16xf32>
    %c1_111 = arith.constant 1 : index
    %c0_112 = arith.constant 0 : index
    %c0_113 = arith.constant 0 : index
    %201 = vector.load %arg10[%c1_111, %c0_112, %c0_113] : memref<2x16x48xf32, #tpu.memory_space<vmem>>, vector<1x16x48xf32>
    %202 = vector.shape_cast %201 : vector<1x16x48xf32> to vector<16x48xf32>
    %cst_114 = arith.constant dense<0.000000e+00> : vector<32x48xf32>
    %203 = tpu.matmul %200, %202, %cst_114 {dimension_numbers = #tpu.dot_dimension_numbers<[1], [0], [0], [1], [0, 0, 1, 1], [], []>} : vector<32x16xf32>, vector<16x48xf32>, vector<32x48xf32> -> vector<32x48xf32>
    %204 = vector.extract_strided_slice %203 {offsets = [0, 0], sizes = [32, 16], strides = [1, 1]} : vector<32x48xf32> to vector<32x16xf32>
    %205 = vector.extract_strided_slice %203 {offsets = [0, 16], sizes = [32, 16], strides = [1, 1]} : vector<32x48xf32> to vector<32x16xf32>
    %206 = vector.extract_strided_slice %203 {offsets = [0, 32], sizes = [32, 16], strides = [1, 1]} : vector<32x48xf32> to vector<32x16xf32>
    %207 = tpu.concatenate %204, %205, %206 in 0 : vector<32x16xf32>, vector<32x16xf32>, vector<32x16xf32> -> vector<96x16xf32>
    %c1_115 = arith.constant 1 : index
    %c0_116 = arith.constant 0 : index
    %c0_117 = arith.constant 0 : index
    %208 = vector.load %arg9[%c1_115, %c0_116, %c0_117] : memref<2x64x96xf32, #tpu.memory_space<vmem>>, vector<1x64x96xf32>
    %209 = vector.shape_cast %208 : vector<1x64x96xf32> to vector<64x96xf32>
    %cst_118 = arith.constant dense<0.000000e+00> : vector<64x16xf32>
    %210 = tpu.matmul %209, %207, %cst_118 {dimension_numbers = #tpu.dot_dimension_numbers<[1], [0], [0], [1], [0, 0, 1, 1], [], []>} : vector<64x96xf32>, vector<96x16xf32>, vector<64x16xf32> -> vector<64x16xf32>
    %c1_119 = arith.constant 1 : index
    %c0_120 = arith.constant 0 : index
    %c0_121 = arith.constant 0 : index
    %211 = vector.load %arg11[%c1_119, %c0_120, %c0_121] : memref<2x64x1xf32, #tpu.memory_space<vmem>>, vector<1x64x1xf32>
    %212 = vector.shape_cast %211 : vector<1x64x1xf32> to vector<64x1xf32>
    %c1_122 = arith.constant 1 : index
    %c0_123 = arith.constant 0 : index
    %c0_124 = arith.constant 0 : index
    %213 = vector.load %arg12[%c1_122, %c0_123, %c0_124] : memref<2x64x1xf32, #tpu.memory_space<vmem>>, vector<1x64x1xf32>
    %214 = vector.shape_cast %213 : vector<1x64x1xf32> to vector<64x1xf32>
    %215 = vector.shape_cast %210 : vector<64x16xf32> to vector<4x16x16xf32>
    %cst_125 = arith.constant dense<0.000000e+00> : vector<4x16xf32>
    %216 = vector.multi_reduction <add>, %215, %cst_125 [2] : vector<4x16x16xf32> to vector<4x16xf32>
    %217 = vector.shape_cast %216 : vector<4x16xf32> to vector<4x16x1xf32>
    %cst_126 = arith.constant dense<0.000000e+00> : vector<4x1xf32>
    %218 = vector.multi_reduction <add>, %217, %cst_126 [1] : vector<4x16x1xf32> to vector<4x1xf32>
    %219 = vector.shape_cast %218 : vector<4x1xf32> to vector<4x1x1xf32>
    %cst_127 = arith.constant 3.906250e-03 : f32
    %220 = vector.broadcast %cst_127 : f32 to vector<4x1x1xf32>
    %221 = arith.mulf %219, %220 : vector<4x1x1xf32>
    %222 = vector.broadcast %221 : vector<4x1x1xf32> to vector<4x16x16xf32>
    %223 = arith.subf %215, %222 : vector<4x16x16xf32>
    %224 = arith.mulf %223, %223 : vector<4x16x16xf32>
    %cst_128 = arith.constant dense<0.000000e+00> : vector<4x16xf32>
    %225 = vector.multi_reduction <add>, %224, %cst_128 [2] : vector<4x16x16xf32> to vector<4x16xf32>
    %226 = vector.shape_cast %225 : vector<4x16xf32> to vector<4x16x1xf32>
    %cst_129 = arith.constant dense<0.000000e+00> : vector<4x1xf32>
    %227 = vector.multi_reduction <add>, %226, %cst_129 [1] : vector<4x16x1xf32> to vector<4x1xf32>
    %228 = vector.shape_cast %227 : vector<4x1xf32> to vector<4x1x1xf32>
    %cst_130 = arith.constant 3.906250e-03 : f32
    %229 = vector.broadcast %cst_130 : f32 to vector<4x1x1xf32>
    %230 = arith.mulf %228, %229 : vector<4x1x1xf32>
    %cst_131 = arith.constant 9.99999974E-6 : f32
    %231 = vector.broadcast %cst_131 : f32 to vector<4x1x1xf32>
    %232 = arith.addf %230, %231 : vector<4x1x1xf32>
    %233 = math.rsqrt %232 : vector<4x1x1xf32>
    %234 = vector.broadcast %233 : vector<4x1x1xf32> to vector<4x16x16xf32>
    %235 = arith.mulf %223, %234 : vector<4x16x16xf32>
    %236 = vector.shape_cast %235 : vector<4x16x16xf32> to vector<64x16xf32>
    %237 = vector.broadcast %212 : vector<64x1xf32> to vector<64x16xf32>
    %238 = arith.mulf %236, %237 : vector<64x16xf32>
    %239 = vector.broadcast %214 : vector<64x1xf32> to vector<64x16xf32>
    %240 = arith.addf %238, %239 : vector<64x16xf32>
    %cst_132 = arith.constant 0.000000e+00 : f32
    %241 = vector.broadcast %cst_132 : f32 to vector<64x16xf32>
    %242 = arith.maximumf %240, %241 : vector<64x16xf32>
    %c1_133 = arith.constant 1 : index
    %c0_134 = arith.constant 0 : index
    %c0_135 = arith.constant 0 : index
    %243 = vector.load %arg13[%c1_133, %c0_134, %c0_135] : memref<2x32x64xf32, #tpu.memory_space<vmem>>, vector<1x32x64xf32>
    %244 = vector.shape_cast %243 : vector<1x32x64xf32> to vector<32x64xf32>
    %cst_136 = arith.constant dense<0.000000e+00> : vector<32x16xf32>
    %245 = tpu.matmul %244, %242, %cst_136 {dimension_numbers = #tpu.dot_dimension_numbers<[1], [0], [0], [1], [0, 0, 1, 1], [], []>} : vector<32x64xf32>, vector<64x16xf32>, vector<32x16xf32> -> vector<32x16xf32>
    %c1_137 = arith.constant 1 : index
    %c0_138 = arith.constant 0 : index
    %c0_139 = arith.constant 0 : index
    %246 = vector.load %arg14[%c1_137, %c0_138, %c0_139] : memref<2x32x1xf32, #tpu.memory_space<vmem>>, vector<1x32x1xf32>
    %247 = vector.shape_cast %246 : vector<1x32x1xf32> to vector<32x1xf32>
    %c1_140 = arith.constant 1 : index
    %c0_141 = arith.constant 0 : index
    %c0_142 = arith.constant 0 : index
    %248 = vector.load %arg15[%c1_140, %c0_141, %c0_142] : memref<2x32x1xf32, #tpu.memory_space<vmem>>, vector<1x32x1xf32>
    %249 = vector.shape_cast %248 : vector<1x32x1xf32> to vector<32x1xf32>
    %250 = vector.shape_cast %245 : vector<32x16xf32> to vector<4x8x16xf32>
    %cst_143 = arith.constant dense<0.000000e+00> : vector<4x8xf32>
    %251 = vector.multi_reduction <add>, %250, %cst_143 [2] : vector<4x8x16xf32> to vector<4x8xf32>
    %252 = vector.shape_cast %251 : vector<4x8xf32> to vector<4x8x1xf32>
    %cst_144 = arith.constant dense<0.000000e+00> : vector<4x1xf32>
    %253 = vector.multi_reduction <add>, %252, %cst_144 [1] : vector<4x8x1xf32> to vector<4x1xf32>
    %254 = vector.shape_cast %253 : vector<4x1xf32> to vector<4x1x1xf32>
    %cst_145 = arith.constant 7.812500e-03 : f32
    %255 = vector.broadcast %cst_145 : f32 to vector<4x1x1xf32>
    %256 = arith.mulf %254, %255 : vector<4x1x1xf32>
    %257 = vector.broadcast %256 : vector<4x1x1xf32> to vector<4x8x16xf32>
    %258 = arith.subf %250, %257 : vector<4x8x16xf32>
    %259 = arith.mulf %258, %258 : vector<4x8x16xf32>
    %cst_146 = arith.constant dense<0.000000e+00> : vector<4x8xf32>
    %260 = vector.multi_reduction <add>, %259, %cst_146 [2] : vector<4x8x16xf32> to vector<4x8xf32>
    %261 = vector.shape_cast %260 : vector<4x8xf32> to vector<4x8x1xf32>
    %cst_147 = arith.constant dense<0.000000e+00> : vector<4x1xf32>
    %262 = vector.multi_reduction <add>, %261, %cst_147 [1] : vector<4x8x1xf32> to vector<4x1xf32>
    %263 = vector.shape_cast %262 : vector<4x1xf32> to vector<4x1x1xf32>
    %cst_148 = arith.constant 7.812500e-03 : f32
    %264 = vector.broadcast %cst_148 : f32 to vector<4x1x1xf32>
    %265 = arith.mulf %263, %264 : vector<4x1x1xf32>
    %cst_149 = arith.constant 9.99999974E-6 : f32
    %266 = vector.broadcast %cst_149 : f32 to vector<4x1x1xf32>
    %267 = arith.addf %265, %266 : vector<4x1x1xf32>
    %268 = math.rsqrt %267 : vector<4x1x1xf32>
    %269 = vector.broadcast %268 : vector<4x1x1xf32> to vector<4x8x16xf32>
    %270 = arith.mulf %258, %269 : vector<4x8x16xf32>
    %271 = vector.shape_cast %270 : vector<4x8x16xf32> to vector<32x16xf32>
    %272 = vector.broadcast %247 : vector<32x1xf32> to vector<32x16xf32>
    %273 = arith.mulf %271, %272 : vector<32x16xf32>
    %274 = vector.broadcast %249 : vector<32x1xf32> to vector<32x16xf32>
    %275 = arith.addf %273, %274 : vector<32x16xf32>
    %276 = arith.addf %200, %275 : vector<32x16xf32>
    %c0_150 = arith.constant 0 : index
    %c0_151 = arith.constant 0 : index
    %c0_152 = arith.constant 0 : index
    %277 = vector.load %arg16[%c0_150, %c0_151, %c0_152] : memref<1x32x16xf32, #tpu.memory_space<vmem>>, vector<1x32x16xf32>
    %278 = vector.shape_cast %277 : vector<1x32x16xf32> to vector<32x16xf32>
    %279 = vector.shape_cast %276 : vector<32x16xf32> to vector<1x32x16xf32>
    tpu.vector_store %arg16[%c0_150, %c0_151, %c0_152], %279 {strides = array<i32>} : memref<1x32x16xf32, #tpu.memory_space<vmem>>, vector<1x32x16xf32>,
    return
  }
  func.func @transform_0(%arg0: i32) -> (i32, i32, i32) {
    %c0_i32 = arith.constant 0 : i32
    %c0_i32_0 = arith.constant 0 : i32
    %c0_i32_1 = arith.constant 0 : i32
    return %arg0, %c0_i32, %c0_i32_0 : i32, i32, i32
  }
  func.func @transform_1(%arg0: i32) -> (i32, i32, i32) {
    %c0_i32 = arith.constant 0 : i32
    %c0_i32_0 = arith.constant 0 : i32
    %c0_i32_1 = arith.constant 0 : i32
    return %arg0, %c0_i32, %c0_i32_0 : i32, i32, i32
  }
  func.func @transform_2(%arg0: i32) -> (i32, i32, i32) {
    %c0_i32 = arith.constant 0 : i32
    %c0_i32_0 = arith.constant 0 : i32
    %c0_i32_1 = arith.constant 0 : i32
    return %arg0, %c0_i32, %c0_i32_0 : i32, i32, i32
  }
  func.func @transform_3(%arg0: i32) -> (i32, i32, i32) {
    %c0_i32 = arith.constant 0 : i32
    %c0_i32_0 = arith.constant 0 : i32
    %c0_i32_1 = arith.constant 0 : i32
    %c0_i32_2 = arith.constant 0 : i32
    return %c0_i32, %c0_i32_0, %c0_i32_1 : i32, i32, i32
  }
  func.func @transform_4(%arg0: i32) -> (i32, i32, i32) {
    %c0_i32 = arith.constant 0 : i32
    %c0_i32_0 = arith.constant 0 : i32
    %c0_i32_1 = arith.constant 0 : i32
    %c0_i32_2 = arith.constant 0 : i32
    return %c0_i32, %c0_i32_0, %c0_i32_1 : i32, i32, i32
  }
  func.func @transform_5(%arg0: i32) -> (i32, i32, i32) {
    %c0_i32 = arith.constant 0 : i32
    %c0_i32_0 = arith.constant 0 : i32
    %c0_i32_1 = arith.constant 0 : i32
    %c0_i32_2 = arith.constant 0 : i32
    return %c0_i32, %c0_i32_0, %c0_i32_1 : i32, i32, i32
  }
  func.func @transform_6(%arg0: i32) -> (i32, i32, i32) {
    %c0_i32 = arith.constant 0 : i32
    %c0_i32_0 = arith.constant 0 : i32
    %c0_i32_1 = arith.constant 0 : i32
    %c0_i32_2 = arith.constant 0 : i32
    return %c0_i32, %c0_i32_0, %c0_i32_1 : i32, i32, i32
  }
  func.func @transform_7(%arg0: i32) -> (i32, i32, i32) {
    %c0_i32 = arith.constant 0 : i32
    %c0_i32_0 = arith.constant 0 : i32
    %c0_i32_1 = arith.constant 0 : i32
    %c0_i32_2 = arith.constant 0 : i32
    return %c0_i32, %c0_i32_0, %c0_i32_1 : i32, i32, i32
  }
  func.func @transform_8(%arg0: i32) -> (i32, i32, i32) {
    %c0_i32 = arith.constant 0 : i32
    %c0_i32_0 = arith.constant 0 : i32
    %c0_i32_1 = arith.constant 0 : i32
    %c0_i32_2 = arith.constant 0 : i32
    return %c0_i32, %c0_i32_0, %c0_i32_1 : i32, i32, i32
  }
  func.func @transform_9(%arg0: i32) -> (i32, i32, i32) {
    %c0_i32 = arith.constant 0 : i32
    %c0_i32_0 = arith.constant 0 : i32
    %c0_i32_1 = arith.constant 0 : i32
    %c0_i32_2 = arith.constant 0 : i32
    return %c0_i32, %c0_i32_0, %c0_i32_1 : i32, i32, i32
  }
  func.func @transform_10(%arg0: i32) -> (i32, i32, i32) {
    %c0_i32 = arith.constant 0 : i32
    %c0_i32_0 = arith.constant 0 : i32
    %c0_i32_1 = arith.constant 0 : i32
    %c0_i32_2 = arith.constant 0 : i32
    return %c0_i32, %c0_i32_0, %c0_i32_1 : i32, i32, i32
  }
  func.func @transform_11(%arg0: i32) -> (i32, i32, i32) {
    %c0_i32 = arith.constant 0 : i32
    %c0_i32_0 = arith.constant 0 : i32
    %c0_i32_1 = arith.constant 0 : i32
    %c0_i32_2 = arith.constant 0 : i32
    return %c0_i32, %c0_i32_0, %c0_i32_1 : i32, i32, i32
  }
  func.func @transform_12(%arg0: i32) -> (i32, i32, i32) {
    %c0_i32 = arith.constant 0 : i32
    %c0_i32_0 = arith.constant 0 : i32
    %c0_i32_1 = arith.constant 0 : i32
    %c0_i32_2 = arith.constant 0 : i32
    return %c0_i32, %c0_i32_0, %c0_i32_1 : i32, i32, i32
  }
  func.func @transform_13(%arg0: i32) -> (i32, i32, i32) {
    %c0_i32 = arith.constant 0 : i32
    %c0_i32_0 = arith.constant 0 : i32
    %c0_i32_1 = arith.constant 0 : i32
    %c0_i32_2 = arith.constant 0 : i32
    return %c0_i32, %c0_i32_0, %c0_i32_1 : i32, i32, i32
  }
  func.func @transform_14(%arg0: i32) -> (i32, i32, i32) {
    %c0_i32 = arith.constant 0 : i32
    %c0_i32_0 = arith.constant 0 : i32
    %c0_i32_1 = arith.constant 0 : i32
    %c0_i32_2 = arith.constant 0 : i32
    return %c0_i32, %c0_i32_0, %c0_i32_1 : i32, i32, i32
  }
  func.func @transform_15(%arg0: i32) -> (i32, i32, i32) {
    %c0_i32 = arith.constant 0 : i32
    %c0_i32_0 = arith.constant 0 : i32
    %c0_i32_1 = arith.constant 0 : i32
    return %arg0, %c0_i32, %c0_i32_0 : i32, i32, i32
  }
  func.func @transform_16(%arg0: i32) -> (i32, i32, i32, i32, i32) {
    %c0_i32 = arith.constant 0 : i32
    %c0_i32_0 = arith.constant 0 : i32
    %c0_i32_1 = arith.constant 0 : i32
    %c0_i32_2 = arith.constant 0 : i32
    %c0_i32_3 = arith.constant 0 : i32
    return %c0_i32, %arg0, %c0_i32_0, %c0_i32_1, %c0_i32_2 : i32, i32, i32, i32, i32
  }
}

</mosaic_0001>

<llo_original>
// kernel: tpu_custom_call.1
$region0: #{tpu_custom_call.1}
  #allocation0 [shape = 'u32[]', space=smem, size = 0x4, offset = 0x4, fixed_abs, tag = 'smem constant byte address 0x4 - core index']
  #allocation1 [shape = 'u32[144,128]{1,0:T(1,128)}', space=vmem, size = 0x12000, scoped, tag = 'internal scratch']
  %s0 = inlined_call_operand.vmem [shape: f32[2,32,16], index: 0, kind: input, shape index: {}, may-alias: {0,15}]
  %s1 = inlined_call_operand.vmem [shape: f32[2,32,16], index: 1, kind: input, shape index: {}]
  %s2 = inlined_call_operand.vmem [shape: f32[2,32,8], index: 2, kind: input, shape index: {}]
  %s3 = inlined_call_operand.vmem [shape: f32[2,32,1], index: 3, kind: input, shape index: {}]
  %s4 = inlined_call_operand.vmem [shape: f32[2,32,1], index: 4, kind: input, shape index: {}]
  %s5 = inlined_call_operand.vmem [shape: f32[2,32,32], index: 5, kind: input, shape index: {}]
  %s6 = inlined_call_operand.vmem [shape: f32[2,64,32], index: 6, kind: input, shape index: {}]
  %s7 = inlined_call_operand.vmem [shape: f32[2,32,32], index: 7, kind: input, shape index: {}]
  %s8 = inlined_call_operand.vmem [shape: f32[2,64,96], index: 8, kind: input, shape index: {}]
  %s9 = inlined_call_operand.vmem [shape: f32[2,16,48], index: 9, kind: input, shape index: {}]
  %s10 = inlined_call_operand.vmem [shape: f32[2,64,1], index: 10, kind: input, shape index: {}]
  %s11 = inlined_call_operand.vmem [shape: f32[2,64,1], index: 11, kind: input, shape index: {}]
  %s12 = inlined_call_operand.vmem [shape: f32[2,32,64], index: 12, kind: input, shape index: {}]
  %s13 = inlined_call_operand.vmem [shape: f32[2,32,1], index: 13, kind: input, shape index: {}]
  %s14 = inlined_call_operand.vmem [shape: f32[2,32,1], index: 14, kind: input, shape index: {}]
  %s15 = inlined_call_operand.vmem [shape: f32[2,32,16], index: 15, kind: output, shape index: {0}, may-alias: {0,15}]
  %s16 = inlined_call_operand.vmem [shape: f32[2,2,4,16,8], index: 16, kind: output, shape index: {1}]
  %17 = xla_tuple %s15, %s16
  %s18 = sld [smem:[#allocation0]]
  $region135: #{tpu_custom_call.1} parent=0
    _
  %s20 = ssub.s32 1, %s18
  %s21 = scalar_select 0, %s20, %s18
  $region1: #{tpu_custom_call.1} parent=0
    #allocation2 [shape = 'u8[131072]{0}', space=vmem, size = 0x20000, scoped, tag = 'output window, operand 1']
    loop: start=0, step=1, limit=4
    $region2: #{tpu_custom_call.1} parent=1 // loop_pre_header
      _
    $region3: #{tpu_custom_call.1} parent=1 // loop_header
      %s23 = sphi 0, %s27
      %p24 = scmp.ge.s32.totalorder %s23, 4
      %s33 = sphi 0, %s35
      %s36 = sphi 0, %s33
      %s37 = sphi 0, %s36
      %s53 = sphi 0, %s37
      %s59 = sphi 0, %s61
      %s62 = sphi 0, %s59
      %s63 = sphi 0, %s62
      %s79 = sphi 0, %s63
      %s85 = sphi 0, %s87
      %s88 = sphi 0, %s85
      %s89 = sphi 0, %s88
      %s105 = sphi 0, %s89
      %s109 = sphi 0, %s109
      %s111 = sphi 0, %s109
      %s112 = sphi 0, %s111
      %s126 = sphi 0, %s112
      %s130 = sphi 0, %s130
      %s132 = sphi 0, %s130
      %s133 = sphi 0, %s132
      %s147 = sphi 0, %s133
      %s151 = sphi 0, %s151
      %s153 = sphi 0, %s151
      %s154 = sphi 0, %s153
      %s168 = sphi 0, %s154
      %s172 = sphi 0, %s172
      %s174 = sphi 0, %s172
      %s175 = sphi 0, %s174
      %s189 = sphi 0, %s175
      %s193 = sphi 0, %s193
      %s195 = sphi 0, %s193
      %s196 = sphi 0, %s195
      %s210 = sphi 0, %s196
      %s214 = sphi 0, %s214
      %s216 = sphi 0, %s214
      %s217 = sphi 0, %s216
      %s231 = sphi 0, %s217
      %s235 = sphi 0, %s235
      %s237 = sphi 0, %s235
      %s238 = sphi 0, %s237
      %s252 = sphi 0, %s238
      %s256 = sphi 0, %s256
      %s258 = sphi 0, %s256
      %s259 = sphi 0, %s258
      %s273 = sphi 0, %s259
      %s277 = sphi 0, %s277
      %s279 = sphi 0, %s277
      %s280 = sphi 0, %s279
      %s294 = sphi 0, %s280
      %s298 = sphi 0, %s298
      %s300 = sphi 0, %s298
      %s301 = sphi 0, %s300
      %s315 = sphi 0, %s301
      %s319 = sphi 0, %s319
      %s321 = sphi 0, %s319
      %s322 = sphi 0, %s321
      %s336 = sphi 0, %s322
      %s340 = sphi 0, %s340
      %s342 = sphi 0, %s340
      %s343 = sphi 0, %s342
      %s357 = sphi 0, %s343
      %s363 = sphi 0, %s365
      %s366 = sphi 0, %s363
      %s367 = sphi 0, %s366
      %s383 = sphi 0, %s367
      %s389 = sphi 0, %s391
      %s392 = sphi 0, %s389
      %s393 = sphi 0, %s392
      %s409 = sphi 0, %s393
    $region4: #{tpu_custom_call.1} parent=1 // loop_header_branch
      %26 = sbr.rel (%p24) target = $region8
    $region5: #{tpu_custom_call.1} parent=1 // loop_body
      %s28 = ssub.s32 %s23, 1
      %s29 = ssub.s32 %s23, 2
      %s30 = sadd.s32 %s23, 1
      %s31 = ssub.s32 %s23, %s30
      %p32 = scmp.eq.s32.totalorder %s31, 0
      %s34 = sadd.s32 %s33, 1
      %s35 = scalar_select %p32, %s33, %s34
      %p38 = pneg %p32
      %p39 = scmp.eq.s32.totalorder %s23, 1
      %p40 = por %p38, %p39
      %p41 = scmp.ne.s32.totalorder %s33, %s36
      %p42 = scmp.eq.s32.totalorder %s23, 0
      %p43 = por %p41, %p42
      %p44 = scmp.ne.s32.totalorder %s33, %s36
      %p45 = scmp.eq.s32.totalorder %s28, 1
      %p46 = por %p44, %p45
      %p47 = scmp.ne.s32.totalorder %s36, %s37
      %p48 = scmp.eq.s32.totalorder %s28, 0
      %p49 = por %p47, %p48
      %p50 = scmp.ne.s32.totalorder %s36, %s37
      %p51 = scmp.eq.s32.totalorder %s29, 1
      %p52 = por %p50, %p51
      %p54 = scmp.ne.s32.totalorder %s37, %s53
      %p55 = scmp.eq.s32.totalorder %s29, 0
      %p56 = por %p54, %p55
      %s57 = ssub.s32 %s23, %s30
      %p58 = scmp.eq.s32.totalorder %s57, 0
      %s60 = sadd.s32 %s59, 1
      %s61 = scalar_select %p58, %s59, %s60
      %p64 = pneg %p58
      %p65 = scmp.eq.s32.totalorder %s23, 1
      %p66 = por %p64, %p65
      %p67 = scmp.ne.s32.totalorder %s59, %s62
      %p68 = scmp.eq.s32.totalorder %s23, 0
      %p69 = por %p67, %p68
      %p70 = scmp.ne.s32.totalorder %s59, %s62
      %p71 = scmp.eq.s32.totalorder %s28, 1
      %p72 = por %p70, %p71
      %p73 = scmp.ne.s32.totalorder %s62, %s63
      %p74 = scmp.eq.s32.totalorder %s28, 0
      %p75 = por %p73, %p74
      %p76 = scmp.ne.s32.totalorder %s62, %s63
      %p77 = scmp.eq.s32.totalorder %s29, 1
      %p78 = por %p76, %p77
      %p80 = scmp.ne.s32.totalorder %s63, %s79
      %p81 = scmp.eq.s32.totalorder %s29, 0
      %p82 = por %p80, %p81
      %s83 = ssub.s32 %s23, %s30
      %p84 = scmp.eq.s32.totalorder %s83, 0
      %s86 = sadd.s32 %s85, 1
      %s87 = scalar_select %p84, %s85, %s86
      %p90 = pneg %p84
      %p91 = scmp.eq.s32.totalorder %s23, 1
      %p92 = por %p90, %p91
      %p93 = scmp.ne.s32.totalorder %s85, %s88
      %p94 = scmp.eq.s32.totalorder %s23, 0
      %p95 = por %p93, %p94
      %p96 = scmp.ne.s32.totalorder %s85, %s88
      %p97 = scmp.eq.s32.totalorder %s28, 1
      %p98 = por %p96, %p97
      %p99 = scmp.ne.s32.totalorder %s88, %s89
      %p100 = scmp.eq.s32.totalorder %s28, 0
      %p101 = por %p99, %p100
      %p102 = scmp.ne.s32.totalorder %s88, %s89
      %p103 = scmp.eq.s32.totalorder %s29, 1
      %p104 = por %p102, %p103
      %p106 = scmp.ne.s32.totalorder %s89, %s105
      %p107 = scmp.eq.s32.totalorder %s29, 0
      %p108 = por %p106, %p107
      %s110 = sadd.s32 %s109, 1
      %p113 = scmp.eq.s32.totalorder %s23, 1
      %p114 = scmp.ne.s32.totalorder %s109, %s111
      %p115 = scmp.eq.s32.totalorder %s23, 0
      %p116 = por %p114, %p115
      %p117 = scmp.ne.s32.totalorder %s109, %s111
      %p118 = scmp.eq.s32.totalorder %s28, 1
      %p119 = por %p117, %p118
      %p120 = scmp.ne.s32.totalorder %s111, %s112
      %p121 = scmp.eq.s32.totalorder %s28, 0
      %p122 = por %p120, %p121
      %p123 = scmp.ne.s32.totalorder %s111, %s112
      %p124 = scmp.eq.s32.totalorder %s29, 1
      %p125 = por %p123, %p124
      %p127 = scmp.ne.s32.totalorder %s112, %s126
      %p128 = scmp.eq.s32.totalorder %s29, 0
      %p129 = por %p127, %p128
      %s131 = sadd.s32 %s130, 1
      %p134 = scmp.eq.s32.totalorder %s23, 1
      %p135 = scmp.ne.s32.totalorder %s130, %s132
      %p136 = scmp.eq.s32.totalorder %s23, 0
      %p137 = por %p135, %p136
      %p138 = scmp.ne.s32.totalorder %s130, %s132
      %p139 = scmp.eq.s32.totalorder %s28, 1
      %p140 = por %p138, %p139
      %p141 = scmp.ne.s32.totalorder %s132, %s133
      %p142 = scmp.eq.s32.totalorder %s28, 0
      %p143 = por %p141, %p142
      %p144 = scmp.ne.s32.totalorder %s132, %s133
      %p145 = scmp.eq.s32.totalorder %s29, 1
      %p146 = por %p144, %p145
      %p148 = scmp.ne.s32.totalorder %s133, %s147
      %p149 = scmp.eq.s32.totalorder %s29, 0
      %p150 = por %p148, %p149
      %s152 = sadd.s32 %s151, 1
      %p155 = scmp.eq.s32.totalorder %s23, 1
      %p156 = scmp.ne.s32.totalorder %s151, %s153
      %p157 = scmp.eq.s32.totalorder %s23, 0
      %p158 = por %p156, %p157
      %p159 = scmp.ne.s32.totalorder %s151, %s153
      %p160 = scmp.eq.s32.totalorder %s28, 1
      %p161 = por %p159, %p160
      %p162 = scmp.ne.s32.totalorder %s153, %s154
      %p163 = scmp.eq.s32.totalorder %s28, 0
      %p164 = por %p162, %p163
      %p165 = scmp.ne.s32.totalorder %s153, %s154
      %p166 = scmp.eq.s32.totalorder %s29, 1
      %p167 = por %p165, %p166
      %p169 = scmp.ne.s32.totalorder %s154, %s168
      %p170 = scmp.eq.s32.totalorder %s29, 0
      %p171 = por %p169, %p170
      %s173 = sadd.s32 %s172, 1
      %p176 = scmp.eq.s32.totalorder %s23, 1
      %p177 = scmp.ne.s32.totalorder %s172, %s174
      %p178 = scmp.eq.s32.totalorder %s23, 0
      %p179 = por %p177, %p178
      %p180 = scmp.ne.s32.totalorder %s172, %s174
      %p181 = scmp.eq.s32.totalorder %s28, 1
      %p182 = por %p180, %p181
      %p183 = scmp.ne.s32.totalorder %s174, %s175
      %p184 = scmp.eq.s32.totalorder %s28, 0
      %p185 = por %p183, %p184
      %p186 = scmp.ne.s32.totalorder %s174, %s175
      %p187 = scmp.eq.s32.totalorder %s29, 1
      %p188 = por %p186, %p187
      %p190 = scmp.ne.s32.totalorder %s175, %s189
      %p191 = scmp.eq.s32.totalorder %s29, 0
      %p192 = por %p190, %p191
      %s194 = sadd.s32 %s193, 1
      %p197 = scmp.eq.s32.totalorder %s23, 1
      %p198 = scmp.ne.s32.totalorder %s193, %s195
      %p199 = scmp.eq.s32.totalorder %s23, 0
      %p200 = por %p198, %p199
      %p201 = scmp.ne.s32.totalorder %s193, %s195
      %p202 = scmp.eq.s32.totalorder %s28, 1
      %p203 = por %p201, %p202
      %p204 = scmp.ne.s32.totalorder %s195, %s196
      %p205 = scmp.eq.s32.totalorder %s28, 0
      %p206 = por %p204, %p205
      %p207 = scmp.ne.s32.totalorder %s195, %s196
      %p208 = scmp.eq.s32.totalorder %s29, 1
      %p209 = por %p207, %p208
      %p211 = scmp.ne.s32.totalorder %s196, %s210
      %p212 = scmp.eq.s32.totalorder %s29, 0
      %p213 = por %p211, %p212
      %s215 = sadd.s32 %s214, 1
      %p218 = scmp.eq.s32.totalorder %s23, 1
      %p219 = scmp.ne.s32.totalorder %s214, %s216
      %p220 = scmp.eq.s32.totalorder %s23, 0
      %p221 = por %p219, %p220
      %p222 = scmp.ne.s32.totalorder %s214, %s216
      %p223 = scmp.eq.s32.totalorder %s28, 1
      %p224 = por %p222, %p223
      %p225 = scmp.ne.s32.totalorder %s216, %s217
      %p226 = scmp.eq.s32.totalorder %s28, 0
      %p227 = por %p225, %p226
      %p228 = scmp.ne.s32.totalorder %s216, %s217
      %p229 = scmp.eq.s32.totalorder %s29, 1
      %p230 = por %p228, %p229
      %p232 = scmp.ne.s32.totalorder %s217, %s231
      %p233 = scmp.eq.s32.totalorder %s29, 0
      %p234 = por %p232, %p233
      %s236 = sadd.s32 %s235, 1
      %p239 = scmp.eq.s32.totalorder %s23, 1
      %p240 = scmp.ne.s32.totalorder %s235, %s237
      %p241 = scmp.eq.s32.totalorder %s23, 0
      %p242 = por %p240, %p241
      %p243 = scmp.ne.s32.totalorder %s235, %s237
      %p244 = scmp.eq.s32.totalorder %s28, 1
      %p245 = por %p243, %p244
      %p246 = scmp.ne.s32.totalorder %s237, %s238
      %p247 = scmp.eq.s32.totalorder %s28, 0
      %p248 = por %p246, %p247
      %p249 = scmp.ne.s32.totalorder %s237, %s238
      %p250 = scmp.eq.s32.totalorder %s29, 1
      %p251 = por %p249, %p250
      %p253 = scmp.ne.s32.totalorder %s238, %s252
      %p254 = scmp.eq.s32.totalorder %s29, 0
      %p255 = por %p253, %p254
      %s257 = sadd.s32 %s256, 1
      %p260 = scmp.eq.s32.totalorder %s23, 1
      %p261 = scmp.ne.s32.totalorder %s256, %s258
      %p262 = scmp.eq.s32.totalorder %s23, 0
      %p263 = por %p261, %p262
      %p264 = scmp.ne.s32.totalorder %s256, %s258
      %p265 = scmp.eq.s32.totalorder %s28, 1
      %p266 = por %p264, %p265
      %p267 = scmp.ne.s32.totalorder %s258, %s259
      %p268 = scmp.eq.s32.totalorder %s28, 0
      %p269 = por %p267, %p268
      %p270 = scmp.ne.s32.totalorder %s258, %s259
      %p271 = scmp.eq.s32.totalorder %s29, 1
      %p272 = por %p270, %p271
      %p274 = scmp.ne.s32.totalorder %s259, %s273
      %p275 = scmp.eq.s32.totalorder %s29, 0
      %p276 = por %p274, %p275
      %s278 = sadd.s32 %s277, 1
      %p281 = scmp.eq.s32.totalorder %s23, 1
      %p282 = scmp.ne.s32.totalorder %s277, %s279
      %p283 = scmp.eq.s32.totalorder %s23, 0
      %p284 = por %p282, %p283
      %p285 = scmp.ne.s32.totalorder %s277, %s279
      %p286 = scmp.eq.s32.totalorder %s28, 1
      %p287 = por %p285, %p286
      %p288 = scmp.ne.s32.totalorder %s279, %s280
      %p289 = scmp.eq.s32.totalorder %s28, 0
      %p290 = por %p288, %p289
      %p291 = scmp.ne.s32.totalorder %s279, %s280
      %p292 = scmp.eq.s32.totalorder %s29, 1
      %p293 = por %p291, %p292
      %p295 = scmp.ne.s32.totalorder %s280, %s294
      %p296 = scmp.eq.s32.totalorder %s29, 0
      %p297 = por %p295, %p296
      %s299 = sadd.s32 %s298, 1
      %p302 = scmp.eq.s32.totalorder %s23, 1
      %p303 = scmp.ne.s32.totalorder %s298, %s300
      %p304 = scmp.eq.s32.totalorder %s23, 0
      %p305 = por %p303, %p304
      %p306 = scmp.ne.s32.totalorder %s298, %s300
      %p307 = scmp.eq.s32.totalorder %s28, 1
      %p308 = por %p306, %p307
      %p309 = scmp.ne.s32.totalorder %s300, %s301
      %p310 = scmp.eq.s32.totalorder %s28, 0
      %p311 = por %p309, %p310
      %p312 = scmp.ne.s32.totalorder %s300, %s301
      %p313 = scmp.eq.s32.totalorder %s29, 1
      %p314 = por %p312, %p313
      %p316 = scmp.ne.s32.totalorder %s301, %s315
      %p317 = scmp.eq.s32.totalorder %s29, 0
      %p318 = por %p316, %p317
      %s320 = sadd.s32 %s319, 1
      %p323 = scmp.eq.s32.totalorder %s23, 1
      %p324 = scmp.ne.s32.totalorder %s319, %s321
      %p325 = scmp.eq.s32.totalorder %s23, 0
      %p326 = por %p324, %p325
      %p327 = scmp.ne.s32.totalorder %s319, %s321
      %p328 = scmp.eq.s32.totalorder %s28, 1
      %p329 = por %p327, %p328
      %p330 = scmp.ne.s32.totalorder %s321, %s322
      %p331 = scmp.eq.s32.totalorder %s28, 0
      %p332 = por %p330, %p331
      %p333 = scmp.ne.s32.totalorder %s321, %s322
      %p334 = scmp.eq.s32.totalorder %s29, 1
      %p335 = por %p333, %p334
      %p337 = scmp.ne.s32.totalorder %s322, %s336
      %p338 = scmp.eq.s32.totalorder %s29, 0
      %p339 = por %p337, %p338
      %s341 = sadd.s32 %s340, 1
      %p344 = scmp.eq.s32.totalorder %s23, 1
      %p345 = scmp.ne.s32.totalorder %s340, %s342
      %p346 = scmp.eq.s32.totalorder %s23, 0
      %p347 = por %p345, %p346
      %p348 = scmp.ne.s32.totalorder %s340, %s342
      %p349 = scmp.eq.s32.totalorder %s28, 1
      %p350 = por %p348, %p349
      %p351 = scmp.ne.s32.totalorder %s342, %s343
      %p352 = scmp.eq.s32.totalorder %s28, 0
      %p353 = por %p351, %p352
      %p354 = scmp.ne.s32.totalorder %s342, %s343
      %p355 = scmp.eq.s32.totalorder %s29, 1
      %p356 = por %p354, %p355
      %p358 = scmp.ne.s32.totalorder %s343, %s357
      %p359 = scmp.eq.s32.totalorder %s29, 0
      %p360 = por %p358, %p359
      %s361 = ssub.s32 %s23, %s30
      %p362 = scmp.eq.s32.totalorder %s361, 0
      %s364 = sadd.s32 %s363, 1
      %s365 = scalar_select %p362, %s363, %s364
      %p368 = pneg %p362
      %p369 = scmp.eq.s32.totalorder %s23, 1
      %p370 = por %p368, %p369
      %p371 = scmp.ne.s32.totalorder %s363, %s366
      %p372 = scmp.eq.s32.totalorder %s23, 0
      %p373 = por %p371, %p372
      %p374 = scmp.ne.s32.totalorder %s363, %s366
      %p375 = scmp.eq.s32.totalorder %s28, 1
      %p376 = por %p374, %p375
      %p377 = scmp.ne.s32.totalorder %s366, %s367
      %p378 = scmp.eq.s32.totalorder %s28, 0
      %p379 = por %p377, %p378
      %p380 = scmp.ne.s32.totalorder %s366, %s367
      %p381 = scmp.eq.s32.totalorder %s29, 1
      %p382 = por %p380, %p381
      %p384 = scmp.ne.s32.totalorder %s367, %s383
      %p385 = scmp.eq.s32.totalorder %s29, 0
      %p386 = por %p384, %p385
      %s387 = ssub.s32 %s23, %s30
      %p388 = scmp.eq.s32.totalorder %s387, 0
      %s390 = sadd.s32 %s389, 1
      %s391 = scalar_select %p388, %s389, %s390
      %p394 = pneg %p388
      %p395 = scmp.eq.s32.totalorder %s23, 1
      %p396 = por %p394, %p395
      %p397 = scmp.ne.s32.totalorder %s389, %s392
      %p398 = scmp.eq.s32.totalorder %s23, 0
      %p399 = por %p397, %p398
      %p400 = scmp.ne.s32.totalorder %s389, %s392
      %p401 = scmp.eq.s32.totalorder %s28, 1
      %p402 = por %p400, %p401
      %p403 = scmp.ne.s32.totalorder %s392, %s393
      %p404 = scmp.eq.s32.totalorder %s28, 0
      %p405 = por %p403, %p404
      %p406 = scmp.ne.s32.totalorder %s392, %s393
      %p407 = scmp.eq.s32.totalorder %s29, 1
      %p408 = por %p406, %p407
      %p410 = scmp.ne.s32.totalorder %s393, %s409
      %p411 = scmp.eq.s32.totalorder %s29, 0
      %p412 = por %p410, %p411
      %p413 = scmp.le.s32.totalorder 1, %s23
      %p414 = scmp.lt.s32.totalorder %s23, 3
      %p415 = pnand %p413, %p414
      %p416 = pneg %p415
      // Predicated region
      $region9: #{tpu_custom_call.1} parent=5 // pred_check
        _
      $region10: #{tpu_custom_call.1} parent=5 // pred_check_branch
        %418 = sbr.rel (%p415) target = $region12
      $region11: #{tpu_custom_call.1} parent=5 // pred_region
        %s419 = ssub.s32 %s23, 1
        // Predicated region
        $region13: #{tpu_custom_call.1} parent=11 // pred_check
          %p420 = pneg %p122
        $region14: #{tpu_custom_call.1} parent=11 // pred_check_branch
          %422 = sbr.rel (%p420) target = $region16
        $region15: #{tpu_custom_call.1} parent=11 // pred_region
          _
        $region16: #{tpu_custom_call.1} parent=11 // pred_fallthru
          _
        // Predicated region
        $region17: #{tpu_custom_call.1} parent=11 // pred_check
          %p423 = pneg %p143
        $region18: #{tpu_custom_call.1} parent=11 // pred_check_branch
          %425 = sbr.rel (%p423) target = $region20
        $region19: #{tpu_custom_call.1} parent=11 // pred_region
          _
        $region20: #{tpu_custom_call.1} parent=11 // pred_fallthru
          _
        // Predicated region
        $region21: #{tpu_custom_call.1} parent=11 // pred_check
          %p426 = pneg %p164
        $region22: #{tpu_custom_call.1} parent=11 // pred_check_branch
          %428 = sbr.rel (%p426) target = $region24
        $region23: #{tpu_custom_call.1} parent=11 // pred_region
          _
        $region24: #{tpu_custom_call.1} parent=11 // pred_fallthru
          _
        // Predicated region
        $region25: #{tpu_custom_call.1} parent=11 // pred_check
          %p429 = pneg %p185
        $region26: #{tpu_custom_call.1} parent=11 // pred_check_branch
          %431 = sbr.rel (%p429) target = $region28
        $region27: #{tpu_custom_call.1} parent=11 // pred_region
          _
        $region28: #{tpu_custom_call.1} parent=11 // pred_fallthru
          _
        // Predicated region
        $region29: #{tpu_custom_call.1} parent=11 // pred_check
          %p432 = pneg %p206
        $region30: #{tpu_custom_call.1} parent=11 // pred_check_branch
          %434 = sbr.rel (%p432) target = $region32
        $region31: #{tpu_custom_call.1} parent=11 // pred_region
          _
        $region32: #{tpu_custom_call.1} parent=11 // pred_fallthru
          _
        // Predicated region
        $region33: #{tpu_custom_call.1} parent=11 // pred_check
          %p435 = pneg %p227
        $region34: #{tpu_custom_call.1} parent=11 // pred_check_branch
          %437 = sbr.rel (%p435) target = $region36
        $region35: #{tpu_custom_call.1} parent=11 // pred_region
          _
        $region36: #{tpu_custom_call.1} parent=11 // pred_fallthru
          _
        // Predicated region
        $region37: #{tpu_custom_call.1} parent=11 // pred_check
          %p438 = pneg %p248
        $region38: #{tpu_custom_call.1} parent=11 // pred_check_branch
          %440 = sbr.rel (%p438) target = $region40
        $region39: #{tpu_custom_call.1} parent=11 // pred_region
          _
        $region40: #{tpu_custom_call.1} parent=11 // pred_fallthru
          _
        // Predicated region
        $region41: #{tpu_custom_call.1} parent=11 // pred_check
          %p441 = pneg %p269
        $region42: #{tpu_custom_call.1} parent=11 // pred_check_branch
          %443 = sbr.rel (%p441) target = $region44
        $region43: #{tpu_custom_call.1} parent=11 // pred_region
          _
        $region44: #{tpu_custom_call.1} parent=11 // pred_fallthru
          _
        // Predicated region
        $region45: #{tpu_custom_call.1} parent=11 // pred_check
          %p444 = pneg %p290
        $region46: #{tpu_custom_call.1} parent=11 // pred_check_branch
          %446 = sbr.rel (%p444) target = $region48
        $region47: #{tpu_custom_call.1} parent=11 // pred_region
          _
        $region48: #{tpu_custom_call.1} parent=11 // pred_fallthru
          _
        // Predicated region
        $region49: #{tpu_custom_call.1} parent=11 // pred_check
          %p447 = pneg %p311
        $region50: #{tpu_custom_call.1} parent=11 // pred_check_branch
          %449 = sbr.rel (%p447) target = $region52
        $region51: #{tpu_custom_call.1} parent=11 // pred_region
          _
        $region52: #{tpu_custom_call.1} parent=11 // pred_fallthru
          _
        // Predicated region
        $region53: #{tpu_custom_call.1} parent=11 // pred_check
          %p450 = pneg %p332
        $region54: #{tpu_custom_call.1} parent=11 // pred_check_branch
          %452 = sbr.rel (%p450) target = $region56
        $region55: #{tpu_custom_call.1} parent=11 // pred_region
          _
        $region56: #{tpu_custom_call.1} parent=11 // pred_fallthru
          _
        // Predicated region
        $region57: #{tpu_custom_call.1} parent=11 // pred_check
          %p453 = pneg %p353
        $region58: #{tpu_custom_call.1} parent=11 // pred_check_branch
          %455 = sbr.rel (%p453) target = $region60
        $region59: #{tpu_custom_call.1} parent=11 // pred_region
          _
        $region60: #{tpu_custom_call.1} parent=11 // pred_fallthru
          _
      $region12: #{tpu_custom_call.1} parent=5 // pred_fallthru
        _
      %p456 = scmp.lt.s32.totalorder %s23, 2
      // Predicated region
      $region61: #{tpu_custom_call.1} parent=5 // pred_check
        %p457 = pneg %p456
      $region62: #{tpu_custom_call.1} parent=5 // pred_check_branch
        %459 = sbr.rel (%p457) target = $region64
      $region63: #{tpu_custom_call.1} parent=5 // pred_region
        // Predicated region
        $region65: #{tpu_custom_call.1} parent=63 // pred_check
          %p460 = pneg %p43
        $region66: #{tpu_custom_call.1} parent=63 // pred_check_branch
          %462 = sbr.rel (%p460) target = $region68
        $region67: #{tpu_custom_call.1} parent=63 // pred_region
          %p463 = scmp.lt.s32.totalorder %s23, 1
          %s464 = scalar_select %p463, %s23, 1
          %s465 = smul.addr %s464, 4
          %s466 = smul.addr %s465, 8
          %s467 = scalar_lea.vmem %s0, %s466
        $region68: #{tpu_custom_call.1} parent=63 // pred_fallthru
          _
        // Predicated region
        $region69: #{tpu_custom_call.1} parent=63 // pred_check
          %p468 = pneg %p69
        $region70: #{tpu_custom_call.1} parent=63 // pred_check_branch
          %470 = sbr.rel (%p468) target = $region72
        $region71: #{tpu_custom_call.1} parent=63 // pred_region
          %p471 = scmp.lt.s32.totalorder %s23, 1
          %s472 = scalar_select %p471, %s23, 1
          %s473 = smul.addr %s472, 4
          %s474 = smul.addr %s473, 8
          %s475 = scalar_lea.vmem %s1, %s474
        $region72: #{tpu_custom_call.1} parent=63 // pred_fallthru
          _
        // Predicated region
        $region73: #{tpu_custom_call.1} parent=63 // pred_check
          %p476 = pneg %p95
        $region74: #{tpu_custom_call.1} parent=63 // pred_check_branch
          %478 = sbr.rel (%p476) target = $region76
        $region75: #{tpu_custom_call.1} parent=63 // pred_region
          %p479 = scmp.lt.s32.totalorder %s23, 1
          %s480 = scalar_select %p479, %s23, 1
          %s481 = smul.addr %s480, 4
          %s482 = smul.addr %s481, 8
          %s483 = scalar_lea.vmem %s2, %s482
        $region76: #{tpu_custom_call.1} parent=63 // pred_fallthru
          _
      $region64: #{tpu_custom_call.1} parent=5 // pred_fallthru
        _
      %p484 = scmp.le.s32.totalorder 1, %s23
      %p485 = scmp.lt.s32.totalorder %s23, 3
      %p486 = pnand %p484, %p485
      %p487 = pneg %p486
      // Predicated region
      $region77: #{tpu_custom_call.1} parent=5 // pred_check
        _
      $region78: #{tpu_custom_call.1} parent=5 // pred_check_branch
        %489 = sbr.rel (%p486) target = $region80
      $region79: #{tpu_custom_call.1} parent=5 // pred_region
        %s490 = ssub.s32 %s23, 1
        %p491 = scmp.lt.s32.totalorder %s28, 1
        %s492 = scalar_select %p491, %s28, 1
        %s493 = smul.addr %s492, 4
        %s494 = smul.addr %s493, 8
        %s495 = scalar_lea.vmem %s0, %s494
        %p496 = pneg %p49
        %p497 = pneg %p46
        %p498 = scmp.lt.s32.totalorder %s28, 1
        %s499 = scalar_select %p498, %s28, 1
        %s500 = smul.addr %s499, 4
        %s501 = smul.addr %s500, 8
        %s502 = scalar_lea.vmem %s1, %s501
        %p503 = pneg %p75
        %p504 = pneg %p72
        %p505 = scmp.lt.s32.totalorder %s28, 1
        %s506 = scalar_select %p505, %s28, 1
        %s507 = smul.addr %s506, 4
        %s508 = smul.addr %s507, 8
        %s509 = scalar_lea.vmem %s2, %s508
        %p510 = pneg %p101
        %p511 = pneg %p98
        %p512 = pneg %p122
        %p513 = pneg %p119
        %p514 = pneg %p143
        %p515 = pneg %p140
        %p516 = pneg %p164
        %p517 = pneg %p161
        %p518 = pneg %p185
        %p519 = pneg %p182
        %p520 = pneg %p206
        %p521 = pneg %p203
        %p522 = pneg %p227
        %p523 = pneg %p224
        %p524 = pneg %p248
        %p525 = pneg %p245
        %p526 = pneg %p269
        %p527 = pneg %p266
        %p528 = pneg %p290
        %p529 = pneg %p287
        %p530 = pneg %p311
        %p531 = pneg %p308
        %p532 = pneg %p332
        %p533 = pneg %p329
        %p534 = pneg %p353
        %p535 = pneg %p350
        %p536 = pneg %p379
        %p537 = pneg %p376
        %p538 = scmp.lt.s32.totalorder %s28, 1
        %s539 = scalar_select %p538, %s28, 1
        %s540 = smul.addr %s539, 4
        %s541 = smul.addr %s540, 8
        %s542 = scalar_lea.vmem %s15, %s541
        %p543 = pneg %p405
        %p544 = pneg %p402
        %s545 = sand.u32 %s392, 1
        %s546 = sand.u32 %s392, 1
        %s547 = smul.addr %s546, 128
        %s548 = scalar_lea.vmem [#allocation2], %s547
        %p549 = scmp.lt.s32.totalorder %s28, 1
        %s550 = scalar_select %p549, %s28, 1
        %s551 = smul.addr %s550, 4
        %s552 = smul.addr %s551, 8
        %s553 = scalar_lea.vmem %s0, %s552
        %p554 = scmp.lt.s32.totalorder %s28, 1
        %s555 = scalar_select %p554, %s28, 1
        %s556 = smul.addr %s555, 4
        %s557 = smul.addr %s556, 8
        %s558 = scalar_lea.vmem %s1, %s557
        %p559 = scmp.lt.s32.totalorder %s28, 1
        %s560 = scalar_select %p559, %s28, 1
        %s561 = smul.addr %s560, 4
        %s562 = smul.addr %s561, 8
        %s563 = scalar_lea.vmem %s2, %s562
        %p564 = scmp.lt.s32.totalorder %s28, 1
        %s565 = scalar_select %p564, %s28, 1
        %s566 = smul.addr %s565, 4
        %s567 = smul.addr %s566, 8
        %s568 = scalar_lea.vmem %s15, %s567
        %v569 = vld [vmem:[%s553] sm:$0xff]
        %v570 = vld [vmem:[%s553 + $0x8] sm:$0xff]
        %v571 = vld [vmem:[%s553 + $0x10] sm:$0xff]
        %v572 = vld [vmem:[%s553 + $0x18] sm:$0xff]
        %v573 = vld [vmem:[%s558] sm:$0xff]
        %v574 = vld [vmem:[%s558 + $0x8] sm:$0xff]
        %v575 = vld [vmem:[%s558 + $0x10] sm:$0xff]
        %v576 = vld [vmem:[%s558 + $0x18] sm:$0xff]
        %v577 = vadd.f32 %v569, %v573
        %v578 = vadd.f32 %v570, %v574
        %v579 = vadd.f32 %v571, %v575
        %v580 = vadd.f32 %v572, %v576
        %v581 = vld [vmem:[%s563] sm:$0xff]
        %v582 = vld [vmem:[%s563 + $0x8] sm:$0xff]
        %v583 = vld [vmem:[%s563 + $0x10] sm:$0xff]
        %v584 = vld [vmem:[%s563 + $0x18] sm:$0xff]
        %vm585 = vcmask 130048
        %v586 = vsel %vm585, %v577, 0.0
        %v587 = vsel %vm585, %v578, 0.0
        %v588 = vadd.f32 %v586, %v587
        %v589 = vsel %vm585, %v579, 0.0
        %v590 = vadd.f32 %v588, %v589
        %v591 = vsel %vm585, %v580, 0.0
        %v592 = vadd.f32 %v590, %v591
        %v593 = vrot.slane %v592, 4
        %v594 = vadd.f32 %v592, %v593
        %v595 = vrot.slane %v594, 2
        %v596 = vadd.f32 %v594, %v595
        %v597 = vrot.slane %v596, 1
        %v598 = vadd.f32 %v596, %v597
        %v599 = vrcp.pop 32.0
        %v600 = vmul.f32 %v598, %v599
        %v601 = vsub.f32 %v577, %v600
        %v602 = vsub.f32 %v578, %v600
        %v603 = vsub.f32 %v579, %v600
        %v604 = vsub.f32 %v580, %v600
        %v605 = vmul.f32 %v601, %v601
        %v606 = vmul.f32 %v602, %v602
        %v607 = vmul.f32 %v603, %v603
        %v608 = vmul.f32 %v604, %v604
        %v609 = vsel %vm585, %v605, 0.0
        %v610 = vsel %vm585, %v606, 0.0
        %v611 = vadd.f32 %v609, %v610
        %v612 = vsel %vm585, %v607, 0.0
        %v613 = vadd.f32 %v611, %v612
        %v614 = vsel %vm585, %v608, 0.0
        %v615 = vadd.f32 %v613, %v614
        %v616 = vrot.slane %v615, 4
        %v617 = vadd.f32 %v615, %v616
        %v618 = vrot.slane %v617, 2
        %v619 = vadd.f32 %v617, %v618
        %v620 = vrot.slane %v619, 1
        %v621 = vadd.f32 %v619, %v620
        %v622 = vmul.f32 %v621, %v599
        %v623 = vadd.f32 %v622, 1e-05
        %v624 = vrsqrt.pop %v623
        %v625 = vmul.f32 %v601, %v624
        %v626 = vmul.f32 %v602, %v624
        %v627 = vmul.f32 %v603, %v624
        %v628 = vmul.f32 %v604, %v624
        %v629 = vld [vmem:[%s3] sm:$0xff]
        %v630 = vld [vmem:[%s3 + $0x8] sm:$0xff]
        %v631 = vld [vmem:[%s3 + $0x10] sm:$0xff]
        %v632 = vld [vmem:[%s3 + $0x18] sm:$0xff]
        %634 = vset.pattern.permute.xlu0 0
        %635 = vperm.xlu0 %634, %v629
        %v636 = vpop.permute.xlu0 %635
        %639 = vset.pattern.permute.xlu0 0
        %640 = vperm.xlu0 %639, %v630
        %v641 = vpop.permute.xlu0 %640
        %644 = vset.pattern.permute.xlu0 0
        %645 = vperm.xlu0 %644, %v631
        %v646 = vpop.permute.xlu0 %645
        %649 = vset.pattern.permute.xlu0 0
        %650 = vperm.xlu0 %649, %v632
        %v651 = vpop.permute.xlu0 %650
        %v653 = vmul.f32 %v625, %v636
        %v654 = vmul.f32 %v626, %v641
        %v655 = vmul.f32 %v627, %v646
        %v656 = vmul.f32 %v628, %v651
        %v657 = vld [vmem:[%s4] sm:$0xff]
        %v658 = vld [vmem:[%s4 + $0x8] sm:$0xff]
        %v659 = vld [vmem:[%s4 + $0x10] sm:$0xff]
        %v660 = vld [vmem:[%s4 + $0x18] sm:$0xff]
        %662 = vset.pattern.permute.xlu0 0
        %663 = vperm.xlu0 %662, %v657
        %v664 = vpop.permute.xlu0 %663
        %667 = vset.pattern.permute.xlu0 0
        %668 = vperm.xlu0 %667, %v658
        %v669 = vpop.permute.xlu0 %668
        %672 = vset.pattern.permute.xlu0 0
        %673 = vperm.xlu0 %672, %v659
        %v674 = vpop.permute.xlu0 %673
        %677 = vset.pattern.permute.xlu0 0
        %678 = vperm.xlu0 %677, %v660
        %v679 = vpop.permute.xlu0 %678
        %v681 = vadd.f32 %v653, %v664
        %v682 = vadd.f32 %v654, %v669
        %v683 = vadd.f32 %v655, %v674
        %v684 = vadd.f32 %v656, %v679
        %v685 = vld [vmem:[%s5] sm:$0xff]
        %v686 = vld [vmem:[%s5 + $0x8] sm:$0xff]
        %v687 = vld [vmem:[%s5 + $0x10] sm:$0xff]
        %v688 = vld [vmem:[%s5 + $0x18] sm:$0xff]
        %vm689 = vcmask 261120
        %v691 = vsel %vm689, %v685, 0
        %v694 = vsel %vm689, %v686, 0
        %v697 = vsel %vm689, %v687, 0
        %v700 = vsel %vm689, %v688, 0
        %702 = vmatprep.subr.mxu0 0.0
        %703 = vmatpush1.msra.mxu0 0.0
        %704 = vmatprep.subr.mxu0 0.0
        %705 = vmatpush1.msra.mxu0 0.0
        %706 = vmatprep.subr.mxu0 0.0
        %707 = vmatpush1.msra.mxu0 0.0
        %708 = vmatprep.subr.mxu0 0.0
        %709 = vmatpush1.msra.mxu0 0.0
        %710 = vmatprep.subr.mxu0 0.0
        %711 = vmatpush1.msra.mxu0 0.0
        %712 = vmatprep.subr.mxu0 0.0
        %713 = vmatpush1.msra.mxu0 0.0
        %714 = vmatprep.subr.mxu0 0.0
        %715 = vmatpush1.msra.mxu0 0.0
        %716 = vmatprep.subr.mxu0 0.0
        %717 = vmatpush1.msra.mxu0 0.0
        %718 = vmatprep.subr.mxu0 0.0
        %719 = vmatpush1.msra.mxu0 0.0
        %720 = vmatprep.subr.mxu0 0.0
        %721 = vmatpush1.msra.mxu0 0.0
        %722 = vmatprep.subr.mxu0 0.0
        %723 = vmatpush1.msra.mxu0 0.0
        %724 = vmatprep.subr.mxu0 0.0
        %725 = vmatpush1.msra.mxu0 0.0
        %726 = vmatprep.subr.mxu0 0.0
        %727 = vmatpush1.msra.mxu0 %v684
        %728 = vmatprep.subr.mxu0 0.0
        %729 = vmatpush1.msra.mxu0 %v683
        %730 = vmatprep.subr.mxu0 0.0
        %731 = vmatpush1.msra.mxu0 %v682
        %732 = vmatprep.subr.mxu0 0.0
        %733 = vmatpush1.msra.mxu0 %v681
        %734 = vmatprep.subr.mxu0 0.0
        %735 = vmatpush2.msra.mxu0 0.0
        %736 = vmatprep.subr.mxu0 0.0
        %737 = vmatpush2.msra.mxu0 0.0
        %738 = vmatprep.subr.mxu0 0.0
        %739 = vmatpush2.msra.mxu0 0.0
        %740 = vmatprep.subr.mxu0 0.0
        %741 = vmatpush2.msra.mxu0 0.0
        %742 = vmatprep.subr.mxu0 0.0
        %743 = vmatpush2.msra.mxu0 0.0
        %744 = vmatprep.subr.mxu0 0.0
        %745 = vmatpush2.msra.mxu0 0.0
        %746 = vmatprep.subr.mxu0 0.0
        %747 = vmatpush2.msra.mxu0 0.0
        %748 = vmatprep.subr.mxu0 0.0
        %749 = vmatpush2.msra.mxu0 0.0
        %750 = vmatprep.subr.mxu0 0.0
        %751 = vmatpush2.msra.mxu0 0.0
        %752 = vmatprep.subr.mxu0 0.0
        %753 = vmatpush2.msra.mxu0 0.0
        %754 = vmatprep.subr.mxu0 0.0
        %755 = vmatpush2.msra.mxu0 0.0
        %756 = vmatprep.subr.mxu0 0.0
        %757 = vmatpush2.msra.mxu0 0.0
        %758 = vmatprep.subr.mxu0 0.0
        %759 = vmatpush2.msra.mxu0 0.0
        %760 = vmatprep.subr.mxu0 0.0
        %761 = vmatpush2.msra.mxu0 0.0
        %762 = vmatprep.subr.mxu0 0.0
        %763 = vmatpush2.msra.mxu0 0.0
        %764 = vmatprep.subr.mxu0 0.0
        %765 = vmatpush2.msra.mxu0 0.0
        %766 = vmatprep.mubr.f32.mxu0 0.0
        %767 = vmatmul.mubr.f32.gmra.mxu0 %v691
        %v768 = vpop.f32.mrf.mxu0
        %v769 = vadd.f32 0.0, %v768
        %v770 = vpop.f32.mrf.mxu0
        %771 = vmatprep.mubr.f32.mxu0 0.0
        %772 = vmatmul.mubr.f32.gmra.mxu0 %v694
        %v773 = vpop.f32.mrf.mxu0
        %v774 = vadd.f32 0.0, %v773
        %v775 = vpop.f32.mrf.mxu0
        %776 = vmatprep.mubr.f32.mxu0 0.0
        %777 = vmatmul.mubr.f32.gmra.mxu0 %v697
        %v778 = vpop.f32.mrf.mxu0
        %v779 = vadd.f32 0.0, %v778
        %v780 = vpop.f32.mrf.mxu0
        %781 = vmatprep.mubr.f32.mxu0 0.0
        %782 = vmatmul.mubr.f32.gmra.mxu0 %v700
        %v783 = vpop.f32.mrf.mxu0
        %v784 = vadd.f32 0.0, %v783
        %v785 = vpop.f32.mrf.mxu0
        %786 = vdwg.mxu0
        %v787 = vld [vmem:[%s6] sm:$0xff]
        %v788 = vld [vmem:[%s6 + $0x8] sm:$0xff]
        %v789 = vld [vmem:[%s6 + $0x10] sm:$0xff]
        %v790 = vld [vmem:[%s6 + $0x18] sm:$0xff]
        %v791 = vld [vmem:[%s6 + $0x20] sm:$0xff]
        %v792 = vld [vmem:[%s6 + $0x28] sm:$0xff]
        %v793 = vld [vmem:[%s6 + $0x30] sm:$0xff]
        %v794 = vld [vmem:[%s6 + $0x38] sm:$0xff]
        %v796 = vsel %vm689, %v787, 0
        %v799 = vsel %vm689, %v788, 0
        %v802 = vsel %vm689, %v789, 0
        %v805 = vsel %vm689, %v790, 0
        %v808 = vsel %vm689, %v791, 0
        %v811 = vsel %vm689, %v792, 0
        %v814 = vsel %vm689, %v793, 0
        %v817 = vsel %vm689, %v794, 0
        %819 = vmatprep.subr.mxu0 0.0
        %820 = vmatpush1.msra.mxu0 0.0
        %821 = vmatprep.subr.mxu0 0.0
        %822 = vmatpush1.msra.mxu0 0.0
        %823 = vmatprep.subr.mxu0 0.0
        %824 = vmatpush1.msra.mxu0 0.0
        %825 = vmatprep.subr.mxu0 0.0
        %826 = vmatpush1.msra.mxu0 0.0
        %827 = vmatprep.subr.mxu0 0.0
        %828 = vmatpush1.msra.mxu0 0.0
        %829 = vmatprep.subr.mxu0 0.0
        %830 = vmatpush1.msra.mxu0 0.0
        %831 = vmatprep.subr.mxu0 0.0
        %832 = vmatpush1.msra.mxu0 0.0
        %833 = vmatprep.subr.mxu0 0.0
        %834 = vmatpush1.msra.mxu0 0.0
        %835 = vmatprep.subr.mxu0 0.0
        %836 = vmatpush1.msra.mxu0 0.0
        %837 = vmatprep.subr.mxu0 0.0
        %838 = vmatpush1.msra.mxu0 0.0
        %839 = vmatprep.subr.mxu0 0.0
        %840 = vmatpush1.msra.mxu0 0.0
        %841 = vmatprep.subr.mxu0 0.0
        %842 = vmatpush1.msra.mxu0 0.0
        %843 = vmatprep.subr.mxu0 0.0
        %844 = vmatpush1.msra.mxu0 %v584
        %845 = vmatprep.subr.mxu0 0.0
        %846 = vmatpush1.msra.mxu0 %v583
        %847 = vmatprep.subr.mxu0 0.0
        %848 = vmatpush1.msra.mxu0 %v582
        %849 = vmatprep.subr.mxu0 0.0
        %850 = vmatpush1.msra.mxu0 %v581
        %851 = vmatprep.subr.mxu0 0.0
        %852 = vmatpush2.msra.mxu0 0.0
        %853 = vmatprep.subr.mxu0 0.0
        %854 = vmatpush2.msra.mxu0 0.0
        %855 = vmatprep.subr.mxu0 0.0
        %856 = vmatpush2.msra.mxu0 0.0
        %857 = vmatprep.subr.mxu0 0.0
        %858 = vmatpush2.msra.mxu0 0.0
        %859 = vmatprep.subr.mxu0 0.0
        %860 = vmatpush2.msra.mxu0 0.0
        %861 = vmatprep.subr.mxu0 0.0
        %862 = vmatpush2.msra.mxu0 0.0
        %863 = vmatprep.subr.mxu0 0.0
        %864 = vmatpush2.msra.mxu0 0.0
        %865 = vmatprep.subr.mxu0 0.0
        %866 = vmatpush2.msra.mxu0 0.0
        %867 = vmatprep.subr.mxu0 0.0
        %868 = vmatpush2.msra.mxu0 0.0
        %869 = vmatprep.subr.mxu0 0.0
        %870 = vmatpush2.msra.mxu0 0.0
        %871 = vmatprep.subr.mxu0 0.0
        %872 = vmatpush2.msra.mxu0 0.0
        %873 = vmatprep.subr.mxu0 0.0
        %874 = vmatpush2.msra.mxu0 0.0
        %875 = vmatprep.subr.mxu0 0.0
        %876 = vmatpush2.msra.mxu0 0.0
        %877 = vmatprep.subr.mxu0 0.0
        %878 = vmatpush2.msra.mxu0 0.0
        %879 = vmatprep.subr.mxu0 0.0
        %880 = vmatpush2.msra.mxu0 0.0
        %881 = vmatprep.subr.mxu0 0.0
        %882 = vmatpush2.msra.mxu0 0.0
        %883 = vmatprep.mubr.f32.mxu0 0.0
        %884 = vmatmul.mubr.f32.gmra.mxu0 %v796
        %v885 = vpop.f32.mrf.mxu0
        %v886 = vadd.f32 0.0, %v885
        %v887 = vpop.f32.mrf.mxu0
        %888 = vmatprep.mubr.f32.mxu0 0.0
        %889 = vmatmul.mubr.f32.gmra.mxu0 %v799
        %v890 = vpop.f32.mrf.mxu0
        %v891 = vadd.f32 0.0, %v890
        %v892 = vpop.f32.mrf.mxu0
        %893 = vmatprep.mubr.f32.mxu0 0.0
        %894 = vmatmul.mubr.f32.gmra.mxu0 %v802
        %v895 = vpop.f32.mrf.mxu0
        %v896 = vadd.f32 0.0, %v895
        %v897 = vpop.f32.mrf.mxu0
        %898 = vmatprep.mubr.f32.mxu0 0.0
        %899 = vmatmul.mubr.f32.gmra.mxu0 %v805
        %v900 = vpop.f32.mrf.mxu0
        %v901 = vadd.f32 0.0, %v900
        %v902 = vpop.f32.mrf.mxu0
        %903 = vmatprep.mubr.f32.mxu0 0.0
        %904 = vmatmul.mubr.f32.gmra.mxu0 %v808
        %v905 = vpop.f32.mrf.mxu0
        %v906 = vadd.f32 0.0, %v905
        %v907 = vpop.f32.mrf.mxu0
        %908 = vmatprep.mubr.f32.mxu0 0.0
        %909 = vmatmul.mubr.f32.gmra.mxu0 %v811
        %v910 = vpop.f32.mrf.mxu0
        %v911 = vadd.f32 0.0, %v910
        %v912 = vpop.f32.mrf.mxu0
        %913 = vmatprep.mubr.f32.mxu0 0.0
        %914 = vmatmul.mubr.f32.gmra.mxu0 %v814
        %v915 = vpop.f32.mrf.mxu0
        %v916 = vadd.f32 0.0, %v915
        %v917 = vpop.f32.mrf.mxu0
        %918 = vmatprep.mubr.f32.mxu0 0.0
        %919 = vmatmul.mubr.f32.gmra.mxu0 %v817
        %v920 = vpop.f32.mrf.mxu0
        %v921 = vadd.f32 0.0, %v920
        %v922 = vpop.f32.mrf.mxu0
        %923 = vdwg.mxu0
        %924 = vxpose.xlu0.b32.start [1/16] %v769, 128
        %925 = vxpose.xlu0.b32.cont [2/16] 0.0, 128
        %926 = vxpose.xlu0.b32.cont [3/16] 0.0, 128
        %927 = vxpose.xlu0.b32.cont [4/16] 0.0, 128
        %928 = vxpose.xlu0.b32.cont [5/16] 0.0, 128
        %929 = vxpose.xlu0.b32.cont [6/16] 0.0, 128
        %930 = vxpose.xlu0.b32.cont [7/16] 0.0, 128
        %931 = vxpose.xlu0.b32.cont [8/16] 0.0, 128
        %932 = vxpose.xlu0.b32.cont [9/16] 0.0, 128
        %933 = vxpose.xlu0.b32.cont [10/16] 0.0, 128
        %934 = vxpose.xlu0.b32.cont [11/16] 0.0, 128
        %935 = vxpose.xlu0.b32.cont [12/16] 0.0, 128
        %936 = vxpose.xlu0.b32.cont [13/16] 0.0, 128
        %937 = vxpose.xlu0.b32.cont [14/16] 0.0, 128
        %938 = vxpose.xlu0.b32.cont [15/16] 0.0, 128
        %939 = vxpose.xlu0.b32.end [16/16] 0.0, 128
        %v940 = vpop.trf.xlu0
        %v941 = vpop.trf.xlu0
        %v942 = vpop.trf.xlu0
        %v943 = vpop.trf.xlu0
        %v944 = vpop.trf.xlu0
        %v945 = vpop.trf.xlu0
        %v946 = vpop.trf.xlu0
        %v947 = vpop.trf.xlu0
        %v948 = vpop.trf.xlu0
        %v949 = vpop.trf.xlu0
        %v950 = vpop.trf.xlu0
        %v951 = vpop.trf.xlu0
        %v952 = vpop.trf.xlu0
        %v953 = vpop.trf.xlu0
        %v954 = vpop.trf.xlu0
        %v955 = vpop.trf.xlu0
        %vm956 = vcmask 64512
        %v958 = vsel %vm956, %v940, 0
        %v961 = vsel %vm956, %v941, 0
        %963 = vmatprep.subr.mxu0 0.0
        %964 = vmatpush1.msra.mxu0 0.0
        %965 = vmatprep.subr.mxu0 0.0
        %966 = vmatpush1.msra.mxu0 0.0
        %967 = vmatprep.subr.mxu0 0.0
        %968 = vmatpush1.msra.mxu0 0.0
        %969 = vmatprep.subr.mxu0 0.0
        %970 = vmatpush1.msra.mxu0 0.0
        %971 = vmatprep.subr.mxu0 0.0
        %972 = vmatpush1.msra.mxu0 0.0
        %973 = vmatprep.subr.mxu0 0.0
        %974 = vmatpush1.msra.mxu0 0.0
        %975 = vmatprep.subr.mxu0 0.0
        %976 = vmatpush1.msra.mxu0 0.0
        %977 = vmatprep.subr.mxu0 0.0
        %978 = vmatpush1.msra.mxu0 0.0
        %979 = vmatprep.subr.mxu0 0.0
        %980 = vmatpush1.msra.mxu0 0.0
        %981 = vmatprep.subr.mxu0 0.0
        %982 = vmatpush1.msra.mxu0 0.0
        %983 = vmatprep.subr.mxu0 0.0
        %984 = vmatpush1.msra.mxu0 0.0
        %985 = vmatprep.subr.mxu0 0.0
        %986 = vmatpush1.msra.mxu0 0.0
        %987 = vmatprep.subr.mxu0 0.0
        %988 = vmatpush1.msra.mxu0 0.0
        %989 = vmatprep.subr.mxu0 0.0
        %990 = vmatpush1.msra.mxu0 0.0
        %991 = vmatprep.subr.mxu0 0.0
        %992 = vmatpush1.msra.mxu0 0.0
        %993 = vmatprep.subr.mxu0 0.0
        %994 = vmatpush1.msra.mxu0 %v886
        %995 = vmatprep.subr.mxu0 0.0
        %996 = vmatpush2.msra.mxu0 0.0
        %997 = vmatprep.subr.mxu0 0.0
        %998 = vmatpush2.msra.mxu0 0.0
        %999 = vmatprep.subr.mxu0 0.0
        %1000 = vmatpush2.msra.mxu0 0.0
        %1001 = vmatprep.subr.mxu0 0.0
        %1002 = vmatpush2.msra.mxu0 0.0
        %1003 = vmatprep.subr.mxu0 0.0
        %1004 = vmatpush2.msra.mxu0 0.0
        %1005 = vmatprep.subr.mxu0 0.0
        %1006 = vmatpush2.msra.mxu0 0.0
        %1007 = vmatprep.subr.mxu0 0.0
        %1008 = vmatpush2.msra.mxu0 0.0
        %1009 = vmatprep.subr.mxu0 0.0
        %1010 = vmatpush2.msra.mxu0 0.0
        %1011 = vmatprep.subr.mxu0 0.0
        %1012 = vmatpush2.msra.mxu0 0.0
        %1013 = vmatprep.subr.mxu0 0.0
        %1014 = vmatpush2.msra.mxu0 0.0
        %1015 = vmatprep.subr.mxu0 0.0
        %1016 = vmatpush2.msra.mxu0 0.0
        %1017 = vmatprep.subr.mxu0 0.0
        %1018 = vmatpush2.msra.mxu0 0.0
        %1019 = vmatprep.subr.mxu0 0.0
        %1020 = vmatpush2.msra.mxu0 0.0
        %1021 = vmatprep.subr.mxu0 0.0
        %1022 = vmatpush2.msra.mxu0 0.0
        %1023 = vmatprep.subr.mxu0 0.0
        %1024 = vmatpush2.msra.mxu0 0.0
        %1025 = vmatprep.subr.mxu0 0.0
        %1026 = vmatpush2.msra.mxu0 0.0
        %1027 = vmatprep.mubr.f32.mxu0 0.0
        %1028 = vmatmul.mubr.f32.gmra.mxu0 %v958
        %v1029 = vpop.f32.mrf.mxu0
        %v1030 = vadd.f32 0.0, %v1029
        %v1031 = vpop.f32.mrf.mxu0
        %1032 = vmatprep.mubr.f32.mxu0 0.0
        %1033 = vmatmul.mubr.f32.gmra.mxu0 %v961
        %v1034 = vpop.f32.mrf.mxu0
        %v1035 = vadd.f32 0.0, %v1034
        %v1036 = vpop.f32.mrf.mxu0
        %1037 = vdwg.mxu0
        %1038 = vxpose.xlu0.b32.start [1/16] %v774, 128
        %1039 = vxpose.xlu0.b32.cont [2/16] 0.0, 128
        %1040 = vxpose.xlu0.b32.cont [3/16] 0.0, 128
        %1041 = vxpose.xlu0.b32.cont [4/16] 0.0, 128
        %1042 = vxpose.xlu0.b32.cont [5/16] 0.0, 128
        %1043 = vxpose.xlu0.b32.cont [6/16] 0.0, 128
        %1044 = vxpose.xlu0.b32.cont [7/16] 0.0, 128
        %1045 = vxpose.xlu0.b32.cont [8/16] 0.0, 128
        %1046 = vxpose.xlu0.b32.cont [9/16] 0.0, 128
        %1047 = vxpose.xlu0.b32.cont [10/16] 0.0, 128
        %1048 = vxpose.xlu0.b32.cont [11/16] 0.0, 128
        %1049 = vxpose.xlu0.b32.cont [12/16] 0.0, 128
        %1050 = vxpose.xlu0.b32.cont [13/16] 0.0, 128
        %1051 = vxpose.xlu0.b32.cont [14/16] 0.0, 128
        %1052 = vxpose.xlu0.b32.cont [15/16] 0.0, 128
        %1053 = vxpose.xlu0.b32.end [16/16] 0.0, 128
        %v1054 = vpop.trf.xlu0
        %v1055 = vpop.trf.xlu0
        %v1056 = vpop.trf.xlu0
        %v1057 = vpop.trf.xlu0
        %v1058 = vpop.trf.xlu0
        %v1059 = vpop.trf.xlu0
        %v1060 = vpop.trf.xlu0
        %v1061 = vpop.trf.xlu0
        %v1062 = vpop.trf.xlu0
        %v1063 = vpop.trf.xlu0
        %v1064 = vpop.trf.xlu0
        %v1065 = vpop.trf.xlu0
        %v1066 = vpop.trf.xlu0
        %v1067 = vpop.trf.xlu0
        %v1068 = vpop.trf.xlu0
        %v1069 = vpop.trf.xlu0
        %v1071 = vsel %vm956, %v1054, 0
        %v1074 = vsel %vm956, %v1055, 0
        %1076 = vmatprep.subr.mxu0 0.0
        %1077 = vmatpush1.msra.mxu0 0.0
        %1078 = vmatprep.subr.mxu0 0.0
        %1079 = vmatpush1.msra.mxu0 0.0
        %1080 = vmatprep.subr.mxu0 0.0
        %1081 = vmatpush1.msra.mxu0 0.0
        %1082 = vmatprep.subr.mxu0 0.0
        %1083 = vmatpush1.msra.mxu0 0.0
        %1084 = vmatprep.subr.mxu0 0.0
        %1085 = vmatpush1.msra.mxu0 0.0
        %1086 = vmatprep.subr.mxu0 0.0
        %1087 = vmatpush1.msra.mxu0 0.0
        %1088 = vmatprep.subr.mxu0 0.0
        %1089 = vmatpush1.msra.mxu0 0.0
        %1090 = vmatprep.subr.mxu0 0.0
        %1091 = vmatpush1.msra.mxu0 0.0
        %1092 = vmatprep.subr.mxu0 0.0
        %1093 = vmatpush1.msra.mxu0 0.0
        %1094 = vmatprep.subr.mxu0 0.0
        %1095 = vmatpush1.msra.mxu0 0.0
        %1096 = vmatprep.subr.mxu0 0.0
        %1097 = vmatpush1.msra.mxu0 0.0
        %1098 = vmatprep.subr.mxu0 0.0
        %1099 = vmatpush1.msra.mxu0 0.0
        %1100 = vmatprep.subr.mxu0 0.0
        %1101 = vmatpush1.msra.mxu0 0.0
        %1102 = vmatprep.subr.mxu0 0.0
        %1103 = vmatpush1.msra.mxu0 0.0
        %1104 = vmatprep.subr.mxu0 0.0
        %1105 = vmatpush1.msra.mxu0 0.0
        %1106 = vmatprep.subr.mxu0 0.0
        %1107 = vmatpush1.msra.mxu0 %v891
        %1108 = vmatprep.subr.mxu0 0.0
        %1109 = vmatpush2.msra.mxu0 0.0
        %1110 = vmatprep.subr.mxu0 0.0
        %1111 = vmatpush2.msra.mxu0 0.0
        %1112 = vmatprep.subr.mxu0 0.0
        %1113 = vmatpush2.msra.mxu0 0.0
        %1114 = vmatprep.subr.mxu0 0.0
        %1115 = vmatpush2.msra.mxu0 0.0
        %1116 = vmatprep.subr.mxu0 0.0
        %1117 = vmatpush2.msra.mxu0 0.0
        %1118 = vmatprep.subr.mxu0 0.0
        %1119 = vmatpush2.msra.mxu0 0.0
        %1120 = vmatprep.subr.mxu0 0.0
        %1121 = vmatpush2.msra.mxu0 0.0
        %1122 = vmatprep.subr.mxu0 0.0
        %1123 = vmatpush2.msra.mxu0 0.0
        %1124 = vmatprep.subr.mxu0 0.0
        %1125 = vmatpush2.msra.mxu0 0.0
        %1126 = vmatprep.subr.mxu0 0.0
        %1127 = vmatpush2.msra.mxu0 0.0
        %1128 = vmatprep.subr.mxu0 0.0
        %1129 = vmatpush2.msra.mxu0 0.0
        %1130 = vmatprep.subr.mxu0 0.0
        %1131 = vmatpush2.msra.mxu0 0.0
        %1132 = vmatprep.subr.mxu0 0.0
        %1133 = vmatpush2.msra.mxu0 0.0
        %1134 = vmatprep.subr.mxu0 0.0
        %1135 = vmatpush2.msra.mxu0 0.0
        %1136 = vmatprep.subr.mxu0 0.0
        %1137 = vmatpush2.msra.mxu0 0.0
        %1138 = vmatprep.subr.mxu0 0.0
        %1139 = vmatpush2.msra.mxu0 0.0
        %1140 = vmatprep.mubr.f32.mxu0 0.0
        %1141 = vmatmul.mubr.f32.gmra.mxu0 %v1071
        %v1142 = vpop.f32.mrf.mxu0
        %v1143 = vadd.f32 0.0, %v1142
        %v1144 = vpop.f32.mrf.mxu0
        %1145 = vmatprep.mubr.f32.mxu0 0.0
        %1146 = vmatmul.mubr.f32.gmra.mxu0 %v1074
        %v1147 = vpop.f32.mrf.mxu0
        %v1148 = vadd.f32 0.0, %v1147
        %v1149 = vpop.f32.mrf.mxu0
        %1150 = vdwg.mxu0
        %1151 = vxpose.xlu0.b32.start [1/16] %v779, 128
        %1152 = vxpose.xlu0.b32.cont [2/16] 0.0, 128
        %1153 = vxpose.xlu0.b32.cont [3/16] 0.0, 128
        %1154 = vxpose.xlu0.b32.cont [4/16] 0.0, 128
        %1155 = vxpose.xlu0.b32.cont [5/16] 0.0, 128
        %1156 = vxpose.xlu0.b32.cont [6/16] 0.0, 128
        %1157 = vxpose.xlu0.b32.cont [7/16] 0.0, 128
        %1158 = vxpose.xlu0.b32.cont [8/16] 0.0, 128
        %1159 = vxpose.xlu0.b32.cont [9/16] 0.0, 128
        %1160 = vxpose.xlu0.b32.cont [10/16] 0.0, 128
        %1161 = vxpose.xlu0.b32.cont [11/16] 0.0, 128
        %1162 = vxpose.xlu0.b32.cont [12/16] 0.0, 128
        %1163 = vxpose.xlu0.b32.cont [13/16] 0.0, 128
        %1164 = vxpose.xlu0.b32.cont [14/16] 0.0, 128
        %1165 = vxpose.xlu0.b32.cont [15/16] 0.0, 128
        %1166 = vxpose.xlu0.b32.end [16/16] 0.0, 128
        %v1167 = vpop.trf.xlu0
        %v1168 = vpop.trf.xlu0
        %v1169 = vpop.trf.xlu0
        %v1170 = vpop.trf.xlu0
        %v1171 = vpop.trf.xlu0
        %v1172 = vpop.trf.xlu0
        %v1173 = vpop.trf.xlu0
        %v1174 = vpop.trf.xlu0
        %v1175 = vpop.trf.xlu0
        %v1176 = vpop.trf.xlu0
        %v1177 = vpop.trf.xlu0
        %v1178 = vpop.trf.xlu0
        %v1179 = vpop.trf.xlu0
        %v1180 = vpop.trf.xlu0
        %v1181 = vpop.trf.xlu0
        %v1182 = vpop.trf.xlu0
        %v1184 = vsel %vm956, %v1167, 0
        %v1187 = vsel %vm956, %v1168, 0
        %1189 = vmatprep.subr.mxu0 0.0
        %1190 = vmatpush1.msra.mxu0 0.0
        %1191 = vmatprep.subr.mxu0 0.0
        %1192 = vmatpush1.msra.mxu0 0.0
        %1193 = vmatprep.subr.mxu0 0.0
        %1194 = vmatpush1.msra.mxu0 0.0
        %1195 = vmatprep.subr.mxu0 0.0
        %1196 = vmatpush1.msra.mxu0 0.0
        %1197 = vmatprep.subr.mxu0 0.0
        %1198 = vmatpush1.msra.mxu0 0.0
        %1199 = vmatprep.subr.mxu0 0.0
        %1200 = vmatpush1.msra.mxu0 0.0
        %1201 = vmatprep.subr.mxu0 0.0
        %1202 = vmatpush1.msra.mxu0 0.0
        %1203 = vmatprep.subr.mxu0 0.0
        %1204 = vmatpush1.msra.mxu0 0.0
        %1205 = vmatprep.subr.mxu0 0.0
        %1206 = vmatpush1.msra.mxu0 0.0
        %1207 = vmatprep.subr.mxu0 0.0
        %1208 = vmatpush1.msra.mxu0 0.0
        %1209 = vmatprep.subr.mxu0 0.0
        %1210 = vmatpush1.msra.mxu0 0.0
        %1211 = vmatprep.subr.mxu0 0.0
        %1212 = vmatpush1.msra.mxu0 0.0
        %1213 = vmatprep.subr.mxu0 0.0
        %1214 = vmatpush1.msra.mxu0 0.0
        %1215 = vmatprep.subr.mxu0 0.0
        %1216 = vmatpush1.msra.mxu0 0.0
        %1217 = vmatprep.subr.mxu0 0.0
        %1218 = vmatpush1.msra.mxu0 0.0
        %1219 = vmatprep.subr.mxu0 0.0
        %1220 = vmatpush1.msra.mxu0 %v896
        %1221 = vmatprep.subr.mxu0 0.0
        %1222 = vmatpush2.msra.mxu0 0.0
        %1223 = vmatprep.subr.mxu0 0.0
        %1224 = vmatpush2.msra.mxu0 0.0
        %1225 = vmatprep.subr.mxu0 0.0
        %1226 = vmatpush2.msra.mxu0 0.0
        %1227 = vmatprep.subr.mxu0 0.0
        %1228 = vmatpush2.msra.mxu0 0.0
        %1229 = vmatprep.subr.mxu0 0.0
        %1230 = vmatpush2.msra.mxu0 0.0
        %1231 = vmatprep.subr.mxu0 0.0
        %1232 = vmatpush2.msra.mxu0 0.0
        %1233 = vmatprep.subr.mxu0 0.0
        %1234 = vmatpush2.msra.mxu0 0.0
        %1235 = vmatprep.subr.mxu0 0.0
        %1236 = vmatpush2.msra.mxu0 0.0
        %1237 = vmatprep.subr.mxu0 0.0
        %1238 = vmatpush2.msra.mxu0 0.0
        %1239 = vmatprep.subr.mxu0 0.0
        %1240 = vmatpush2.msra.mxu0 0.0
        %1241 = vmatprep.subr.mxu0 0.0
        %1242 = vmatpush2.msra.mxu0 0.0
        %1243 = vmatprep.subr.mxu0 0.0
        %1244 = vmatpush2.msra.mxu0 0.0
        %1245 = vmatprep.subr.mxu0 0.0
        %1246 = vmatpush2.msra.mxu0 0.0
        %1247 = vmatprep.subr.mxu0 0.0
        %1248 = vmatpush2.msra.mxu0 0.0
        %1249 = vmatprep.subr.mxu0 0.0
        %1250 = vmatpush2.msra.mxu0 0.0
        %1251 = vmatprep.subr.mxu0 0.0
        %1252 = vmatpush2.msra.mxu0 0.0
        %1253 = vmatprep.mubr.f32.mxu0 0.0
        %1254 = vmatmul.mubr.f32.gmra.mxu0 %v1184
        %v1255 = vpop.f32.mrf.mxu0
        %v1256 = vadd.f32 0.0, %v1255
        %v1257 = vpop.f32.mrf.mxu0
        %1258 = vmatprep.mubr.f32.mxu0 0.0
        %1259 = vmatmul.mubr.f32.gmra.mxu0 %v1187
        %v1260 = vpop.f32.mrf.mxu0
        %v1261 = vadd.f32 0.0, %v1260
        %v1262 = vpop.f32.mrf.mxu0
        %1263 = vdwg.mxu0
        %1264 = vxpose.xlu0.b32.start [1/16] %v784, 128
        %1265 = vxpose.xlu0.b32.cont [2/16] 0.0, 128
        %1266 = vxpose.xlu0.b32.cont [3/16] 0.0, 128
        %1267 = vxpose.xlu0.b32.cont [4/16] 0.0, 128
        %1268 = vxpose.xlu0.b32.cont [5/16] 0.0, 128
        %1269 = vxpose.xlu0.b32.cont [6/16] 0.0, 128
        %1270 = vxpose.xlu0.b32.cont [7/16] 0.0, 128
        %1271 = vxpose.xlu0.b32.cont [8/16] 0.0, 128
        %1272 = vxpose.xlu0.b32.cont [9/16] 0.0, 128
        %1273 = vxpose.xlu0.b32.cont [10/16] 0.0, 128
        %1274 = vxpose.xlu0.b32.cont [11/16] 0.0, 128
        %1275 = vxpose.xlu0.b32.cont [12/16] 0.0, 128
        %1276 = vxpose.xlu0.b32.cont [13/16] 0.0, 128
        %1277 = vxpose.xlu0.b32.cont [14/16] 0.0, 128
        %1278 = vxpose.xlu0.b32.cont [15/16] 0.0, 128
        %1279 = vxpose.xlu0.b32.end [16/16] 0.0, 128
        %v1280 = vpop.trf.xlu0
        %v1281 = vpop.trf.xlu0
        %v1282 = vpop.trf.xlu0
        %v1283 = vpop.trf.xlu0
        %v1284 = vpop.trf.xlu0
        %v1285 = vpop.trf.xlu0
        %v1286 = vpop.trf.xlu0
        %v1287 = vpop.trf.xlu0
        %v1288 = vpop.trf.xlu0
        %v1289 = vpop.trf.xlu0
        %v1290 = vpop.trf.xlu0
        %v1291 = vpop.trf.xlu0
        %v1292 = vpop.trf.xlu0
        %v1293 = vpop.trf.xlu0
        %v1294 = vpop.trf.xlu0
        %v1295 = vpop.trf.xlu0
        %v1297 = vsel %vm956, %v1280, 0
        %v1300 = vsel %vm956, %v1281, 0
        %1302 = vmatprep.subr.mxu0 0.0
        %1303 = vmatpush1.msra.mxu0 0.0
        %1304 = vmatprep.subr.mxu0 0.0
        %1305 = vmatpush1.msra.mxu0 0.0
        %1306 = vmatprep.subr.mxu0 0.0
        %1307 = vmatpush1.msra.mxu0 0.0
        %1308 = vmatprep.subr.mxu0 0.0
        %1309 = vmatpush1.msra.mxu0 0.0
        %1310 = vmatprep.subr.mxu0 0.0
        %1311 = vmatpush1.msra.mxu0 0.0
        %1312 = vmatprep.subr.mxu0 0.0
        %1313 = vmatpush1.msra.mxu0 0.0
        %1314 = vmatprep.subr.mxu0 0.0
        %1315 = vmatpush1.msra.mxu0 0.0
        %1316 = vmatprep.subr.mxu0 0.0
        %1317 = vmatpush1.msra.mxu0 0.0
        %1318 = vmatprep.subr.mxu0 0.0
        %1319 = vmatpush1.msra.mxu0 0.0
        %1320 = vmatprep.subr.mxu0 0.0
        %1321 = vmatpush1.msra.mxu0 0.0
        %1322 = vmatprep.subr.mxu0 0.0
        %1323 = vmatpush1.msra.mxu0 0.0
        %1324 = vmatprep.subr.mxu0 0.0
        %1325 = vmatpush1.msra.mxu0 0.0
        %1326 = vmatprep.subr.mxu0 0.0
        %1327 = vmatpush1.msra.mxu0 0.0
        %1328 = vmatprep.subr.mxu0 0.0
        %1329 = vmatpush1.msra.mxu0 0.0
        %1330 = vmatprep.subr.mxu0 0.0
        %1331 = vmatpush1.msra.mxu0 0.0
        %1332 = vmatprep.subr.mxu0 0.0
        %1333 = vmatpush1.msra.mxu0 %v901
        %1334 = vmatprep.subr.mxu0 0.0
        %1335 = vmatpush2.msra.mxu0 0.0
        %1336 = vmatprep.subr.mxu0 0.0
        %1337 = vmatpush2.msra.mxu0 0.0
        %1338 = vmatprep.subr.mxu0 0.0
        %1339 = vmatpush2.msra.mxu0 0.0
        %1340 = vmatprep.subr.mxu0 0.0
        %1341 = vmatpush2.msra.mxu0 0.0
        %1342 = vmatprep.subr.mxu0 0.0
        %1343 = vmatpush2.msra.mxu0 0.0
        %1344 = vmatprep.subr.mxu0 0.0
        %1345 = vmatpush2.msra.mxu0 0.0
        %1346 = vmatprep.subr.mxu0 0.0
        %1347 = vmatpush2.msra.mxu0 0.0
        %1348 = vmatprep.subr.mxu0 0.0
        %1349 = vmatpush2.msra.mxu0 0.0
        %1350 = vmatprep.subr.mxu0 0.0
        %1351 = vmatpush2.msra.mxu0 0.0
        %1352 = vmatprep.subr.mxu0 0.0
        %1353 = vmatpush2.msra.mxu0 0.0
        %1354 = vmatprep.subr.mxu0 0.0
        %1355 = vmatpush2.msra.mxu0 0.0
        %1356 = vmatprep.subr.mxu0 0.0
        %1357 = vmatpush2.msra.mxu0 0.0
        %1358 = vmatprep.subr.mxu0 0.0
        %1359 = vmatpush2.msra.mxu0 0.0
        %1360 = vmatprep.subr.mxu0 0.0
        %1361 = vmatpush2.msra.mxu0 0.0
        %1362 = vmatprep.subr.mxu0 0.0
        %1363 = vmatpush2.msra.mxu0 0.0
        %1364 = vmatprep.subr.mxu0 0.0
        %1365 = vmatpush2.msra.mxu0 0.0
        %1366 = vmatprep.mubr.f32.mxu0 0.0
        %1367 = vmatmul.mubr.f32.gmra.mxu0 %v1297
        %v1368 = vpop.f32.mrf.mxu0
        %v1369 = vadd.f32 0.0, %v1368
        %v1370 = vpop.f32.mrf.mxu0
        %1371 = vmatprep.mubr.f32.mxu0 0.0
        %1372 = vmatmul.mubr.f32.gmra.mxu0 %v1300
        %v1373 = vpop.f32.mrf.mxu0
        %v1374 = vadd.f32 0.0, %v1373
        %v1375 = vpop.f32.mrf.mxu0
        %1376 = vdwg.mxu0
        %v1377 = vmul.f32 %v1030, 0.35355338
        %v1378 = vmul.f32 %v1035, 0.35355338
        %v1379 = vmul.f32 %v1143, 0.35355338
        %v1380 = vmul.f32 %v1148, 0.35355338
        %v1381 = vmul.f32 %v1256, 0.35355338
        %v1382 = vmul.f32 %v1261, 0.35355338
        %v1383 = vmul.f32 %v1369, 0.35355338
        %v1384 = vmul.f32 %v1374, 0.35355338
        %v1385 = vsel %vm956, %v1377, -inf
        %1386 = vmax.xlane.f32.xlu0 %v1385
        %v1387 = vpop.xlane.xlu0 %1386
        %v1388 = vsel %vm956, %v1378, -inf
        %1389 = vmax.xlane.f32.xlu0 %v1388
        %v1390 = vpop.xlane.xlu0 %1389
        %v1391 = vsel %vm956, %v1379, -inf
        %1392 = vmax.xlane.f32.xlu0 %v1391
        %v1393 = vpop.xlane.xlu0 %1392
        %v1394 = vsel %vm956, %v1380, -inf
        %1395 = vmax.xlane.f32.xlu0 %v1394
        %v1396 = vpop.xlane.xlu0 %1395
        %v1397 = vsel %vm956, %v1381, -inf
        %1398 = vmax.xlane.f32.xlu0 %v1397
        %v1399 = vpop.xlane.xlu0 %1398
        %v1400 = vsel %vm956, %v1382, -inf
        %1401 = vmax.xlane.f32.xlu0 %v1400
        %v1402 = vpop.xlane.xlu0 %1401
        %v1403 = vsel %vm956, %v1383, -inf
        %1404 = vmax.xlane.f32.xlu0 %v1403
        %v1405 = vpop.xlane.xlu0 %1404
        %v1406 = vsel %vm956, %v1384, -inf
        %1407 = vmax.xlane.f32.xlu0 %v1406
        %v1408 = vpop.xlane.xlu0 %1407
        %v1409 = vsub.f32 %v1377, %v1387
        %v1410 = vsub.f32 %v1378, %v1390
        %v1411 = vsub.f32 %v1379, %v1393
        %v1412 = vsub.f32 %v1380, %v1396
        %v1413 = vsub.f32 %v1381, %v1399
        %v1414 = vsub.f32 %v1382, %v1402
        %v1415 = vsub.f32 %v1383, %v1405
        %v1416 = vsub.f32 %v1384, %v1408
        %v1417 = vmul.f32 %v1409, 1.442695
        %v1418 = vpow.pop %v1417
        %v1419 = vmul.f32 %v1410, 1.442695
        %v1420 = vpow.pop %v1419
        %v1421 = vmul.f32 %v1411, 1.442695
        %v1422 = vpow.pop %v1421
        %v1423 = vmul.f32 %v1412, 1.442695
        %v1424 = vpow.pop %v1423
        %v1425 = vmul.f32 %v1413, 1.442695
        %v1426 = vpow.pop %v1425
        %v1427 = vmul.f32 %v1414, 1.442695
        %v1428 = vpow.pop %v1427
        %v1429 = vmul.f32 %v1415, 1.442695
        %v1430 = vpow.pop %v1429
        %v1431 = vmul.f32 %v1416, 1.442695
        %v1432 = vpow.pop %v1431
        %v1433 = vsel %vm956, %v1418, 0.0
        %1434 = vadd.xlane.f32.xlu0 %v1433
        %v1435 = vpop.xlane.xlu0 %1434
        %v1436 = vsel %vm956, %v1420, 0.0
        %1437 = vadd.xlane.f32.xlu0 %v1436
        %v1438 = vpop.xlane.xlu0 %1437
        %v1439 = vsel %vm956, %v1422, 0.0
        %1440 = vadd.xlane.f32.xlu0 %v1439
        %v1441 = vpop.xlane.xlu0 %1440
        %v1442 = vsel %vm956, %v1424, 0.0
        %1443 = vadd.xlane.f32.xlu0 %v1442
        %v1444 = vpop.xlane.xlu0 %1443
        %v1445 = vsel %vm956, %v1426, 0.0
        %1446 = vadd.xlane.f32.xlu0 %v1445
        %v1447 = vpop.xlane.xlu0 %1446
        %v1448 = vsel %vm956, %v1428, 0.0
        %1449 = vadd.xlane.f32.xlu0 %v1448
        %v1450 = vpop.xlane.xlu0 %1449
        %v1451 = vsel %vm956, %v1430, 0.0
        %1452 = vadd.xlane.f32.xlu0 %v1451
        %v1453 = vpop.xlane.xlu0 %1452
        %v1454 = vsel %vm956, %v1432, 0.0
        %1455 = vadd.xlane.f32.xlu0 %v1454
        %v1456 = vpop.xlane.xlu0 %1455
        %v1457 = vrcp.pop %v1435
        %v1458 = vrcp.pop %v1438
        %v1459 = vrcp.pop %v1441
        %v1460 = vrcp.pop %v1444
        %v1461 = vrcp.pop %v1447
        %v1462 = vrcp.pop %v1450
        %v1463 = vrcp.pop %v1453
        %v1464 = vrcp.pop %v1456
        %v1465 = vmul.f32 %v1418, %v1457
        %v1466 = vmul.f32 %v1420, %v1458
        %v1467 = vmul.f32 %v1422, %v1459
        %v1468 = vmul.f32 %v1424, %v1460
        %v1469 = vmul.f32 %v1426, %v1461
        %v1470 = vmul.f32 %v1428, %v1462
        %v1471 = vmul.f32 %v1430, %v1463
        %v1472 = vmul.f32 %v1432, %v1464
        %1473 = vst.msk [vmem:[%s548] sm:$0xff] %vm956, %v1465
        %1474 = vst.msk [vmem:[%s548 + $0x8] sm:$0xff] %vm956, %v1466
        %1475 = vst.msk [vmem:[%s548 + $0x10] sm:$0xff] %vm956, %v1467
        %1476 = vst.msk [vmem:[%s548 + $0x18] sm:$0xff] %vm956, %v1468
        %1477 = vst.msk [vmem:[%s548 + $0x20] sm:$0xff] %vm956, %v1469
        %1478 = vst.msk [vmem:[%s548 + $0x28] sm:$0xff] %vm956, %v1470
        %1479 = vst.msk [vmem:[%s548 + $0x30] sm:$0xff] %vm956, %v1471
        %1480 = vst.msk [vmem:[%s548 + $0x38] sm:$0xff] %vm956, %v1472
        %v1482 = vsel %vm956, %v906, 0
        %v1485 = vsel %vm956, %v1465, 0
        %v1488 = vsel %vm956, %v1466, 0
        %1490 = vmatprep.subr.mxu0 0.0
        %1491 = vmatpush1.xpose.msra.mxu0 0.0
        %1492 = vmatprep.subr.mxu0 0.0
        %1493 = vmatpush1.xpose.msra.mxu0 0.0
        %1494 = vmatprep.subr.mxu0 0.0
        %1495 = vmatpush1.xpose.msra.mxu0 0.0
        %1496 = vmatprep.subr.mxu0 0.0
        %1497 = vmatpush1.xpose.msra.mxu0 0.0
        %1498 = vmatprep.subr.mxu0 0.0
        %1499 = vmatpush1.xpose.msra.mxu0 0.0
        %1500 = vmatprep.subr.mxu0 0.0
        %1501 = vmatpush1.xpose.msra.mxu0 0.0
        %1502 = vmatprep.subr.mxu0 0.0
        %1503 = vmatpush1.xpose.msra.mxu0 0.0
        %1504 = vmatprep.subr.mxu0 0.0
        %1505 = vmatpush1.xpose.msra.mxu0 0.0
        %1506 = vmatprep.subr.mxu0 0.0
        %1507 = vmatpush1.xpose.msra.mxu0 0.0
        %1508 = vmatprep.subr.mxu0 0.0
        %1509 = vmatpush1.xpose.msra.mxu0 0.0
        %1510 = vmatprep.subr.mxu0 0.0
        %1511 = vmatpush1.xpose.msra.mxu0 0.0
        %1512 = vmatprep.subr.mxu0 0.0
        %1513 = vmatpush1.xpose.msra.mxu0 0.0
        %1514 = vmatprep.subr.mxu0 0.0
        %1515 = vmatpush1.xpose.msra.mxu0 0.0
        %1516 = vmatprep.subr.mxu0 0.0
        %1517 = vmatpush1.xpose.msra.mxu0 0.0
        %1518 = vmatprep.subr.mxu0 0.0
        %1519 = vmatpush1.xpose.msra.mxu0 %v1488
        %1520 = vmatprep.subr.mxu0 0.0
        %1521 = vmatpush1.xpose.msra.mxu0 %v1485
        %1522 = vmatprep.subr.mxu0 0.0
        %1523 = vmatpush2.xpose.msra.mxu0 0.0
        %1524 = vmatprep.subr.mxu0 0.0
        %1525 = vmatpush2.xpose.msra.mxu0 0.0
        %1526 = vmatprep.subr.mxu0 0.0
        %1527 = vmatpush2.xpose.msra.mxu0 0.0
        %1528 = vmatprep.subr.mxu0 0.0
        %1529 = vmatpush2.xpose.msra.mxu0 0.0
        %1530 = vmatprep.subr.mxu0 0.0
        %1531 = vmatpush2.xpose.msra.mxu0 0.0
        %1532 = vmatprep.subr.mxu0 0.0
        %1533 = vmatpush2.xpose.msra.mxu0 0.0
        %1534 = vmatprep.subr.mxu0 0.0
        %1535 = vmatpush2.xpose.msra.mxu0 0.0
        %1536 = vmatprep.subr.mxu0 0.0
        %1537 = vmatpush2.xpose.msra.mxu0 0.0
        %1538 = vmatprep.subr.mxu0 0.0
        %1539 = vmatpush2.xpose.msra.mxu0 0.0
        %1540 = vmatprep.subr.mxu0 0.0
        %1541 = vmatpush2.xpose.msra.mxu0 0.0
        %1542 = vmatprep.subr.mxu0 0.0
        %1543 = vmatpush2.xpose.msra.mxu0 0.0
        %1544 = vmatprep.subr.mxu0 0.0
        %1545 = vmatpush2.xpose.msra.mxu0 0.0
        %1546 = vmatprep.subr.mxu0 0.0
        %1547 = vmatpush2.xpose.msra.mxu0 0.0
        %1548 = vmatprep.subr.mxu0 0.0
        %1549 = vmatpush2.xpose.msra.mxu0 0.0
        %1550 = vmatprep.subr.mxu0 0.0
        %1551 = vmatpush2.xpose.msra.mxu0 0.0
        %1552 = vmatprep.subr.mxu0 0.0
        %1553 = vmatpush2.xpose.msra.mxu0 0.0
        %1554 = vmatprep.mubr.f32.mxu0 0.0
        %1555 = vmatmul.mubr.f32.gmra.mxu0 %v1482
        %v1556 = vpop.f32.mrf.mxu0
        %v1557 = vadd.f32 0.0, %v1556
        %v1558 = vpop.f32.mrf.mxu0
        %1559 = vdwg.mxu0
        %v1561 = vsel %vm956, %v911, 0
        %v1564 = vsel %vm956, %v1467, 0
        %v1567 = vsel %vm956, %v1468, 0
        %1569 = vmatprep.subr.mxu0 0.0
        %1570 = vmatpush1.xpose.msra.mxu0 0.0
        %1571 = vmatprep.subr.mxu0 0.0
        %1572 = vmatpush1.xpose.msra.mxu0 0.0
        %1573 = vmatprep.subr.mxu0 0.0
        %1574 = vmatpush1.xpose.msra.mxu0 0.0
        %1575 = vmatprep.subr.mxu0 0.0
        %1576 = vmatpush1.xpose.msra.mxu0 0.0
        %1577 = vmatprep.subr.mxu0 0.0
        %1578 = vmatpush1.xpose.msra.mxu0 0.0
        %1579 = vmatprep.subr.mxu0 0.0
        %1580 = vmatpush1.xpose.msra.mxu0 0.0
        %1581 = vmatprep.subr.mxu0 0.0
        %1582 = vmatpush1.xpose.msra.mxu0 0.0
        %1583 = vmatprep.subr.mxu0 0.0
        %1584 = vmatpush1.xpose.msra.mxu0 0.0
        %1585 = vmatprep.subr.mxu0 0.0
        %1586 = vmatpush1.xpose.msra.mxu0 0.0
        %1587 = vmatprep.subr.mxu0 0.0
        %1588 = vmatpush1.xpose.msra.mxu0 0.0
        %1589 = vmatprep.subr.mxu0 0.0
        %1590 = vmatpush1.xpose.msra.mxu0 0.0
        %1591 = vmatprep.subr.mxu0 0.0
        %1592 = vmatpush1.xpose.msra.mxu0 0.0
        %1593 = vmatprep.subr.mxu0 0.0
        %1594 = vmatpush1.xpose.msra.mxu0 0.0
        %1595 = vmatprep.subr.mxu0 0.0
        %1596 = vmatpush1.xpose.msra.mxu0 0.0
        %1597 = vmatprep.subr.mxu0 0.0
        %1598 = vmatpush1.xpose.msra.mxu0 %v1567
        %1599 = vmatprep.subr.mxu0 0.0
        %1600 = vmatpush1.xpose.msra.mxu0 %v1564
        %1601 = vmatprep.subr.mxu0 0.0
        %1602 = vmatpush2.xpose.msra.mxu0 0.0
        %1603 = vmatprep.subr.mxu0 0.0
        %1604 = vmatpush2.xpose.msra.mxu0 0.0
        %1605 = vmatprep.subr.mxu0 0.0
        %1606 = vmatpush2.xpose.msra.mxu0 0.0
        %1607 = vmatprep.subr.mxu0 0.0
        %1608 = vmatpush2.xpose.msra.mxu0 0.0
        %1609 = vmatprep.subr.mxu0 0.0
        %1610 = vmatpush2.xpose.msra.mxu0 0.0
        %1611 = vmatprep.subr.mxu0 0.0
        %1612 = vmatpush2.xpose.msra.mxu0 0.0
        %1613 = vmatprep.subr.mxu0 0.0
        %1614 = vmatpush2.xpose.msra.mxu0 0.0
        %1615 = vmatprep.subr.mxu0 0.0
        %1616 = vmatpush2.xpose.msra.mxu0 0.0
        %1617 = vmatprep.subr.mxu0 0.0
        %1618 = vmatpush2.xpose.msra.mxu0 0.0
        %1619 = vmatprep.subr.mxu0 0.0
        %1620 = vmatpush2.xpose.msra.mxu0 0.0
        %1621 = vmatprep.subr.mxu0 0.0
        %1622 = vmatpush2.xpose.msra.mxu0 0.0
        %1623 = vmatprep.subr.mxu0 0.0
        %1624 = vmatpush2.xpose.msra.mxu0 0.0
        %1625 = vmatprep.subr.mxu0 0.0
        %1626 = vmatpush2.xpose.msra.mxu0 0.0
        %1627 = vmatprep.subr.mxu0 0.0
        %1628 = vmatpush2.xpose.msra.mxu0 0.0
        %1629 = vmatprep.subr.mxu0 0.0
        %1630 = vmatpush2.xpose.msra.mxu0 0.0
        %1631 = vmatprep.subr.mxu0 0.0
        %1632 = vmatpush2.xpose.msra.mxu0 0.0
        %1633 = vmatprep.mubr.f32.mxu0 0.0
        %1634 = vmatmul.mubr.f32.gmra.mxu0 %v1561
        %v1635 = vpop.f32.mrf.mxu0
        %v1636 = vadd.f32 0.0, %v1635
        %v1637 = vpop.f32.mrf.mxu0
        %1638 = vdwg.mxu0
        %v1640 = vsel %vm956, %v916, 0
        %v1643 = vsel %vm956, %v1469, 0
        %v1646 = vsel %vm956, %v1470, 0
        %1648 = vmatprep.subr.mxu0 0.0
        %1649 = vmatpush1.xpose.msra.mxu0 0.0
        %1650 = vmatprep.subr.mxu0 0.0
        %1651 = vmatpush1.xpose.msra.mxu0 0.0
        %1652 = vmatprep.subr.mxu0 0.0
        %1653 = vmatpush1.xpose.msra.mxu0 0.0
        %1654 = vmatprep.subr.mxu0 0.0
        %1655 = vmatpush1.xpose.msra.mxu0 0.0
        %1656 = vmatprep.subr.mxu0 0.0
        %1657 = vmatpush1.xpose.msra.mxu0 0.0
        %1658 = vmatprep.subr.mxu0 0.0
        %1659 = vmatpush1.xpose.msra.mxu0 0.0
        %1660 = vmatprep.subr.mxu0 0.0
        %1661 = vmatpush1.xpose.msra.mxu0 0.0
        %1662 = vmatprep.subr.mxu0 0.0
        %1663 = vmatpush1.xpose.msra.mxu0 0.0
        %1664 = vmatprep.subr.mxu0 0.0
        %1665 = vmatpush1.xpose.msra.mxu0 0.0
        %1666 = vmatprep.subr.mxu0 0.0
        %1667 = vmatpush1.xpose.msra.mxu0 0.0
        %1668 = vmatprep.subr.mxu0 0.0
        %1669 = vmatpush1.xpose.msra.mxu0 0.0
        %1670 = vmatprep.subr.mxu0 0.0
        %1671 = vmatpush1.xpose.msra.mxu0 0.0
        %1672 = vmatprep.subr.mxu0 0.0
        %1673 = vmatpush1.xpose.msra.mxu0 0.0
        %1674 = vmatprep.subr.mxu0 0.0
        %1675 = vmatpush1.xpose.msra.mxu0 0.0
        %1676 = vmatprep.subr.mxu0 0.0
        %1677 = vmatpush1.xpose.msra.mxu0 %v1646
        %1678 = vmatprep.subr.mxu0 0.0
        %1679 = vmatpush1.xpose.msra.mxu0 %v1643
        %1680 = vmatprep.subr.mxu0 0.0
        %1681 = vmatpush2.xpose.msra.mxu0 0.0
        %1682 = vmatprep.subr.mxu0 0.0
        %1683 = vmatpush2.xpose.msra.mxu0 0.0
        %1684 = vmatprep.subr.mxu0 0.0
        %1685 = vmatpush2.xpose.msra.mxu0 0.0
        %1686 = vmatprep.subr.mxu0 0.0
        %1687 = vmatpush2.xpose.msra.mxu0 0.0
        %1688 = vmatprep.subr.mxu0 0.0
        %1689 = vmatpush2.xpose.msra.mxu0 0.0
        %1690 = vmatprep.subr.mxu0 0.0
        %1691 = vmatpush2.xpose.msra.mxu0 0.0
        %1692 = vmatprep.subr.mxu0 0.0
        %1693 = vmatpush2.xpose.msra.mxu0 0.0
        %1694 = vmatprep.subr.mxu0 0.0
        %1695 = vmatpush2.xpose.msra.mxu0 0.0
        %1696 = vmatprep.subr.mxu0 0.0
        %1697 = vmatpush2.xpose.msra.mxu0 0.0
        %1698 = vmatprep.subr.mxu0 0.0
        %1699 = vmatpush2.xpose.msra.mxu0 0.0
        %1700 = vmatprep.subr.mxu0 0.0
        %1701 = vmatpush2.xpose.msra.mxu0 0.0
        %1702 = vmatprep.subr.mxu0 0.0
        %1703 = vmatpush2.xpose.msra.mxu0 0.0
        %1704 = vmatprep.subr.mxu0 0.0
        %1705 = vmatpush2.xpose.msra.mxu0 0.0
        %1706 = vmatprep.subr.mxu0 0.0
        %1707 = vmatpush2.xpose.msra.mxu0 0.0
        %1708 = vmatprep.subr.mxu0 0.0
        %1709 = vmatpush2.xpose.msra.mxu0 0.0
        %1710 = vmatprep.subr.mxu0 0.0
        %1711 = vmatpush2.xpose.msra.mxu0 0.0
        %1712 = vmatprep.mubr.f32.mxu0 0.0
        %1713 = vmatmul.mubr.f32.gmra.mxu0 %v1640
        %v1714 = vpop.f32.mrf.mxu0
        %v1715 = vadd.f32 0.0, %v1714
        %v1716 = vpop.f32.mrf.mxu0
        %1717 = vdwg.mxu0
        %v1719 = vsel %vm956, %v921, 0
        %v1722 = vsel %vm956, %v1471, 0
        %v1725 = vsel %vm956, %v1472, 0
        %1727 = vmatprep.subr.mxu0 0.0
        %1728 = vmatpush1.xpose.msra.mxu0 0.0
        %1729 = vmatprep.subr.mxu0 0.0
        %1730 = vmatpush1.xpose.msra.mxu0 0.0
        %1731 = vmatprep.subr.mxu0 0.0
        %1732 = vmatpush1.xpose.msra.mxu0 0.0
        %1733 = vmatprep.subr.mxu0 0.0
        %1734 = vmatpush1.xpose.msra.mxu0 0.0
        %1735 = vmatprep.subr.mxu0 0.0
        %1736 = vmatpush1.xpose.msra.mxu0 0.0
        %1737 = vmatprep.subr.mxu0 0.0
        %1738 = vmatpush1.xpose.msra.mxu0 0.0
        %1739 = vmatprep.subr.mxu0 0.0
        %1740 = vmatpush1.xpose.msra.mxu0 0.0
        %1741 = vmatprep.subr.mxu0 0.0
        %1742 = vmatpush1.xpose.msra.mxu0 0.0
        %1743 = vmatprep.subr.mxu0 0.0
        %1744 = vmatpush1.xpose.msra.mxu0 0.0
        %1745 = vmatprep.subr.mxu0 0.0
        %1746 = vmatpush1.xpose.msra.mxu0 0.0
        %1747 = vmatprep.subr.mxu0 0.0
        %1748 = vmatpush1.xpose.msra.mxu0 0.0
        %1749 = vmatprep.subr.mxu0 0.0
        %1750 = vmatpush1.xpose.msra.mxu0 0.0
        %1751 = vmatprep.subr.mxu0 0.0
        %1752 = vmatpush1.xpose.msra.mxu0 0.0
        %1753 = vmatprep.subr.mxu0 0.0
        %1754 = vmatpush1.xpose.msra.mxu0 0.0
        %1755 = vmatprep.subr.mxu0 0.0
        %1756 = vmatpush1.xpose.msra.mxu0 %v1725
        %1757 = vmatprep.subr.mxu0 0.0
        %1758 = vmatpush1.xpose.msra.mxu0 %v1722
        %1759 = vmatprep.subr.mxu0 0.0
        %1760 = vmatpush2.xpose.msra.mxu0 0.0
        %1761 = vmatprep.subr.mxu0 0.0
        %1762 = vmatpush2.xpose.msra.mxu0 0.0
        %1763 = vmatprep.subr.mxu0 0.0
        %1764 = vmatpush2.xpose.msra.mxu0 0.0
        %1765 = vmatprep.subr.mxu0 0.0
        %1766 = vmatpush2.xpose.msra.mxu0 0.0
        %1767 = vmatprep.subr.mxu0 0.0
        %1768 = vmatpush2.xpose.msra.mxu0 0.0
        %1769 = vmatprep.subr.mxu0 0.0
        %1770 = vmatpush2.xpose.msra.mxu0 0.0
        %1771 = vmatprep.subr.mxu0 0.0
        %1772 = vmatpush2.xpose.msra.mxu0 0.0
        %1773 = vmatprep.subr.mxu0 0.0
        %1774 = vmatpush2.xpose.msra.mxu0 0.0
        %1775 = vmatprep.subr.mxu0 0.0
        %1776 = vmatpush2.xpose.msra.mxu0 0.0
        %1777 = vmatprep.subr.mxu0 0.0
        %1778 = vmatpush2.xpose.msra.mxu0 0.0
        %1779 = vmatprep.subr.mxu0 0.0
        %1780 = vmatpush2.xpose.msra.mxu0 0.0
        %1781 = vmatprep.subr.mxu0 0.0
        %1782 = vmatpush2.xpose.msra.mxu0 0.0
        %1783 = vmatprep.subr.mxu0 0.0
        %1784 = vmatpush2.xpose.msra.mxu0 0.0
        %1785 = vmatprep.subr.mxu0 0.0
        %1786 = vmatpush2.xpose.msra.mxu0 0.0
        %1787 = vmatprep.subr.mxu0 0.0
        %1788 = vmatpush2.xpose.msra.mxu0 0.0
        %1789 = vmatprep.subr.mxu0 0.0
        %1790 = vmatpush2.xpose.msra.mxu0 0.0
        %1791 = vmatprep.mubr.f32.mxu0 0.0
        %1792 = vmatmul.mubr.f32.gmra.mxu0 %v1719
        %v1793 = vpop.f32.mrf.mxu0
        %v1794 = vadd.f32 0.0, %v1793
        %v1795 = vpop.f32.mrf.mxu0
        %1796 = vdwg.mxu0
        %v1797 = vld [vmem:[%s7] sm:$0xff]
        %v1798 = vld [vmem:[%s7 + $0x8] sm:$0xff]
        %v1799 = vld [vmem:[%s7 + $0x10] sm:$0xff]
        %v1800 = vld [vmem:[%s7 + $0x18] sm:$0xff]
        %v1802 = vsel %vm689, %v1797, 0
        %v1805 = vsel %vm689, %v1798, 0
        %v1808 = vsel %vm689, %v1799, 0
        %v1811 = vsel %vm689, %v1800, 0
        %1813 = vmatprep.subr.mxu0 0.0
        %1814 = vmatpush1.msra.mxu0 0.0
        %1815 = vmatprep.subr.mxu0 0.0
        %1816 = vmatpush1.msra.mxu0 0.0
        %1817 = vmatprep.subr.mxu0 0.0
        %1818 = vmatpush1.msra.mxu0 0.0
        %1819 = vmatprep.subr.mxu0 0.0
        %1820 = vmatpush1.msra.mxu0 0.0
        %1821 = vmatprep.subr.mxu0 0.0
        %1822 = vmatpush1.msra.mxu0 0.0
        %1823 = vmatprep.subr.mxu0 0.0
        %1824 = vmatpush1.msra.mxu0 0.0
        %1825 = vmatprep.subr.mxu0 0.0
        %1826 = vmatpush1.msra.mxu0 0.0
        %1827 = vmatprep.subr.mxu0 0.0
        %1828 = vmatpush1.msra.mxu0 0.0
        %1829 = vmatprep.subr.mxu0 0.0
        %1830 = vmatpush1.msra.mxu0 0.0
        %1831 = vmatprep.subr.mxu0 0.0
        %1832 = vmatpush1.msra.mxu0 0.0
        %1833 = vmatprep.subr.mxu0 0.0
        %1834 = vmatpush1.msra.mxu0 0.0
        %1835 = vmatprep.subr.mxu0 0.0
        %1836 = vmatpush1.msra.mxu0 0.0
        %1837 = vmatprep.subr.mxu0 0.0
        %1838 = vmatpush1.msra.mxu0 %v1794
        %1839 = vmatprep.subr.mxu0 0.0
        %1840 = vmatpush1.msra.mxu0 %v1715
        %1841 = vmatprep.subr.mxu0 0.0
        %1842 = vmatpush1.msra.mxu0 %v1636
        %1843 = vmatprep.subr.mxu0 0.0
        %1844 = vmatpush1.msra.mxu0 %v1557
        %1845 = vmatprep.subr.mxu0 0.0
        %1846 = vmatpush2.msra.mxu0 0.0
        %1847 = vmatprep.subr.mxu0 0.0
        %1848 = vmatpush2.msra.mxu0 0.0
        %1849 = vmatprep.subr.mxu0 0.0
        %1850 = vmatpush2.msra.mxu0 0.0
        %1851 = vmatprep.subr.mxu0 0.0
        %1852 = vmatpush2.msra.mxu0 0.0
        %1853 = vmatprep.subr.mxu0 0.0
        %1854 = vmatpush2.msra.mxu0 0.0
        %1855 = vmatprep.subr.mxu0 0.0
        %1856 = vmatpush2.msra.mxu0 0.0
        %1857 = vmatprep.subr.mxu0 0.0
        %1858 = vmatpush2.msra.mxu0 0.0
        %1859 = vmatprep.subr.mxu0 0.0
        %1860 = vmatpush2.msra.mxu0 0.0
        %1861 = vmatprep.subr.mxu0 0.0
        %1862 = vmatpush2.msra.mxu0 0.0
        %1863 = vmatprep.subr.mxu0 0.0
        %1864 = vmatpush2.msra.mxu0 0.0
        %1865 = vmatprep.subr.mxu0 0.0
        %1866 = vmatpush2.msra.mxu0 0.0
        %1867 = vmatprep.subr.mxu0 0.0
        %1868 = vmatpush2.msra.mxu0 0.0
        %1869 = vmatprep.subr.mxu0 0.0
        %1870 = vmatpush2.msra.mxu0 0.0
        %1871 = vmatprep.subr.mxu0 0.0
        %1872 = vmatpush2.msra.mxu0 0.0
        %1873 = vmatprep.subr.mxu0 0.0
        %1874 = vmatpush2.msra.mxu0 0.0
        %1875 = vmatprep.subr.mxu0 0.0
        %1876 = vmatpush2.msra.mxu0 0.0
        %1877 = vmatprep.mubr.f32.mxu0 0.0
        %1878 = vmatmul.mubr.f32.gmra.mxu0 %v1802
        %v1879 = vpop.f32.mrf.mxu0
        %v1880 = vadd.f32 %v681, %v1879
        %v1881 = vpop.f32.mrf.mxu0
        %1882 = vmatprep.mubr.f32.mxu0 0.0
        %1883 = vmatmul.mubr.f32.gmra.mxu0 %v1805
        %v1884 = vpop.f32.mrf.mxu0
        %v1885 = vadd.f32 %v682, %v1884
        %v1886 = vpop.f32.mrf.mxu0
        %1887 = vmatprep.mubr.f32.mxu0 0.0
        %1888 = vmatmul.mubr.f32.gmra.mxu0 %v1808
        %v1889 = vpop.f32.mrf.mxu0
        %v1890 = vadd.f32 %v683, %v1889
        %v1891 = vpop.f32.mrf.mxu0
        %1892 = vmatprep.mubr.f32.mxu0 0.0
        %1893 = vmatmul.mubr.f32.gmra.mxu0 %v1811
        %v1894 = vpop.f32.mrf.mxu0
        %v1895 = vadd.f32 %v684, %v1894
        %v1896 = vpop.f32.mrf.mxu0
        %1897 = vdwg.mxu0
        %v1898 = vld [vmem:[%s9] sm:$0xff]
        %v1899 = vld [vmem:[%s9 + $0x8] sm:$0xff]
        %v1901 = vsel %vm585, %v1880, 0
        %v1904 = vsel %vm585, %v1885, 0
        %v1907 = vsel %vm585, %v1890, 0
        %v1910 = vsel %vm585, %v1895, 0
        %1912 = vmatprep.subr.mxu0 0.0
        %1913 = vmatpush1.msra.mxu0 0.0
        %1914 = vmatprep.subr.mxu0 0.0
        %1915 = vmatpush1.msra.mxu0 0.0
        %1916 = vmatprep.subr.mxu0 0.0
        %1917 = vmatpush1.msra.mxu0 0.0
        %1918 = vmatprep.subr.mxu0 0.0
        %1919 = vmatpush1.msra.mxu0 0.0
        %1920 = vmatprep.subr.mxu0 0.0
        %1921 = vmatpush1.msra.mxu0 0.0
        %1922 = vmatprep.subr.mxu0 0.0
        %1923 = vmatpush1.msra.mxu0 0.0
        %1924 = vmatprep.subr.mxu0 0.0
        %1925 = vmatpush1.msra.mxu0 0.0
        %1926 = vmatprep.subr.mxu0 0.0
        %1927 = vmatpush1.msra.mxu0 0.0
        %1928 = vmatprep.subr.mxu0 0.0
        %1929 = vmatpush1.msra.mxu0 0.0
        %1930 = vmatprep.subr.mxu0 0.0
        %1931 = vmatpush1.msra.mxu0 0.0
        %1932 = vmatprep.subr.mxu0 0.0
        %1933 = vmatpush1.msra.mxu0 0.0
        %1934 = vmatprep.subr.mxu0 0.0
        %1935 = vmatpush1.msra.mxu0 0.0
        %1936 = vmatprep.subr.mxu0 0.0
        %1937 = vmatpush1.msra.mxu0 0.0
        %1938 = vmatprep.subr.mxu0 0.0
        %1939 = vmatpush1.msra.mxu0 0.0
        %1940 = vmatprep.subr.mxu0 0.0
        %1941 = vmatpush1.msra.mxu0 %v1899
        %1942 = vmatprep.subr.mxu0 0.0
        %1943 = vmatpush1.msra.mxu0 %v1898
        %1944 = vmatprep.subr.mxu0 0.0
        %1945 = vmatpush2.msra.mxu0 0.0
        %1946 = vmatprep.subr.mxu0 0.0
        %1947 = vmatpush2.msra.mxu0 0.0
        %1948 = vmatprep.subr.mxu0 0.0
        %1949 = vmatpush2.msra.mxu0 0.0
        %1950 = vmatprep.subr.mxu0 0.0
        %1951 = vmatpush2.msra.mxu0 0.0
        %1952 = vmatprep.subr.mxu0 0.0
        %1953 = vmatpush2.msra.mxu0 0.0
        %1954 = vmatprep.subr.mxu0 0.0
        %1955 = vmatpush2.msra.mxu0 0.0
        %1956 = vmatprep.subr.mxu0 0.0
        %1957 = vmatpush2.msra.mxu0 0.0
        %1958 = vmatprep.subr.mxu0 0.0
        %1959 = vmatpush2.msra.mxu0 0.0
        %1960 = vmatprep.subr.mxu0 0.0
        %1961 = vmatpush2.msra.mxu0 0.0
        %1962 = vmatprep.subr.mxu0 0.0
        %1963 = vmatpush2.msra.mxu0 0.0
        %1964 = vmatprep.subr.mxu0 0.0
        %1965 = vmatpush2.msra.mxu0 0.0
        %1966 = vmatprep.subr.mxu0 0.0
        %1967 = vmatpush2.msra.mxu0 0.0
        %1968 = vmatprep.subr.mxu0 0.0
        %1969 = vmatpush2.msra.mxu0 0.0
        %1970 = vmatprep.subr.mxu0 0.0
        %1971 = vmatpush2.msra.mxu0 0.0
        %1972 = vmatprep.subr.mxu0 0.0
        %1973 = vmatpush2.msra.mxu0 0.0
        %1974 = vmatprep.subr.mxu0 0.0
        %1975 = vmatpush2.msra.mxu0 0.0
        %1976 = vmatprep.mubr.f32.mxu0 0.0
        %1977 = vmatmul.mubr.f32.gmra.mxu0 %v1901
        %v1978 = vpop.f32.mrf.mxu0
        %v1979 = vadd.f32 0.0, %v1978
        %v1980 = vpop.f32.mrf.mxu0
        %1981 = vmatprep.mubr.f32.mxu0 0.0
        %1982 = vmatmul.mubr.f32.gmra.mxu0 %v1904
        %v1983 = vpop.f32.mrf.mxu0
        %v1984 = vadd.f32 0.0, %v1983
        %v1985 = vpop.f32.mrf.mxu0
        %1986 = vmatprep.mubr.f32.mxu0 0.0
        %1987 = vmatmul.mubr.f32.gmra.mxu0 %v1907
        %v1988 = vpop.f32.mrf.mxu0
        %v1989 = vadd.f32 0.0, %v1988
        %v1990 = vpop.f32.mrf.mxu0
        %1991 = vmatprep.mubr.f32.mxu0 0.0
        %1992 = vmatmul.mubr.f32.gmra.mxu0 %v1910
        %v1993 = vpop.f32.mrf.mxu0
        %v1994 = vadd.f32 0.0, %v1993
        %v1995 = vpop.f32.mrf.mxu0
        %1996 = vdwg.mxu0
        %2001 = vrot.lane.b32.xlu0 %v1979, 112
        %v2002 = vpop.permute.xlu0 %2001
        %2003 = vrot.lane.b32.xlu0 %v1984, 112
        %v2004 = vpop.permute.xlu0 %2003
        %2005 = vrot.lane.b32.xlu0 %v1989, 112
        %v2006 = vpop.permute.xlu0 %2005
        %2007 = vrot.lane.b32.xlu0 %v1994, 112
        %v2008 = vpop.permute.xlu0 %2007
        %2013 = vrot.lane.b32.xlu0 %v1979, 96
        %v2014 = vpop.permute.xlu0 %2013
        %2015 = vrot.lane.b32.xlu0 %v1984, 96
        %v2016 = vpop.permute.xlu0 %2015
        %2017 = vrot.lane.b32.xlu0 %v1989, 96
        %v2018 = vpop.permute.xlu0 %2017
        %2019 = vrot.lane.b32.xlu0 %v1994, 96
        %v2020 = vpop.permute.xlu0 %2019
        %v2025 = vld [vmem:[%s8] sm:$0xff]
        %v2026 = vld [vmem:[%s8 + $0x8] sm:$0xff]
        %v2027 = vld [vmem:[%s8 + $0x10] sm:$0xff]
        %v2028 = vld [vmem:[%s8 + $0x18] sm:$0xff]
        %v2029 = vld [vmem:[%s8 + $0x20] sm:$0xff]
        %v2030 = vld [vmem:[%s8 + $0x28] sm:$0xff]
        %v2031 = vld [vmem:[%s8 + $0x30] sm:$0xff]
        %v2032 = vld [vmem:[%s8 + $0x38] sm:$0xff]
        %vm2033 = vcmask 785408
        %v2035 = vsel %vm2033, %v2025, 0
        %v2038 = vsel %vm2033, %v2026, 0
        %v2041 = vsel %vm2033, %v2027, 0
        %v2044 = vsel %vm2033, %v2028, 0
        %v2047 = vsel %vm2033, %v2029, 0
        %v2050 = vsel %vm2033, %v2030, 0
        %v2053 = vsel %vm2033, %v2031, 0
        %v2056 = vsel %vm2033, %v2032, 0
        %2058 = vmatprep.subr.mxu0 0.0
        %2059 = vmatpush1.msra.mxu0 0.0
        %2060 = vmatprep.subr.mxu0 0.0
        %2061 = vmatpush1.msra.mxu0 0.0
        %2062 = vmatprep.subr.mxu0 0.0
        %2063 = vmatpush1.msra.mxu0 0.0
        %2064 = vmatprep.subr.mxu0 0.0
        %2065 = vmatpush1.msra.mxu0 0.0
        %2066 = vmatprep.subr.mxu0 0.0
        %2067 = vmatpush1.msra.mxu0 %v2020
        %2068 = vmatprep.subr.mxu0 0.0
        %2069 = vmatpush1.msra.mxu0 %v2018
        %2070 = vmatprep.subr.mxu0 0.0
        %2071 = vmatpush1.msra.mxu0 %v2016
        %2072 = vmatprep.subr.mxu0 0.0
        %2073 = vmatpush1.msra.mxu0 %v2014
        %2074 = vmatprep.subr.mxu0 0.0
        %2075 = vmatpush1.msra.mxu0 %v2008
        %2076 = vmatprep.subr.mxu0 0.0
        %2077 = vmatpush1.msra.mxu0 %v2006
        %2078 = vmatprep.subr.mxu0 0.0
        %2079 = vmatpush1.msra.mxu0 %v2004
        %2080 = vmatprep.subr.mxu0 0.0
        %2081 = vmatpush1.msra.mxu0 %v2002
        %2082 = vmatprep.subr.mxu0 0.0
        %2083 = vmatpush1.msra.mxu0 %v1994
        %2084 = vmatprep.subr.mxu0 0.0
        %2085 = vmatpush1.msra.mxu0 %v1989
        %2086 = vmatprep.subr.mxu0 0.0
        %2087 = vmatpush1.msra.mxu0 %v1984
        %2088 = vmatprep.subr.mxu0 0.0
        %2089 = vmatpush1.msra.mxu0 %v1979
        %2090 = vmatprep.subr.mxu0 0.0
        %2091 = vmatpush2.msra.mxu0 0.0
        %2092 = vmatprep.subr.mxu0 0.0
        %2093 = vmatpush2.msra.mxu0 0.0
        %2094 = vmatprep.subr.mxu0 0.0
        %2095 = vmatpush2.msra.mxu0 0.0
        %2096 = vmatprep.subr.mxu0 0.0
        %2097 = vmatpush2.msra.mxu0 0.0
        %2098 = vmatprep.subr.mxu0 0.0
        %2099 = vmatpush2.msra.mxu0 0.0
        %2100 = vmatprep.subr.mxu0 0.0
        %2101 = vmatpush2.msra.mxu0 0.0
        %2102 = vmatprep.subr.mxu0 0.0
        %2103 = vmatpush2.msra.mxu0 0.0
        %2104 = vmatprep.subr.mxu0 0.0
        %2105 = vmatpush2.msra.mxu0 0.0
        %2106 = vmatprep.subr.mxu0 0.0
        %2107 = vmatpush2.msra.mxu0 0.0
        %2108 = vmatprep.subr.mxu0 0.0
        %2109 = vmatpush2.msra.mxu0 0.0
        %2110 = vmatprep.subr.mxu0 0.0
        %2111 = vmatpush2.msra.mxu0 0.0
        %2112 = vmatprep.subr.mxu0 0.0
        %2113 = vmatpush2.msra.mxu0 0.0
        %2114 = vmatprep.subr.mxu0 0.0
        %2115 = vmatpush2.msra.mxu0 0.0
        %2116 = vmatprep.subr.mxu0 0.0
        %2117 = vmatpush2.msra.mxu0 0.0
        %2118 = vmatprep.subr.mxu0 0.0
        %2119 = vmatpush2.msra.mxu0 0.0
        %2120 = vmatprep.subr.mxu0 0.0
        %2121 = vmatpush2.msra.mxu0 0.0
        %2122 = vmatprep.mubr.f32.mxu0 0.0
        %2123 = vmatmul.mubr.f32.gmra.mxu0 %v2035
        %v2124 = vpop.f32.mrf.mxu0
        %v2125 = vadd.f32 0.0, %v2124
        %v2126 = vpop.f32.mrf.mxu0
        %2127 = vmatprep.mubr.f32.mxu0 0.0
        %2128 = vmatmul.mubr.f32.gmra.mxu0 %v2038
        %v2129 = vpop.f32.mrf.mxu0
        %v2130 = vadd.f32 0.0, %v2129
        %v2131 = vpop.f32.mrf.mxu0
        %2132 = vmatprep.mubr.f32.mxu0 0.0
        %2133 = vmatmul.mubr.f32.gmra.mxu0 %v2041
        %v2134 = vpop.f32.mrf.mxu0
        %v2135 = vadd.f32 0.0, %v2134
        %v2136 = vpop.f32.mrf.mxu0
        %2137 = vmatprep.mubr.f32.mxu0 0.0
        %2138 = vmatmul.mubr.f32.gmra.mxu0 %v2044
        %v2139 = vpop.f32.mrf.mxu0
        %v2140 = vadd.f32 0.0, %v2139
        %v2141 = vpop.f32.mrf.mxu0
        %2142 = vmatprep.mubr.f32.mxu0 0.0
        %2143 = vmatmul.mubr.f32.gmra.mxu0 %v2047
        %v2144 = vpop.f32.mrf.mxu0
        %v2145 = vadd.f32 0.0, %v2144
        %v2146 = vpop.f32.mrf.mxu0
        %2147 = vmatprep.mubr.f32.mxu0 0.0
        %2148 = vmatmul.mubr.f32.gmra.mxu0 %v2050
        %v2149 = vpop.f32.mrf.mxu0
        %v2150 = vadd.f32 0.0, %v2149
        %v2151 = vpop.f32.mrf.mxu0
        %2152 = vmatprep.mubr.f32.mxu0 0.0
        %2153 = vmatmul.mubr.f32.gmra.mxu0 %v2053
        %v2154 = vpop.f32.mrf.mxu0
        %v2155 = vadd.f32 0.0, %v2154
        %v2156 = vpop.f32.mrf.mxu0
        %2157 = vmatprep.mubr.f32.mxu0 0.0
        %2158 = vmatmul.mubr.f32.gmra.mxu0 %v2056
        %v2159 = vpop.f32.mrf.mxu0
        %v2160 = vadd.f32 0.0, %v2159
        %v2161 = vpop.f32.mrf.mxu0
        %2162 = vdwg.mxu0
        %v2163 = vld [vmem:[%s10] sm:$0xff]
        %v2164 = vld [vmem:[%s10 + $0x8] sm:$0xff]
        %v2165 = vld [vmem:[%s10 + $0x10] sm:$0xff]
        %v2166 = vld [vmem:[%s10 + $0x18] sm:$0xff]
        %v2167 = vld [vmem:[%s10 + $0x20] sm:$0xff]
        %v2168 = vld [vmem:[%s10 + $0x28] sm:$0xff]
        %v2169 = vld [vmem:[%s10 + $0x30] sm:$0xff]
        %v2170 = vld [vmem:[%s10 + $0x38] sm:$0xff]
        %v2171 = vld [vmem:[%s11] sm:$0xff]
        %v2172 = vld [vmem:[%s11 + $0x8] sm:$0xff]
        %v2173 = vld [vmem:[%s11 + $0x10] sm:$0xff]
        %v2174 = vld [vmem:[%s11 + $0x18] sm:$0xff]
        %v2175 = vld [vmem:[%s11 + $0x20] sm:$0xff]
        %v2176 = vld [vmem:[%s11 + $0x28] sm:$0xff]
        %v2177 = vld [vmem:[%s11 + $0x30] sm:$0xff]
        %v2178 = vld [vmem:[%s11 + $0x38] sm:$0xff]
        %v2179 = vsel %vm585, %v2125, 0.0
        %2180 = vadd.xlane.f32.xlu0 %v2179
        %v2181 = vpop.xlane.xlu0 %2180
        %v2182 = vsel %vm585, %v2130, 0.0
        %2183 = vadd.xlane.f32.xlu0 %v2182
        %v2184 = vpop.xlane.xlu0 %2183
        %v2185 = vsel %vm585, %v2135, 0.0
        %2186 = vadd.xlane.f32.xlu0 %v2185
        %v2187 = vpop.xlane.xlu0 %2186
        %v2188 = vsel %vm585, %v2140, 0.0
        %2189 = vadd.xlane.f32.xlu0 %v2188
        %v2190 = vpop.xlane.xlu0 %2189
        %v2191 = vsel %vm585, %v2145, 0.0
        %2192 = vadd.xlane.f32.xlu0 %v2191
        %v2193 = vpop.xlane.xlu0 %2192
        %v2194 = vsel %vm585, %v2150, 0.0
        %2195 = vadd.xlane.f32.xlu0 %v2194
        %v2196 = vpop.xlane.xlu0 %2195
        %v2197 = vsel %vm585, %v2155, 0.0
        %2198 = vadd.xlane.f32.xlu0 %v2197
        %v2199 = vpop.xlane.xlu0 %2198
        %v2200 = vsel %vm585, %v2160, 0.0
        %2201 = vadd.xlane.f32.xlu0 %v2200
        %v2202 = vpop.xlane.xlu0 %2201
        %v2203 = vadd.f32 %v2181, %v2184
        %v2204 = vrot.slane %v2203, 4
        %v2205 = vadd.f32 %v2203, %v2204
        %v2206 = vrot.slane %v2205, 2
        %v2207 = vadd.f32 %v2205, %v2206
        %v2208 = vrot.slane %v2207, 1
        %v2209 = vadd.f32 %v2207, %v2208
        %v2210 = vadd.f32 %v2187, %v2190
        %v2211 = vrot.slane %v2210, 4
        %v2212 = vadd.f32 %v2210, %v2211
        %v2213 = vrot.slane %v2212, 2
        %v2214 = vadd.f32 %v2212, %v2213
        %v2215 = vrot.slane %v2214, 1
        %v2216 = vadd.f32 %v2214, %v2215
        %v2217 = vadd.f32 %v2193, %v2196
        %v2218 = vrot.slane %v2217, 4
        %v2219 = vadd.f32 %v2217, %v2218
        %v2220 = vrot.slane %v2219, 2
        %v2221 = vadd.f32 %v2219, %v2220
        %v2222 = vrot.slane %v2221, 1
        %v2223 = vadd.f32 %v2221, %v2222
        %v2224 = vadd.f32 %v2199, %v2202
        %v2225 = vrot.slane %v2224, 4
        %v2226 = vadd.f32 %v2224, %v2225
        %v2227 = vrot.slane %v2226, 2
        %v2228 = vadd.f32 %v2226, %v2227
        %v2229 = vrot.slane %v2228, 1
        %v2230 = vadd.f32 %v2228, %v2229
        %v2231 = vmul.f32 %v2209, 0.00390625
        %v2232 = vmul.f32 %v2216, 0.00390625
        %v2233 = vmul.f32 %v2223, 0.00390625
        %v2234 = vmul.f32 %v2230, 0.00390625
        %v2235 = vsub.f32 %v2125, %v2231
        %v2236 = vsub.f32 %v2130, %v2231
        %v2237 = vsub.f32 %v2135, %v2232
        %v2238 = vsub.f32 %v2140, %v2232
        %v2239 = vsub.f32 %v2145, %v2233
        %v2240 = vsub.f32 %v2150, %v2233
        %v2241 = vsub.f32 %v2155, %v2234
        %v2242 = vsub.f32 %v2160, %v2234
        %v2243 = vmul.f32 %v2235, %v2235
        %v2244 = vmul.f32 %v2236, %v2236
        %v2245 = vmul.f32 %v2237, %v2237
        %v2246 = vmul.f32 %v2238, %v2238
        %v2247 = vmul.f32 %v2239, %v2239
        %v2248 = vmul.f32 %v2240, %v2240
        %v2249 = vmul.f32 %v2241, %v2241
        %v2250 = vmul.f32 %v2242, %v2242
        %v2251 = vsel %vm585, %v2243, 0.0
        %2252 = vadd.xlane.f32.xlu0 %v2251
        %v2253 = vpop.xlane.xlu0 %2252
        %v2254 = vsel %vm585, %v2244, 0.0
        %2255 = vadd.xlane.f32.xlu0 %v2254
        %v2256 = vpop.xlane.xlu0 %2255
        %v2257 = vsel %vm585, %v2245, 0.0
        %2258 = vadd.xlane.f32.xlu0 %v2257
        %v2259 = vpop.xlane.xlu0 %2258
        %v2260 = vsel %vm585, %v2246, 0.0
        %2261 = vadd.xlane.f32.xlu0 %v2260
        %v2262 = vpop.xlane.xlu0 %2261
        %v2263 = vsel %vm585, %v2247, 0.0
        %2264 = vadd.xlane.f32.xlu0 %v2263
        %v2265 = vpop.xlane.xlu0 %2264
        %v2266 = vsel %vm585, %v2248, 0.0
        %2267 = vadd.xlane.f32.xlu0 %v2266
        %v2268 = vpop.xlane.xlu0 %2267
        %v2269 = vsel %vm585, %v2249, 0.0
        %2270 = vadd.xlane.f32.xlu0 %v2269
        %v2271 = vpop.xlane.xlu0 %2270
        %v2272 = vsel %vm585, %v2250, 0.0
        %2273 = vadd.xlane.f32.xlu0 %v2272
        %v2274 = vpop.xlane.xlu0 %2273
        %v2275 = vadd.f32 %v2253, %v2256
        %v2276 = vrot.slane %v2275, 4
        %v2277 = vadd.f32 %v2275, %v2276
        %v2278 = vrot.slane %v2277, 2
        %v2279 = vadd.f32 %v2277, %v2278
        %v2280 = vrot.slane %v2279, 1
        %v2281 = vadd.f32 %v2279, %v2280
        %v2282 = vadd.f32 %v2259, %v2262
        %v2283 = vrot.slane %v2282, 4
        %v2284 = vadd.f32 %v2282, %v2283
        %v2285 = vrot.slane %v2284, 2
        %v2286 = vadd.f32 %v2284, %v2285
        %v2287 = vrot.slane %v2286, 1
        %v2288 = vadd.f32 %v2286, %v2287
        %v2289 = vadd.f32 %v2265, %v2268
        %v2290 = vrot.slane %v2289, 4
        %v2291 = vadd.f32 %v2289, %v2290
        %v2292 = vrot.slane %v2291, 2
        %v2293 = vadd.f32 %v2291, %v2292
        %v2294 = vrot.slane %v2293, 1
        %v2295 = vadd.f32 %v2293, %v2294
        %v2296 = vadd.f32 %v2271, %v2274
        %v2297 = vrot.slane %v2296, 4
        %v2298 = vadd.f32 %v2296, %v2297
        %v2299 = vrot.slane %v2298, 2
        %v2300 = vadd.f32 %v2298, %v2299
        %v2301 = vrot.slane %v2300, 1
        %v2302 = vadd.f32 %v2300, %v2301
        %v2303 = vmul.f32 %v2281, 0.00390625
        %v2304 = vmul.f32 %v2288, 0.00390625
        %v2305 = vmul.f32 %v2295, 0.00390625
        %v2306 = vmul.f32 %v2302, 0.00390625
        %v2307 = vadd.f32 %v2303, 1e-05
        %v2308 = vadd.f32 %v2304, 1e-05
        %v2309 = vadd.f32 %v2305, 1e-05
        %v2310 = vadd.f32 %v2306, 1e-05
        %v2311 = vrsqrt.pop %v2307
        %v2312 = vrsqrt.pop %v2308
        %v2313 = vrsqrt.pop %v2309
        %v2314 = vrsqrt.pop %v2310
        %v2315 = vmul.f32 %v2235, %v2311
        %v2316 = vmul.f32 %v2236, %v2311
        %v2317 = vmul.f32 %v2237, %v2312
        %v2318 = vmul.f32 %v2238, %v2312
        %v2319 = vmul.f32 %v2239, %v2313
        %v2320 = vmul.f32 %v2240, %v2313
        %v2321 = vmul.f32 %v2241, %v2314
        %v2322 = vmul.f32 %v2242, %v2314
        %2324 = vset.pattern.permute.xlu0 0
        %2325 = vperm.xlu0 %2324, %v2163
        %v2326 = vpop.permute.xlu0 %2325
        %2329 = vset.pattern.permute.xlu0 0
        %2330 = vperm.xlu0 %2329, %v2164
        %v2331 = vpop.permute.xlu0 %2330
        %2334 = vset.pattern.permute.xlu0 0
        %2335 = vperm.xlu0 %2334, %v2165
        %v2336 = vpop.permute.xlu0 %2335
        %2339 = vset.pattern.permute.xlu0 0
        %2340 = vperm.xlu0 %2339, %v2166
        %v2341 = vpop.permute.xlu0 %2340
        %2344 = vset.pattern.permute.xlu0 0
        %2345 = vperm.xlu0 %2344, %v2167
        %v2346 = vpop.permute.xlu0 %2345
        %2349 = vset.pattern.permute.xlu0 0
        %2350 = vperm.xlu0 %2349, %v2168
        %v2351 = vpop.permute.xlu0 %2350
        %2354 = vset.pattern.permute.xlu0 0
        %2355 = vperm.xlu0 %2354, %v2169
        %v2356 = vpop.permute.xlu0 %2355
        %2359 = vset.pattern.permute.xlu0 0
        %2360 = vperm.xlu0 %2359, %v2170
        %v2361 = vpop.permute.xlu0 %2360
        %v2363 = vmul.f32 %v2315, %v2326
        %v2364 = vmul.f32 %v2316, %v2331
        %v2365 = vmul.f32 %v2317, %v2336
        %v2366 = vmul.f32 %v2318, %v2341
        %v2367 = vmul.f32 %v2319, %v2346
        %v2368 = vmul.f32 %v2320, %v2351
        %v2369 = vmul.f32 %v2321, %v2356
        %v2370 = vmul.f32 %v2322, %v2361
        %2372 = vset.pattern.permute.xlu0 0
        %2373 = vperm.xlu0 %2372, %v2171
        %v2374 = vpop.permute.xlu0 %2373
        %2377 = vset.pattern.permute.xlu0 0
        %2378 = vperm.xlu0 %2377, %v2172
        %v2379 = vpop.permute.xlu0 %2378
        %2382 = vset.pattern.permute.xlu0 0
        %2383 = vperm.xlu0 %2382, %v2173
        %v2384 = vpop.permute.xlu0 %2383
        %2387 = vset.pattern.permute.xlu0 0
        %2388 = vperm.xlu0 %2387, %v2174
        %v2389 = vpop.permute.xlu0 %2388
        %2392 = vset.pattern.permute.xlu0 0
        %2393 = vperm.xlu0 %2392, %v2175
        %v2394 = vpop.permute.xlu0 %2393
        %2397 = vset.pattern.permute.xlu0 0
        %2398 = vperm.xlu0 %2397, %v2176
        %v2399 = vpop.permute.xlu0 %2398
        %2402 = vset.pattern.permute.xlu0 0
        %2403 = vperm.xlu0 %2402, %v2177
        %v2404 = vpop.permute.xlu0 %2403
        %2407 = vset.pattern.permute.xlu0 0
        %2408 = vperm.xlu0 %2407, %v2178
        %v2409 = vpop.permute.xlu0 %2408
        %v2411 = vadd.f32 %v2363, %v2374
        %v2412 = vadd.f32 %v2364, %v2379
        %v2413 = vadd.f32 %v2365, %v2384
        %v2414 = vadd.f32 %v2366, %v2389
        %v2415 = vadd.f32 %v2367, %v2394
        %v2416 = vadd.f32 %v2368, %v2399
        %v2417 = vadd.f32 %v2369, %v2404
        %v2418 = vadd.f32 %v2370, %v2409
        %v2419 = vmax.f32 %v2411, 0.0
        %v2420 = vmax.f32 %v2412, 0.0
        %v2421 = vmax.f32 %v2413, 0.0
        %v2422 = vmax.f32 %v2414, 0.0
        %v2423 = vmax.f32 %v2415, 0.0
        %v2424 = vmax.f32 %v2416, 0.0
        %v2425 = vmax.f32 %v2417, 0.0
        %v2426 = vmax.f32 %v2418, 0.0
        %v2427 = vld [vmem:[%s12] sm:$0xff]
        %v2428 = vld [vmem:[%s12 + $0x8] sm:$0xff]
        %v2429 = vld [vmem:[%s12 + $0x10] sm:$0xff]
        %v2430 = vld [vmem:[%s12 + $0x18] sm:$0xff]
        %vm2431 = vcmask 523264
        %v2433 = vsel %vm2431, %v2427, 0
        %v2436 = vsel %vm2431, %v2428, 0
        %v2439 = vsel %vm2431, %v2429, 0
        %v2442 = vsel %vm2431, %v2430, 0
        %2444 = vmatprep.subr.mxu0 0.0
        %2445 = vmatpush1.msra.mxu0 0.0
        %2446 = vmatprep.subr.mxu0 0.0
        %2447 = vmatpush1.msra.mxu0 0.0
        %2448 = vmatprep.subr.mxu0 0.0
        %2449 = vmatpush1.msra.mxu0 0.0
        %2450 = vmatprep.subr.mxu0 0.0
        %2451 = vmatpush1.msra.mxu0 0.0
        %2452 = vmatprep.subr.mxu0 0.0
        %2453 = vmatpush1.msra.mxu0 0.0
        %2454 = vmatprep.subr.mxu0 0.0
        %2455 = vmatpush1.msra.mxu0 0.0
        %2456 = vmatprep.subr.mxu0 0.0
        %2457 = vmatpush1.msra.mxu0 0.0
        %2458 = vmatprep.subr.mxu0 0.0
        %2459 = vmatpush1.msra.mxu0 0.0
        %2460 = vmatprep.subr.mxu0 0.0
        %2461 = vmatpush1.msra.mxu0 %v2426
        %2462 = vmatprep.subr.mxu0 0.0
        %2463 = vmatpush1.msra.mxu0 %v2425
        %2464 = vmatprep.subr.mxu0 0.0
        %2465 = vmatpush1.msra.mxu0 %v2424
        %2466 = vmatprep.subr.mxu0 0.0
        %2467 = vmatpush1.msra.mxu0 %v2423
        %2468 = vmatprep.subr.mxu0 0.0
        %2469 = vmatpush1.msra.mxu0 %v2422
        %2470 = vmatprep.subr.mxu0 0.0
        %2471 = vmatpush1.msra.mxu0 %v2421
        %2472 = vmatprep.subr.mxu0 0.0
        %2473 = vmatpush1.msra.mxu0 %v2420
        %2474 = vmatprep.subr.mxu0 0.0
        %2475 = vmatpush1.msra.mxu0 %v2419
        %2476 = vmatprep.subr.mxu0 0.0
        %2477 = vmatpush2.msra.mxu0 0.0
        %2478 = vmatprep.subr.mxu0 0.0
        %2479 = vmatpush2.msra.mxu0 0.0
        %2480 = vmatprep.subr.mxu0 0.0
        %2481 = vmatpush2.msra.mxu0 0.0
        %2482 = vmatprep.subr.mxu0 0.0
        %2483 = vmatpush2.msra.mxu0 0.0
        %2484 = vmatprep.subr.mxu0 0.0
        %2485 = vmatpush2.msra.mxu0 0.0
        %2486 = vmatprep.subr.mxu0 0.0
        %2487 = vmatpush2.msra.mxu0 0.0
        %2488 = vmatprep.subr.mxu0 0.0
        %2489 = vmatpush2.msra.mxu0 0.0
        %2490 = vmatprep.subr.mxu0 0.0
        %2491 = vmatpush2.msra.mxu0 0.0
        %2492 = vmatprep.subr.mxu0 0.0
        %2493 = vmatpush2.msra.mxu0 0.0
        %2494 = vmatprep.subr.mxu0 0.0
        %2495 = vmatpush2.msra.mxu0 0.0
        %2496 = vmatprep.subr.mxu0 0.0
        %2497 = vmatpush2.msra.mxu0 0.0
        %2498 = vmatprep.subr.mxu0 0.0
        %2499 = vmatpush2.msra.mxu0 0.0
        %2500 = vmatprep.subr.mxu0 0.0
        %2501 = vmatpush2.msra.mxu0 0.0
        %2502 = vmatprep.subr.mxu0 0.0
        %2503 = vmatpush2.msra.mxu0 0.0
        %2504 = vmatprep.subr.mxu0 0.0
        %2505 = vmatpush2.msra.mxu0 0.0
        %2506 = vmatprep.subr.mxu0 0.0
        %2507 = vmatpush2.msra.mxu0 0.0
        %2508 = vmatprep.mubr.f32.mxu0 0.0
        %2509 = vmatmul.mubr.f32.gmra.mxu0 %v2433
        %v2510 = vpop.f32.mrf.mxu0
        %v2511 = vadd.f32 0.0, %v2510
        %v2512 = vpop.f32.mrf.mxu0
        %2513 = vmatprep.mubr.f32.mxu0 0.0
        %2514 = vmatmul.mubr.f32.gmra.mxu0 %v2436
        %v2515 = vpop.f32.mrf.mxu0
        %v2516 = vadd.f32 0.0, %v2515
        %v2517 = vpop.f32.mrf.mxu0
        %2518 = vmatprep.mubr.f32.mxu0 0.0
        %2519 = vmatmul.mubr.f32.gmra.mxu0 %v2439
        %v2520 = vpop.f32.mrf.mxu0
        %v2521 = vadd.f32 0.0, %v2520
        %v2522 = vpop.f32.mrf.mxu0
        %2523 = vmatprep.mubr.f32.mxu0 0.0
        %2524 = vmatmul.mubr.f32.gmra.mxu0 %v2442
        %v2525 = vpop.f32.mrf.mxu0
        %v2526 = vadd.f32 0.0, %v2525
        %v2527 = vpop.f32.mrf.mxu0
        %2528 = vdwg.mxu0
        %v2529 = vld [vmem:[%s13] sm:$0xff]
        %v2530 = vld [vmem:[%s13 + $0x8] sm:$0xff]
        %v2531 = vld [vmem:[%s13 + $0x10] sm:$0xff]
        %v2532 = vld [vmem:[%s13 + $0x18] sm:$0xff]
        %v2533 = vld [vmem:[%s14] sm:$0xff]
        %v2534 = vld [vmem:[%s14 + $0x8] sm:$0xff]
        %v2535 = vld [vmem:[%s14 + $0x10] sm:$0xff]
        %v2536 = vld [vmem:[%s14 + $0x18] sm:$0xff]
        %v2537 = vsel %vm585, %v2511, 0.0
        %2538 = vadd.xlane.f32.xlu0 %v2537
        %v2539 = vpop.xlane.xlu0 %2538
        %v2540 = vsel %vm585, %v2516, 0.0
        %2541 = vadd.xlane.f32.xlu0 %v2540
        %v2542 = vpop.xlane.xlu0 %2541
        %v2543 = vsel %vm585, %v2521, 0.0
        %2544 = vadd.xlane.f32.xlu0 %v2543
        %v2545 = vpop.xlane.xlu0 %2544
        %v2546 = vsel %vm585, %v2526, 0.0
        %2547 = vadd.xlane.f32.xlu0 %v2546
        %v2548 = vpop.xlane.xlu0 %2547
        %v2549 = vrot.slane %v2539, 4
        %v2550 = vadd.f32 %v2539, %v2549
        %v2551 = vrot.slane %v2550, 2
        %v2552 = vadd.f32 %v2550, %v2551
        %v2553 = vrot.slane %v2552, 1
        %v2554 = vadd.f32 %v2552, %v2553
        %v2555 = vrot.slane %v2542, 4
        %v2556 = vadd.f32 %v2542, %v2555
        %v2557 = vrot.slane %v2556, 2
        %v2558 = vadd.f32 %v2556, %v2557
        %v2559 = vrot.slane %v2558, 1
        %v2560 = vadd.f32 %v2558, %v2559
        %v2561 = vrot.slane %v2545, 4
        %v2562 = vadd.f32 %v2545, %v2561
        %v2563 = vrot.slane %v2562, 2
        %v2564 = vadd.f32 %v2562, %v2563
        %v2565 = vrot.slane %v2564, 1
        %v2566 = vadd.f32 %v2564, %v2565
        %v2567 = vrot.slane %v2548, 4
        %v2568 = vadd.f32 %v2548, %v2567
        %v2569 = vrot.slane %v2568, 2
        %v2570 = vadd.f32 %v2568, %v2569
        %v2571 = vrot.slane %v2570, 1
        %v2572 = vadd.f32 %v2570, %v2571
        %v2573 = vmul.f32 %v2554, 0.0078125
        %v2574 = vmul.f32 %v2560, 0.0078125
        %v2575 = vmul.f32 %v2566, 0.0078125
        %v2576 = vmul.f32 %v2572, 0.0078125
        %v2577 = vsub.f32 %v2511, %v2573
        %v2578 = vsub.f32 %v2516, %v2574
        %v2579 = vsub.f32 %v2521, %v2575
        %v2580 = vsub.f32 %v2526, %v2576
        %v2581 = vmul.f32 %v2577, %v2577
        %v2582 = vmul.f32 %v2578, %v2578
        %v2583 = vmul.f32 %v2579, %v2579
        %v2584 = vmul.f32 %v2580, %v2580
        %v2585 = vsel %vm585, %v2581, 0.0
        %2586 = vadd.xlane.f32.xlu0 %v2585
        %v2587 = vpop.xlane.xlu0 %2586
        %v2588 = vsel %vm585, %v2582, 0.0
        %2589 = vadd.xlane.f32.xlu0 %v2588
        %v2590 = vpop.xlane.xlu0 %2589
        %v2591 = vsel %vm585, %v2583, 0.0
        %2592 = vadd.xlane.f32.xlu0 %v2591
        %v2593 = vpop.xlane.xlu0 %2592
        %v2594 = vsel %vm585, %v2584, 0.0
        %2595 = vadd.xlane.f32.xlu0 %v2594
        %v2596 = vpop.xlane.xlu0 %2595
        %v2597 = vrot.slane %v2587, 4
        %v2598 = vadd.f32 %v2587, %v2597
        %v2599 = vrot.slane %v2598, 2
        %v2600 = vadd.f32 %v2598, %v2599
        %v2601 = vrot.slane %v2600, 1
        %v2602 = vadd.f32 %v2600, %v2601
        %v2603 = vrot.slane %v2590, 4
        %v2604 = vadd.f32 %v2590, %v2603
        %v2605 = vrot.slane %v2604, 2
        %v2606 = vadd.f32 %v2604, %v2605
        %v2607 = vrot.slane %v2606, 1
        %v2608 = vadd.f32 %v2606, %v2607
        %v2609 = vrot.slane %v2593, 4
        %v2610 = vadd.f32 %v2593, %v2609
        %v2611 = vrot.slane %v2610, 2
        %v2612 = vadd.f32 %v2610, %v2611
        %v2613 = vrot.slane %v2612, 1
        %v2614 = vadd.f32 %v2612, %v2613
        %v2615 = vrot.slane %v2596, 4
        %v2616 = vadd.f32 %v2596, %v2615
        %v2617 = vrot.slane %v2616, 2
        %v2618 = vadd.f32 %v2616, %v2617
        %v2619 = vrot.slane %v2618, 1
        %v2620 = vadd.f32 %v2618, %v2619
        %v2621 = vmul.f32 %v2602, 0.0078125
        %v2622 = vmul.f32 %v2608, 0.0078125
        %v2623 = vmul.f32 %v2614, 0.0078125
        %v2624 = vmul.f32 %v2620, 0.0078125
        %v2625 = vadd.f32 %v2621, 1e-05
        %v2626 = vadd.f32 %v2622, 1e-05
        %v2627 = vadd.f32 %v2623, 1e-05
        %v2628 = vadd.f32 %v2624, 1e-05
        %v2629 = vrsqrt.pop %v2625
        %v2630 = vrsqrt.pop %v2626
        %v2631 = vrsqrt.pop %v2627
        %v2632 = vrsqrt.pop %v2628
        %v2633 = vmul.f32 %v2577, %v2629
        %v2634 = vmul.f32 %v2578, %v2630
        %v2635 = vmul.f32 %v2579, %v2631
        %v2636 = vmul.f32 %v2580, %v2632
        %2638 = vset.pattern.permute.xlu0 0
        %2639 = vperm.xlu0 %2638, %v2529
        %v2640 = vpop.permute.xlu0 %2639
        %2643 = vset.pattern.permute.xlu0 0
        %2644 = vperm.xlu0 %2643, %v2530
        %v2645 = vpop.permute.xlu0 %2644
        %2648 = vset.pattern.permute.xlu0 0
        %2649 = vperm.xlu0 %2648, %v2531
        %v2650 = vpop.permute.xlu0 %2649
        %2653 = vset.pattern.permute.xlu0 0
        %2654 = vperm.xlu0 %2653, %v2532
        %v2655 = vpop.permute.xlu0 %2654
        %v2657 = vmul.f32 %v2633, %v2640
        %v2658 = vmul.f32 %v2634, %v2645
        %v2659 = vmul.f32 %v2635, %v2650
        %v2660 = vmul.f32 %v2636, %v2655
        %2662 = vset.pattern.permute.xlu0 0
        %2663 = vperm.xlu0 %2662, %v2533
        %v2664 = vpop.permute.xlu0 %2663
        %2667 = vset.pattern.permute.xlu0 0
        %2668 = vperm.xlu0 %2667, %v2534
        %v2669 = vpop.permute.xlu0 %2668
        %2672 = vset.pattern.permute.xlu0 0
        %2673 = vperm.xlu0 %2672, %v2535
        %v2674 = vpop.permute.xlu0 %2673
        %2677 = vset.pattern.permute.xlu0 0
        %2678 = vperm.xlu0 %2677, %v2536
        %v2679 = vpop.permute.xlu0 %2678
        %v2681 = vadd.f32 %v2657, %v2664
        %v2682 = vadd.f32 %v2658, %v2669
        %v2683 = vadd.f32 %v2659, %v2674
        %v2684 = vadd.f32 %v2660, %v2679
        %v2685 = vadd.f32 %v1880, %v2681
        %v2686 = vadd.f32 %v1885, %v2682
        %v2687 = vadd.f32 %v1890, %v2683
        %v2688 = vadd.f32 %v1895, %v2684
        %v2689 = vsel %vm585, %v2685, 0.0
        %v2690 = vsel %vm585, %v2686, 0.0
        %v2691 = vadd.f32 %v2689, %v2690
        %v2692 = vsel %vm585, %v2687, 0.0
        %v2693 = vadd.f32 %v2691, %v2692
        %v2694 = vsel %vm585, %v2688, 0.0
        %v2695 = vadd.f32 %v2693, %v2694
        %v2696 = vrot.slane %v2695, 4
        %v2697 = vadd.f32 %v2695, %v2696
        %v2698 = vrot.slane %v2697, 2
        %v2699 = vadd.f32 %v2697, %v2698
        %v2700 = vrot.slane %v2699, 1
        %v2701 = vadd.f32 %v2699, %v2700
        %v2702 = vmul.f32 %v2701, %v599
        %v2703 = vsub.f32 %v2685, %v2702
        %v2704 = vsub.f32 %v2686, %v2702
        %v2705 = vsub.f32 %v2687, %v2702
        %v2706 = vsub.f32 %v2688, %v2702
        %v2707 = vmul.f32 %v2703, %v2703
        %v2708 = vmul.f32 %v2704, %v2704
        %v2709 = vmul.f32 %v2705, %v2705
        %v2710 = vmul.f32 %v2706, %v2706
        %v2711 = vsel %vm585, %v2707, 0.0
        %v2712 = vsel %vm585, %v2708, 0.0
        %v2713 = vadd.f32 %v2711, %v2712
        %v2714 = vsel %vm585, %v2709, 0.0
        %v2715 = vadd.f32 %v2713, %v2714
        %v2716 = vsel %vm585, %v2710, 0.0
        %v2717 = vadd.f32 %v2715, %v2716
        %v2718 = vrot.slane %v2717, 4
        %v2719 = vadd.f32 %v2717, %v2718
        %v2720 = vrot.slane %v2719, 2
        %v2721 = vadd.f32 %v2719, %v2720
        %v2722 = vrot.slane %v2721, 1
        %v2723 = vadd.f32 %v2721, %v2722
        %v2724 = vmul.f32 %v2723, %v599
        %v2725 = vadd.f32 %v2724, 1e-05
        %v2726 = vrsqrt.pop %v2725
        %v2727 = vmul.f32 %v2703, %v2726
        %v2728 = vmul.f32 %v2704, %v2726
        %v2729 = vmul.f32 %v2705, %v2726
        %v2730 = vmul.f32 %v2706, %v2726
        %s2731 = scalar_lea.vmem %s3, 32
        %v2732 = vld [vmem:[%s2731] sm:$0xff]
        %v2733 = vld [vmem:[%s2731 + $0x8] sm:$0xff]
        %v2734 = vld [vmem:[%s2731 + $0x10] sm:$0xff]
        %v2735 = vld [vmem:[%s2731 + $0x18] sm:$0xff]
        %2737 = vset.pattern.permute.xlu0 0
        %2738 = vperm.xlu0 %2737, %v2732
        %v2739 = vpop.permute.xlu0 %2738
        %2742 = vset.pattern.permute.xlu0 0
        %2743 = vperm.xlu0 %2742, %v2733
        %v2744 = vpop.permute.xlu0 %2743
        %2747 = vset.pattern.permute.xlu0 0
        %2748 = vperm.xlu0 %2747, %v2734
        %v2749 = vpop.permute.xlu0 %2748
        %2752 = vset.pattern.permute.xlu0 0
        %2753 = vperm.xlu0 %2752, %v2735
        %v2754 = vpop.permute.xlu0 %2753
        %v2756 = vmul.f32 %v2727, %v2739
        %v2757 = vmul.f32 %v2728, %v2744
        %v2758 = vmul.f32 %v2729, %v2749
        %v2759 = vmul.f32 %v2730, %v2754
        %s2760 = scalar_lea.vmem %s4, 32
        %v2761 = vld [vmem:[%s2760] sm:$0xff]
        %v2762 = vld [vmem:[%s2760 + $0x8] sm:$0xff]
        %v2763 = vld [vmem:[%s2760 + $0x10] sm:$0xff]
        %v2764 = vld [vmem:[%s2760 + $0x18] sm:$0xff]
        %2766 = vset.pattern.permute.xlu0 0
        %2767 = vperm.xlu0 %2766, %v2761
        %v2768 = vpop.permute.xlu0 %2767
        %2771 = vset.pattern.permute.xlu0 0
        %2772 = vperm.xlu0 %2771, %v2762
        %v2773 = vpop.permute.xlu0 %2772
        %2776 = vset.pattern.permute.xlu0 0
        %2777 = vperm.xlu0 %2776, %v2763
        %v2778 = vpop.permute.xlu0 %2777
        %2781 = vset.pattern.permute.xlu0 0
        %2782 = vperm.xlu0 %2781, %v2764
        %v2783 = vpop.permute.xlu0 %2782
        %v2785 = vadd.f32 %v2756, %v2768
        %v2786 = vadd.f32 %v2757, %v2773
        %v2787 = vadd.f32 %v2758, %v2778
        %v2788 = vadd.f32 %v2759, %v2783
        %s2789 = scalar_lea.vmem %s5, 32
        %v2790 = vld [vmem:[%s2789] sm:$0xff]
        %v2791 = vld [vmem:[%s2789 + $0x8] sm:$0xff]
        %v2792 = vld [vmem:[%s2789 + $0x10] sm:$0xff]
        %v2793 = vld [vmem:[%s2789 + $0x18] sm:$0xff]
        %v2795 = vsel %vm689, %v2790, 0
        %v2798 = vsel %vm689, %v2791, 0
        %v2801 = vsel %vm689, %v2792, 0
        %v2804 = vsel %vm689, %v2793, 0
        %2806 = vmatprep.subr.mxu0 0.0
        %2807 = vmatpush1.msra.mxu0 0.0
        %2808 = vmatprep.subr.mxu0 0.0
        %2809 = vmatpush1.msra.mxu0 0.0
        %2810 = vmatprep.subr.mxu0 0.0
        %2811 = vmatpush1.msra.mxu0 0.0
        %2812 = vmatprep.subr.mxu0 0.0
        %2813 = vmatpush1.msra.mxu0 0.0
        %2814 = vmatprep.subr.mxu0 0.0
        %2815 = vmatpush1.msra.mxu0 0.0
        %2816 = vmatprep.subr.mxu0 0.0
        %2817 = vmatpush1.msra.mxu0 0.0
        %2818 = vmatprep.subr.mxu0 0.0
        %2819 = vmatpush1.msra.mxu0 0.0
        %2820 = vmatprep.subr.mxu0 0.0
        %2821 = vmatpush1.msra.mxu0 0.0
        %2822 = vmatprep.subr.mxu0 0.0
        %2823 = vmatpush1.msra.mxu0 0.0
        %2824 = vmatprep.subr.mxu0 0.0
        %2825 = vmatpush1.msra.mxu0 0.0
        %2826 = vmatprep.subr.mxu0 0.0
        %2827 = vmatpush1.msra.mxu0 0.0
        %2828 = vmatprep.subr.mxu0 0.0
        %2829 = vmatpush1.msra.mxu0 0.0
        %2830 = vmatprep.subr.mxu0 0.0
        %2831 = vmatpush1.msra.mxu0 %v2788
        %2832 = vmatprep.subr.mxu0 0.0
        %2833 = vmatpush1.msra.mxu0 %v2787
        %2834 = vmatprep.subr.mxu0 0.0
        %2835 = vmatpush1.msra.mxu0 %v2786
        %2836 = vmatprep.subr.mxu0 0.0
        %2837 = vmatpush1.msra.mxu0 %v2785
        %2838 = vmatprep.subr.mxu0 0.0
        %2839 = vmatpush2.msra.mxu0 0.0
        %2840 = vmatprep.subr.mxu0 0.0
        %2841 = vmatpush2.msra.mxu0 0.0
        %2842 = vmatprep.subr.mxu0 0.0
        %2843 = vmatpush2.msra.mxu0 0.0
        %2844 = vmatprep.subr.mxu0 0.0
        %2845 = vmatpush2.msra.mxu0 0.0
        %2846 = vmatprep.subr.mxu0 0.0
        %2847 = vmatpush2.msra.mxu0 0.0
        %2848 = vmatprep.subr.mxu0 0.0
        %2849 = vmatpush2.msra.mxu0 0.0
        %2850 = vmatprep.subr.mxu0 0.0
        %2851 = vmatpush2.msra.mxu0 0.0
        %2852 = vmatprep.subr.mxu0 0.0
        %2853 = vmatpush2.msra.mxu0 0.0
        %2854 = vmatprep.subr.mxu0 0.0
        %2855 = vmatpush2.msra.mxu0 0.0
        %2856 = vmatprep.subr.mxu0 0.0
        %2857 = vmatpush2.msra.mxu0 0.0
        %2858 = vmatprep.subr.mxu0 0.0
        %2859 = vmatpush2.msra.mxu0 0.0
        %2860 = vmatprep.subr.mxu0 0.0
        %2861 = vmatpush2.msra.mxu0 0.0
        %2862 = vmatprep.subr.mxu0 0.0
        %2863 = vmatpush2.msra.mxu0 0.0
        %2864 = vmatprep.subr.mxu0 0.0
        %2865 = vmatpush2.msra.mxu0 0.0
        %2866 = vmatprep.subr.mxu0 0.0
        %2867 = vmatpush2.msra.mxu0 0.0
        %2868 = vmatprep.subr.mxu0 0.0
        %2869 = vmatpush2.msra.mxu0 0.0
        %2870 = vmatprep.mubr.f32.mxu0 0.0
        %2871 = vmatmul.mubr.f32.gmra.mxu0 %v2795
        %v2872 = vpop.f32.mrf.mxu0
        %v2873 = vadd.f32 0.0, %v2872
        %v2874 = vpop.f32.mrf.mxu0
        %2875 = vmatprep.mubr.f32.mxu0 0.0
        %2876 = vmatmul.mubr.f32.gmra.mxu0 %v2798
        %v2877 = vpop.f32.mrf.mxu0
        %v2878 = vadd.f32 0.0, %v2877
        %v2879 = vpop.f32.mrf.mxu0
        %2880 = vmatprep.mubr.f32.mxu0 0.0
        %2881 = vmatmul.mubr.f32.gmra.mxu0 %v2801
        %v2882 = vpop.f32.mrf.mxu0
        %v2883 = vadd.f32 0.0, %v2882
        %v2884 = vpop.f32.mrf.mxu0
        %2885 = vmatprep.mubr.f32.mxu0 0.0
        %2886 = vmatmul.mubr.f32.gmra.mxu0 %v2804
        %v2887 = vpop.f32.mrf.mxu0
        %v2888 = vadd.f32 0.0, %v2887
        %v2889 = vpop.f32.mrf.mxu0
        %2890 = vdwg.mxu0
        %s2891 = scalar_lea.vmem %s6, 64
        %v2892 = vld [vmem:[%s2891] sm:$0xff]
        %v2893 = vld [vmem:[%s2891 + $0x8] sm:$0xff]
        %v2894 = vld [vmem:[%s2891 + $0x10] sm:$0xff]
        %v2895 = vld [vmem:[%s2891 + $0x18] sm:$0xff]
        %v2896 = vld [vmem:[%s2891 + $0x20] sm:$0xff]
        %v2897 = vld [vmem:[%s2891 + $0x28] sm:$0xff]
        %v2898 = vld [vmem:[%s2891 + $0x30] sm:$0xff]
        %v2899 = vld [vmem:[%s2891 + $0x38] sm:$0xff]
        %v2901 = vsel %vm689, %v2892, 0
        %v2904 = vsel %vm689, %v2893, 0
        %v2907 = vsel %vm689, %v2894, 0
        %v2910 = vsel %vm689, %v2895, 0
        %v2913 = vsel %vm689, %v2896, 0
        %v2916 = vsel %vm689, %v2897, 0
        %v2919 = vsel %vm689, %v2898, 0
        %v2922 = vsel %vm689, %v2899, 0
        %2924 = vmatprep.subr.mxu0 0.0
        %2925 = vmatpush1.msra.mxu0 0.0
        %2926 = vmatprep.subr.mxu0 0.0
        %2927 = vmatpush1.msra.mxu0 0.0
        %2928 = vmatprep.subr.mxu0 0.0
        %2929 = vmatpush1.msra.mxu0 0.0
        %2930 = vmatprep.subr.mxu0 0.0
        %2931 = vmatpush1.msra.mxu0 0.0
        %2932 = vmatprep.subr.mxu0 0.0
        %2933 = vmatpush1.msra.mxu0 0.0
        %2934 = vmatprep.subr.mxu0 0.0
        %2935 = vmatpush1.msra.mxu0 0.0
        %2936 = vmatprep.subr.mxu0 0.0
        %2937 = vmatpush1.msra.mxu0 0.0
        %2938 = vmatprep.subr.mxu0 0.0
        %2939 = vmatpush1.msra.mxu0 0.0
        %2940 = vmatprep.subr.mxu0 0.0
        %2941 = vmatpush1.msra.mxu0 0.0
        %2942 = vmatprep.subr.mxu0 0.0
        %2943 = vmatpush1.msra.mxu0 0.0
        %2944 = vmatprep.subr.mxu0 0.0
        %2945 = vmatpush1.msra.mxu0 0.0
        %2946 = vmatprep.subr.mxu0 0.0
        %2947 = vmatpush1.msra.mxu0 0.0
        %2948 = vmatprep.subr.mxu0 0.0
        %2949 = vmatpush1.msra.mxu0 %v584
        %2950 = vmatprep.subr.mxu0 0.0
        %2951 = vmatpush1.msra.mxu0 %v583
        %2952 = vmatprep.subr.mxu0 0.0
        %2953 = vmatpush1.msra.mxu0 %v582
        %2954 = vmatprep.subr.mxu0 0.0
        %2955 = vmatpush1.msra.mxu0 %v581
        %2956 = vmatprep.subr.mxu0 0.0
        %2957 = vmatpush2.msra.mxu0 0.0
        %2958 = vmatprep.subr.mxu0 0.0
        %2959 = vmatpush2.msra.mxu0 0.0
        %2960 = vmatprep.subr.mxu0 0.0
        %2961 = vmatpush2.msra.mxu0 0.0
        %2962 = vmatprep.subr.mxu0 0.0
        %2963 = vmatpush2.msra.mxu0 0.0
        %2964 = vmatprep.subr.mxu0 0.0
        %2965 = vmatpush2.msra.mxu0 0.0
        %2966 = vmatprep.subr.mxu0 0.0
        %2967 = vmatpush2.msra.mxu0 0.0
        %2968 = vmatprep.subr.mxu0 0.0
        %2969 = vmatpush2.msra.mxu0 0.0
        %2970 = vmatprep.subr.mxu0 0.0
        %2971 = vmatpush2.msra.mxu0 0.0
        %2972 = vmatprep.subr.mxu0 0.0
        %2973 = vmatpush2.msra.mxu0 0.0
        %2974 = vmatprep.subr.mxu0 0.0
        %2975 = vmatpush2.msra.mxu0 0.0
        %2976 = vmatprep.subr.mxu0 0.0
        %2977 = vmatpush2.msra.mxu0 0.0
        %2978 = vmatprep.subr.mxu0 0.0
        %2979 = vmatpush2.msra.mxu0 0.0
        %2980 = vmatprep.subr.mxu0 0.0
        %2981 = vmatpush2.msra.mxu0 0.0
        %2982 = vmatprep.subr.mxu0 0.0
        %2983 = vmatpush2.msra.mxu0 0.0
        %2984 = vmatprep.subr.mxu0 0.0
        %2985 = vmatpush2.msra.mxu0 0.0
        %2986 = vmatprep.subr.mxu0 0.0
        %2987 = vmatpush2.msra.mxu0 0.0
        %2988 = vmatprep.mubr.f32.mxu0 0.0
        %2989 = vmatmul.mubr.f32.gmra.mxu0 %v2901
        %v2990 = vpop.f32.mrf.mxu0
        %v2991 = vadd.f32 0.0, %v2990
        %v2992 = vpop.f32.mrf.mxu0
        %2993 = vmatprep.mubr.f32.mxu0 0.0
        %2994 = vmatmul.mubr.f32.gmra.mxu0 %v2904
        %v2995 = vpop.f32.mrf.mxu0
        %v2996 = vadd.f32 0.0, %v2995
        %v2997 = vpop.f32.mrf.mxu0
        %2998 = vmatprep.mubr.f32.mxu0 0.0
        %2999 = vmatmul.mubr.f32.gmra.mxu0 %v2907
        %v3000 = vpop.f32.mrf.mxu0
        %v3001 = vadd.f32 0.0, %v3000
        %v3002 = vpop.f32.mrf.mxu0
        %3003 = vmatprep.mubr.f32.mxu0 0.0
        %3004 = vmatmul.mubr.f32.gmra.mxu0 %v2910
        %v3005 = vpop.f32.mrf.mxu0
        %v3006 = vadd.f32 0.0, %v3005
        %v3007 = vpop.f32.mrf.mxu0
        %3008 = vmatprep.mubr.f32.mxu0 0.0
        %3009 = vmatmul.mubr.f32.gmra.mxu0 %v2913
        %v3010 = vpop.f32.mrf.mxu0
        %v3011 = vadd.f32 0.0, %v3010
        %v3012 = vpop.f32.mrf.mxu0
        %3013 = vmatprep.mubr.f32.mxu0 0.0
        %3014 = vmatmul.mubr.f32.gmra.mxu0 %v2916
        %v3015 = vpop.f32.mrf.mxu0
        %v3016 = vadd.f32 0.0, %v3015
        %v3017 = vpop.f32.mrf.mxu0
        %3018 = vmatprep.mubr.f32.mxu0 0.0
        %3019 = vmatmul.mubr.f32.gmra.mxu0 %v2919
        %v3020 = vpop.f32.mrf.mxu0
        %v3021 = vadd.f32 0.0, %v3020
        %v3022 = vpop.f32.mrf.mxu0
        %3023 = vmatprep.mubr.f32.mxu0 0.0
        %3024 = vmatmul.mubr.f32.gmra.mxu0 %v2922
        %v3025 = vpop.f32.mrf.mxu0
        %v3026 = vadd.f32 0.0, %v3025
        %v3027 = vpop.f32.mrf.mxu0
        %3028 = vdwg.mxu0
        %3029 = vxpose.xlu0.b32.start [1/16] %v2873, 128
        %3030 = vxpose.xlu0.b32.cont [2/16] 0.0, 128
        %3031 = vxpose.xlu0.b32.cont [3/16] 0.0, 128
        %3032 = vxpose.xlu0.b32.cont [4/16] 0.0, 128
        %3033 = vxpose.xlu0.b32.cont [5/16] 0.0, 128
        %3034 = vxpose.xlu0.b32.cont [6/16] 0.0, 128
        %3035 = vxpose.xlu0.b32.cont [7/16] 0.0, 128
        %3036 = vxpose.xlu0.b32.cont [8/16] 0.0, 128
        %3037 = vxpose.xlu0.b32.cont [9/16] 0.0, 128
        %3038 = vxpose.xlu0.b32.cont [10/16] 0.0, 128
        %3039 = vxpose.xlu0.b32.cont [11/16] 0.0, 128
        %3040 = vxpose.xlu0.b32.cont [12/16] 0.0, 128
        %3041 = vxpose.xlu0.b32.cont [13/16] 0.0, 128
        %3042 = vxpose.xlu0.b32.cont [14/16] 0.0, 128
        %3043 = vxpose.xlu0.b32.cont [15/16] 0.0, 128
        %3044 = vxpose.xlu0.b32.end [16/16] 0.0, 128
        %v3045 = vpop.trf.xlu0
        %v3046 = vpop.trf.xlu0
        %v3047 = vpop.trf.xlu0
        %v3048 = vpop.trf.xlu0
        %v3049 = vpop.trf.xlu0
        %v3050 = vpop.trf.xlu0
        %v3051 = vpop.trf.xlu0
        %v3052 = vpop.trf.xlu0
        %v3053 = vpop.trf.xlu0
        %v3054 = vpop.trf.xlu0
        %v3055 = vpop.trf.xlu0
        %v3056 = vpop.trf.xlu0
        %v3057 = vpop.trf.xlu0
        %v3058 = vpop.trf.xlu0
        %v3059 = vpop.trf.xlu0
        %v3060 = vpop.trf.xlu0
        %v3062 = vsel %vm956, %v3045, 0
        %v3065 = vsel %vm956, %v3046, 0
        %3067 = vmatprep.subr.mxu0 0.0
        %3068 = vmatpush1.msra.mxu0 0.0
        %3069 = vmatprep.subr.mxu0 0.0
        %3070 = vmatpush1.msra.mxu0 0.0
        %3071 = vmatprep.subr.mxu0 0.0
        %3072 = vmatpush1.msra.mxu0 0.0
        %3073 = vmatprep.subr.mxu0 0.0
        %3074 = vmatpush1.msra.mxu0 0.0
        %3075 = vmatprep.subr.mxu0 0.0
        %3076 = vmatpush1.msra.mxu0 0.0
        %3077 = vmatprep.subr.mxu0 0.0
        %3078 = vmatpush1.msra.mxu0 0.0
        %3079 = vmatprep.subr.mxu0 0.0
        %3080 = vmatpush1.msra.mxu0 0.0
        %3081 = vmatprep.subr.mxu0 0.0
        %3082 = vmatpush1.msra.mxu0 0.0
        %3083 = vmatprep.subr.mxu0 0.0
        %3084 = vmatpush1.msra.mxu0 0.0
        %3085 = vmatprep.subr.mxu0 0.0
        %3086 = vmatpush1.msra.mxu0 0.0
        %3087 = vmatprep.subr.mxu0 0.0
        %3088 = vmatpush1.msra.mxu0 0.0
        %3089 = vmatprep.subr.mxu0 0.0
        %3090 = vmatpush1.msra.mxu0 0.0
        %3091 = vmatprep.subr.mxu0 0.0
        %3092 = vmatpush1.msra.mxu0 0.0
        %3093 = vmatprep.subr.mxu0 0.0
        %3094 = vmatpush1.msra.mxu0 0.0
        %3095 = vmatprep.subr.mxu0 0.0
        %3096 = vmatpush1.msra.mxu0 0.0
        %3097 = vmatprep.subr.mxu0 0.0
        %3098 = vmatpush1.msra.mxu0 %v2991
        %3099 = vmatprep.subr.mxu0 0.0
        %3100 = vmatpush2.msra.mxu0 0.0
        %3101 = vmatprep.subr.mxu0 0.0
        %3102 = vmatpush2.msra.mxu0 0.0
        %3103 = vmatprep.subr.mxu0 0.0
        %3104 = vmatpush2.msra.mxu0 0.0
        %3105 = vmatprep.subr.mxu0 0.0
        %3106 = vmatpush2.msra.mxu0 0.0
        %3107 = vmatprep.subr.mxu0 0.0
        %3108 = vmatpush2.msra.mxu0 0.0
        %3109 = vmatprep.subr.mxu0 0.0
        %3110 = vmatpush2.msra.mxu0 0.0
        %3111 = vmatprep.subr.mxu0 0.0
        %3112 = vmatpush2.msra.mxu0 0.0
        %3113 = vmatprep.subr.mxu0 0.0
        %3114 = vmatpush2.msra.mxu0 0.0
        %3115 = vmatprep.subr.mxu0 0.0
        %3116 = vmatpush2.msra.mxu0 0.0
        %3117 = vmatprep.subr.mxu0 0.0
        %3118 = vmatpush2.msra.mxu0 0.0
        %3119 = vmatprep.subr.mxu0 0.0
        %3120 = vmatpush2.msra.mxu0 0.0
        %3121 = vmatprep.subr.mxu0 0.0
        %3122 = vmatpush2.msra.mxu0 0.0
        %3123 = vmatprep.subr.mxu0 0.0
        %3124 = vmatpush2.msra.mxu0 0.0
        %3125 = vmatprep.subr.mxu0 0.0
        %3126 = vmatpush2.msra.mxu0 0.0
        %3127 = vmatprep.subr.mxu0 0.0
        %3128 = vmatpush2.msra.mxu0 0.0
        %3129 = vmatprep.subr.mxu0 0.0
        %3130 = vmatpush2.msra.mxu0 0.0
        %3131 = vmatprep.mubr.f32.mxu0 0.0
        %3132 = vmatmul.mubr.f32.gmra.mxu0 %v3062
        %v3133 = vpop.f32.mrf.mxu0
        %v3134 = vadd.f32 0.0, %v3133
        %v3135 = vpop.f32.mrf.mxu0
        %3136 = vmatprep.mubr.f32.mxu0 0.0
        %3137 = vmatmul.mubr.f32.gmra.mxu0 %v3065
        %v3138 = vpop.f32.mrf.mxu0
        %v3139 = vadd.f32 0.0, %v3138
        %v3140 = vpop.f32.mrf.mxu0
        %3141 = vdwg.mxu0
        %3142 = vxpose.xlu0.b32.start [1/16] %v2878, 128
        %3143 = vxpose.xlu0.b32.cont [2/16] 0.0, 128
        %3144 = vxpose.xlu0.b32.cont [3/16] 0.0, 128
        %3145 = vxpose.xlu0.b32.cont [4/16] 0.0, 128
        %3146 = vxpose.xlu0.b32.cont [5/16] 0.0, 128
        %3147 = vxpose.xlu0.b32.cont [6/16] 0.0, 128
        %3148 = vxpose.xlu0.b32.cont [7/16] 0.0, 128
        %3149 = vxpose.xlu0.b32.cont [8/16] 0.0, 128
        %3150 = vxpose.xlu0.b32.cont [9/16] 0.0, 128
        %3151 = vxpose.xlu0.b32.cont [10/16] 0.0, 128
        %3152 = vxpose.xlu0.b32.cont [11/16] 0.0, 128
        %3153 = vxpose.xlu0.b32.cont [12/16] 0.0, 128
        %3154 = vxpose.xlu0.b32.cont [13/16] 0.0, 128
        %3155 = vxpose.xlu0.b32.cont [14/16] 0.0, 128
        %3156 = vxpose.xlu0.b32.cont [15/16] 0.0, 128
        %3157 = vxpose.xlu0.b32.end [16/16] 0.0, 128
        %v3158 = vpop.trf.xlu0
        %v3159 = vpop.trf.xlu0
        %v3160 = vpop.trf.xlu0
        %v3161 = vpop.trf.xlu0
        %v3162 = vpop.trf.xlu0
        %v3163 = vpop.trf.xlu0
        %v3164 = vpop.trf.xlu0
        %v3165 = vpop.trf.xlu0
        %v3166 = vpop.trf.xlu0
        %v3167 = vpop.trf.xlu0
        %v3168 = vpop.trf.xlu0
        %v3169 = vpop.trf.xlu0
        %v3170 = vpop.trf.xlu0
        %v3171 = vpop.trf.xlu0
        %v3172 = vpop.trf.xlu0
        %v3173 = vpop.trf.xlu0
        %v3175 = vsel %vm956, %v3158, 0
        %v3178 = vsel %vm956, %v3159, 0
        %3180 = vmatprep.subr.mxu0 0.0
        %3181 = vmatpush1.msra.mxu0 0.0
        %3182 = vmatprep.subr.mxu0 0.0
        %3183 = vmatpush1.msra.mxu0 0.0
        %3184 = vmatprep.subr.mxu0 0.0
        %3185 = vmatpush1.msra.mxu0 0.0
        %3186 = vmatprep.subr.mxu0 0.0
        %3187 = vmatpush1.msra.mxu0 0.0
        %3188 = vmatprep.subr.mxu0 0.0
        %3189 = vmatpush1.msra.mxu0 0.0
        %3190 = vmatprep.subr.mxu0 0.0
        %3191 = vmatpush1.msra.mxu0 0.0
        %3192 = vmatprep.subr.mxu0 0.0
        %3193 = vmatpush1.msra.mxu0 0.0
        %3194 = vmatprep.subr.mxu0 0.0
        %3195 = vmatpush1.msra.mxu0 0.0
        %3196 = vmatprep.subr.mxu0 0.0
        %3197 = vmatpush1.msra.mxu0 0.0
        %3198 = vmatprep.subr.mxu0 0.0
        %3199 = vmatpush1.msra.mxu0 0.0
        %3200 = vmatprep.subr.mxu0 0.0
        %3201 = vmatpush1.msra.mxu0 0.0
        %3202 = vmatprep.subr.mxu0 0.0
        %3203 = vmatpush1.msra.mxu0 0.0
        %3204 = vmatprep.subr.mxu0 0.0
        %3205 = vmatpush1.msra.mxu0 0.0
        %3206 = vmatprep.subr.mxu0 0.0
        %3207 = vmatpush1.msra.mxu0 0.0
        %3208 = vmatprep.subr.mxu0 0.0
        %3209 = vmatpush1.msra.mxu0 0.0
        %3210 = vmatprep.subr.mxu0 0.0
        %3211 = vmatpush1.msra.mxu0 %v2996
        %3212 = vmatprep.subr.mxu0 0.0
        %3213 = vmatpush2.msra.mxu0 0.0
        %3214 = vmatprep.subr.mxu0 0.0
        %3215 = vmatpush2.msra.mxu0 0.0
        %3216 = vmatprep.subr.mxu0 0.0
        %3217 = vmatpush2.msra.mxu0 0.0
        %3218 = vmatprep.subr.mxu0 0.0
        %3219 = vmatpush2.msra.mxu0 0.0
        %3220 = vmatprep.subr.mxu0 0.0
        %3221 = vmatpush2.msra.mxu0 0.0
        %3222 = vmatprep.subr.mxu0 0.0
        %3223 = vmatpush2.msra.mxu0 0.0
        %3224 = vmatprep.subr.mxu0 0.0
        %3225 = vmatpush2.msra.mxu0 0.0
        %3226 = vmatprep.subr.mxu0 0.0
        %3227 = vmatpush2.msra.mxu0 0.0
        %3228 = vmatprep.subr.mxu0 0.0
        %3229 = vmatpush2.msra.mxu0 0.0
        %3230 = vmatprep.subr.mxu0 0.0
        %3231 = vmatpush2.msra.mxu0 0.0
        %3232 = vmatprep.subr.mxu0 0.0
        %3233 = vmatpush2.msra.mxu0 0.0
        %3234 = vmatprep.subr.mxu0 0.0
        %3235 = vmatpush2.msra.mxu0 0.0
        %3236 = vmatprep.subr.mxu0 0.0
        %3237 = vmatpush2.msra.mxu0 0.0
        %3238 = vmatprep.subr.mxu0 0.0
        %3239 = vmatpush2.msra.mxu0 0.0
        %3240 = vmatprep.subr.mxu0 0.0
        %3241 = vmatpush2.msra.mxu0 0.0
        %3242 = vmatprep.subr.mxu0 0.0
        %3243 = vmatpush2.msra.mxu0 0.0
        %3244 = vmatprep.mubr.f32.mxu0 0.0
        %3245 = vmatmul.mubr.f32.gmra.mxu0 %v3175
        %v3246 = vpop.f32.mrf.mxu0
        %v3247 = vadd.f32 0.0, %v3246
        %v3248 = vpop.f32.mrf.mxu0
        %3249 = vmatprep.mubr.f32.mxu0 0.0
        %3250 = vmatmul.mubr.f32.gmra.mxu0 %v3178
        %v3251 = vpop.f32.mrf.mxu0
        %v3252 = vadd.f32 0.0, %v3251
        %v3253 = vpop.f32.mrf.mxu0
        %3254 = vdwg.mxu0
        %3255 = vxpose.xlu0.b32.start [1/16] %v2883, 128
        %3256 = vxpose.xlu0.b32.cont [2/16] 0.0, 128
        %3257 = vxpose.xlu0.b32.cont [3/16] 0.0, 128
        %3258 = vxpose.xlu0.b32.cont [4/16] 0.0, 128
        %3259 = vxpose.xlu0.b32.cont [5/16] 0.0, 128
        %3260 = vxpose.xlu0.b32.cont [6/16] 0.0, 128
        %3261 = vxpose.xlu0.b32.cont [7/16] 0.0, 128
        %3262 = vxpose.xlu0.b32.cont [8/16] 0.0, 128
        %3263 = vxpose.xlu0.b32.cont [9/16] 0.0, 128
        %3264 = vxpose.xlu0.b32.cont [10/16] 0.0, 128
        %3265 = vxpose.xlu0.b32.cont [11/16] 0.0, 128
        %3266 = vxpose.xlu0.b32.cont [12/16] 0.0, 128
        %3267 = vxpose.xlu0.b32.cont [13/16] 0.0, 128
        %3268 = vxpose.xlu0.b32.cont [14/16] 0.0, 128
        %3269 = vxpose.xlu0.b32.cont [15/16] 0.0, 128
        %3270 = vxpose.xlu0.b32.end [16/16] 0.0, 128
        %v3271 = vpop.trf.xlu0
        %v3272 = vpop.trf.xlu0
        %v3273 = vpop.trf.xlu0
        %v3274 = vpop.trf.xlu0
        %v3275 = vpop.trf.xlu0
        %v3276 = vpop.trf.xlu0
        %v3277 = vpop.trf.xlu0
        %v3278 = vpop.trf.xlu0
        %v3279 = vpop.trf.xlu0
        %v3280 = vpop.trf.xlu0
        %v3281 = vpop.trf.xlu0
        %v3282 = vpop.trf.xlu0
        %v3283 = vpop.trf.xlu0
        %v3284 = vpop.trf.xlu0
        %v3285 = vpop.trf.xlu0
        %v3286 = vpop.trf.xlu0
        %v3288 = vsel %vm956, %v3271, 0
        %v3291 = vsel %vm956, %v3272, 0
        %3293 = vmatprep.subr.mxu0 0.0
        %3294 = vmatpush1.msra.mxu0 0.0
        %3295 = vmatprep.subr.mxu0 0.0
        %3296 = vmatpush1.msra.mxu0 0.0
        %3297 = vmatprep.subr.mxu0 0.0
        %3298 = vmatpush1.msra.mxu0 0.0
        %3299 = vmatprep.subr.mxu0 0.0
        %3300 = vmatpush1.msra.mxu0 0.0
        %3301 = vmatprep.subr.mxu0 0.0
        %3302 = vmatpush1.msra.mxu0 0.0
        %3303 = vmatprep.subr.mxu0 0.0
        %3304 = vmatpush1.msra.mxu0 0.0
        %3305 = vmatprep.subr.mxu0 0.0
        %3306 = vmatpush1.msra.mxu0 0.0
        %3307 = vmatprep.subr.mxu0 0.0
        %3308 = vmatpush1.msra.mxu0 0.0
        %3309 = vmatprep.subr.mxu0 0.0
        %3310 = vmatpush1.msra.mxu0 0.0
        %3311 = vmatprep.subr.mxu0 0.0
        %3312 = vmatpush1.msra.mxu0 0.0
        %3313 = vmatprep.subr.mxu0 0.0
        %3314 = vmatpush1.msra.mxu0 0.0
        %3315 = vmatprep.subr.mxu0 0.0
        %3316 = vmatpush1.msra.mxu0 0.0
        %3317 = vmatprep.subr.mxu0 0.0
        %3318 = vmatpush1.msra.mxu0 0.0
        %3319 = vmatprep.subr.mxu0 0.0
        %3320 = vmatpush1.msra.mxu0 0.0
        %3321 = vmatprep.subr.mxu0 0.0
        %3322 = vmatpush1.msra.mxu0 0.0
        %3323 = vmatprep.subr.mxu0 0.0
        %3324 = vmatpush1.msra.mxu0 %v3001
        %3325 = vmatprep.subr.mxu0 0.0
        %3326 = vmatpush2.msra.mxu0 0.0
        %3327 = vmatprep.subr.mxu0 0.0
        %3328 = vmatpush2.msra.mxu0 0.0
        %3329 = vmatprep.subr.mxu0 0.0
        %3330 = vmatpush2.msra.mxu0 0.0
        %3331 = vmatprep.subr.mxu0 0.0
        %3332 = vmatpush2.msra.mxu0 0.0
        %3333 = vmatprep.subr.mxu0 0.0
        %3334 = vmatpush2.msra.mxu0 0.0
        %3335 = vmatprep.subr.mxu0 0.0
        %3336 = vmatpush2.msra.mxu0 0.0
        %3337 = vmatprep.subr.mxu0 0.0
        %3338 = vmatpush2.msra.mxu0 0.0
        %3339 = vmatprep.subr.mxu0 0.0
        %3340 = vmatpush2.msra.mxu0 0.0
        %3341 = vmatprep.subr.mxu0 0.0
        %3342 = vmatpush2.msra.mxu0 0.0
        %3343 = vmatprep.subr.mxu0 0.0
        %3344 = vmatpush2.msra.mxu0 0.0
        %3345 = vmatprep.subr.mxu0 0.0
        %3346 = vmatpush2.msra.mxu0 0.0
        %3347 = vmatprep.subr.mxu0 0.0
        %3348 = vmatpush2.msra.mxu0 0.0
        %3349 = vmatprep.subr.mxu0 0.0
        %3350 = vmatpush2.msra.mxu0 0.0
        %3351 = vmatprep.subr.mxu0 0.0
        %3352 = vmatpush2.msra.mxu0 0.0
        %3353 = vmatprep.subr.mxu0 0.0
        %3354 = vmatpush2.msra.mxu0 0.0
        %3355 = vmatprep.subr.mxu0 0.0
        %3356 = vmatpush2.msra.mxu0 0.0
        %3357 = vmatprep.mubr.f32.mxu0 0.0
        %3358 = vmatmul.mubr.f32.gmra.mxu0 %v3288
        %v3359 = vpop.f32.mrf.mxu0
        %v3360 = vadd.f32 0.0, %v3359
        %v3361 = vpop.f32.mrf.mxu0
        %3362 = vmatprep.mubr.f32.mxu0 0.0
        %3363 = vmatmul.mubr.f32.gmra.mxu0 %v3291
        %v3364 = vpop.f32.mrf.mxu0
        %v3365 = vadd.f32 0.0, %v3364
        %v3366 = vpop.f32.mrf.mxu0
        %3367 = vdwg.mxu0
        %3368 = vxpose.xlu0.b32.start [1/16] %v2888, 128
        %3369 = vxpose.xlu0.b32.cont [2/16] 0.0, 128
        %3370 = vxpose.xlu0.b32.cont [3/16] 0.0, 128
        %3371 = vxpose.xlu0.b32.cont [4/16] 0.0, 128
        %3372 = vxpose.xlu0.b32.cont [5/16] 0.0, 128
        %3373 = vxpose.xlu0.b32.cont [6/16] 0.0, 128
        %3374 = vxpose.xlu0.b32.cont [7/16] 0.0, 128
        %3375 = vxpose.xlu0.b32.cont [8/16] 0.0, 128
        %3376 = vxpose.xlu0.b32.cont [9/16] 0.0, 128
        %3377 = vxpose.xlu0.b32.cont [10/16] 0.0, 128
        %3378 = vxpose.xlu0.b32.cont [11/16] 0.0, 128
        %3379 = vxpose.xlu0.b32.cont [12/16] 0.0, 128
        %3380 = vxpose.xlu0.b32.cont [13/16] 0.0, 128
        %3381 = vxpose.xlu0.b32.cont [14/16] 0.0, 128
        %3382 = vxpose.xlu0.b32.cont [15/16] 0.0, 128
        %3383 = vxpose.xlu0.b32.end [16/16] 0.0, 128
        %v3384 = vpop.trf.xlu0
        %v3385 = vpop.trf.xlu0
        %v3386 = vpop.trf.xlu0
        %v3387 = vpop.trf.xlu0
        %v3388 = vpop.trf.xlu0
        %v3389 = vpop.trf.xlu0
        %v3390 = vpop.trf.xlu0
        %v3391 = vpop.trf.xlu0
        %v3392 = vpop.trf.xlu0
        %v3393 = vpop.trf.xlu0
        %v3394 = vpop.trf.xlu0
        %v3395 = vpop.trf.xlu0
        %v3396 = vpop.trf.xlu0
        %v3397 = vpop.trf.xlu0
        %v3398 = vpop.trf.xlu0
        %v3399 = vpop.trf.xlu0
        %v3401 = vsel %vm956, %v3384, 0
        %v3404 = vsel %vm956, %v3385, 0
        %3406 = vmatprep.subr.mxu0 0.0
        %3407 = vmatpush1.msra.mxu0 0.0
        %3408 = vmatprep.subr.mxu0 0.0
        %3409 = vmatpush1.msra.mxu0 0.0
        %3410 = vmatprep.subr.mxu0 0.0
        %3411 = vmatpush1.msra.mxu0 0.0
        %3412 = vmatprep.subr.mxu0 0.0
        %3413 = vmatpush1.msra.mxu0 0.0
        %3414 = vmatprep.subr.mxu0 0.0
        %3415 = vmatpush1.msra.mxu0 0.0
        %3416 = vmatprep.subr.mxu0 0.0
        %3417 = vmatpush1.msra.mxu0 0.0
        %3418 = vmatprep.subr.mxu0 0.0
        %3419 = vmatpush1.msra.mxu0 0.0
        %3420 = vmatprep.subr.mxu0 0.0
        %3421 = vmatpush1.msra.mxu0 0.0
        %3422 = vmatprep.subr.mxu0 0.0
        %3423 = vmatpush1.msra.mxu0 0.0
        %3424 = vmatprep.subr.mxu0 0.0
        %3425 = vmatpush1.msra.mxu0 0.0
        %3426 = vmatprep.subr.mxu0 0.0
        %3427 = vmatpush1.msra.mxu0 0.0
        %3428 = vmatprep.subr.mxu0 0.0
        %3429 = vmatpush1.msra.mxu0 0.0
        %3430 = vmatprep.subr.mxu0 0.0
        %3431 = vmatpush1.msra.mxu0 0.0
        %3432 = vmatprep.subr.mxu0 0.0
        %3433 = vmatpush1.msra.mxu0 0.0
        %3434 = vmatprep.subr.mxu0 0.0
        %3435 = vmatpush1.msra.mxu0 0.0
        %3436 = vmatprep.subr.mxu0 0.0
        %3437 = vmatpush1.msra.mxu0 %v3006
        %3438 = vmatprep.subr.mxu0 0.0
        %3439 = vmatpush2.msra.mxu0 0.0
        %3440 = vmatprep.subr.mxu0 0.0
        %3441 = vmatpush2.msra.mxu0 0.0
        %3442 = vmatprep.subr.mxu0 0.0
        %3443 = vmatpush2.msra.mxu0 0.0
        %3444 = vmatprep.subr.mxu0 0.0
        %3445 = vmatpush2.msra.mxu0 0.0
        %3446 = vmatprep.subr.mxu0 0.0
        %3447 = vmatpush2.msra.mxu0 0.0
        %3448 = vmatprep.subr.mxu0 0.0
        %3449 = vmatpush2.msra.mxu0 0.0
        %3450 = vmatprep.subr.mxu0 0.0
        %3451 = vmatpush2.msra.mxu0 0.0
        %3452 = vmatprep.subr.mxu0 0.0
        %3453 = vmatpush2.msra.mxu0 0.0
        %3454 = vmatprep.subr.mxu0 0.0
        %3455 = vmatpush2.msra.mxu0 0.0
        %3456 = vmatprep.subr.mxu0 0.0
        %3457 = vmatpush2.msra.mxu0 0.0
        %3458 = vmatprep.subr.mxu0 0.0
        %3459 = vmatpush2.msra.mxu0 0.0
        %3460 = vmatprep.subr.mxu0 0.0
        %3461 = vmatpush2.msra.mxu0 0.0
        %3462 = vmatprep.subr.mxu0 0.0
        %3463 = vmatpush2.msra.mxu0 0.0
        %3464 = vmatprep.subr.mxu0 0.0
        %3465 = vmatpush2.msra.mxu0 0.0
        %3466 = vmatprep.subr.mxu0 0.0
        %3467 = vmatpush2.msra.mxu0 0.0
        %3468 = vmatprep.subr.mxu0 0.0
        %3469 = vmatpush2.msra.mxu0 0.0
        %3470 = vmatprep.mubr.f32.mxu0 0.0
        %3471 = vmatmul.mubr.f32.gmra.mxu0 %v3401
        %v3472 = vpop.f32.mrf.mxu0
        %v3473 = vadd.f32 0.0, %v3472
        %v3474 = vpop.f32.mrf.mxu0
        %3475 = vmatprep.mubr.f32.mxu0 0.0
        %3476 = vmatmul.mubr.f32.gmra.mxu0 %v3404
        %v3477 = vpop.f32.mrf.mxu0
        %v3478 = vadd.f32 0.0, %v3477
        %v3479 = vpop.f32.mrf.mxu0
        %3480 = vdwg.mxu0
        %v3481 = vmul.f32 %v3134, 0.35355338
        %v3482 = vmul.f32 %v3139, 0.35355338
        %v3483 = vmul.f32 %v3247, 0.35355338
        %v3484 = vmul.f32 %v3252, 0.35355338
        %v3485 = vmul.f32 %v3360, 0.35355338
        %v3486 = vmul.f32 %v3365, 0.35355338
        %v3487 = vmul.f32 %v3473, 0.35355338
        %v3488 = vmul.f32 %v3478, 0.35355338
        %v3489 = vsel %vm956, %v3481, -inf
        %3490 = vmax.xlane.f32.xlu0 %v3489
        %v3491 = vpop.xlane.xlu0 %3490
        %v3492 = vsel %vm956, %v3482, -inf
        %3493 = vmax.xlane.f32.xlu0 %v3492
        %v3494 = vpop.xlane.xlu0 %3493
        %v3495 = vsel %vm956, %v3483, -inf
        %3496 = vmax.xlane.f32.xlu0 %v3495
        %v3497 = vpop.xlane.xlu0 %3496
        %v3498 = vsel %vm956, %v3484, -inf
        %3499 = vmax.xlane.f32.xlu0 %v3498
        %v3500 = vpop.xlane.xlu0 %3499
        %v3501 = vsel %vm956, %v3485, -inf
        %3502 = vmax.xlane.f32.xlu0 %v3501
        %v3503 = vpop.xlane.xlu0 %3502
        %v3504 = vsel %vm956, %v3486, -inf
        %3505 = vmax.xlane.f32.xlu0 %v3504
        %v3506 = vpop.xlane.xlu0 %3505
        %v3507 = vsel %vm956, %v3487, -inf
        %3508 = vmax.xlane.f32.xlu0 %v3507
        %v3509 = vpop.xlane.xlu0 %3508
        %v3510 = vsel %vm956, %v3488, -inf
        %3511 = vmax.xlane.f32.xlu0 %v3510
        %v3512 = vpop.xlane.xlu0 %3511
        %v3513 = vsub.f32 %v3481, %v3491
        %v3514 = vsub.f32 %v3482, %v3494
        %v3515 = vsub.f32 %v3483, %v3497
        %v3516 = vsub.f32 %v3484, %v3500
        %v3517 = vsub.f32 %v3485, %v3503
        %v3518 = vsub.f32 %v3486, %v3506
        %v3519 = vsub.f32 %v3487, %v3509
        %v3520 = vsub.f32 %v3488, %v3512
        %v3521 = vmul.f32 %v3513, 1.442695
        %v3522 = vpow.pop %v3521
        %v3523 = vmul.f32 %v3514, 1.442695
        %v3524 = vpow.pop %v3523
        %v3525 = vmul.f32 %v3515, 1.442695
        %v3526 = vpow.pop %v3525
        %v3527 = vmul.f32 %v3516, 1.442695
        %v3528 = vpow.pop %v3527
        %v3529 = vmul.f32 %v3517, 1.442695
        %v3530 = vpow.pop %v3529
        %v3531 = vmul.f32 %v3518, 1.442695
        %v3532 = vpow.pop %v3531
        %v3533 = vmul.f32 %v3519, 1.442695
        %v3534 = vpow.pop %v3533
        %v3535 = vmul.f32 %v3520, 1.442695
        %v3536 = vpow.pop %v3535
        %v3537 = vsel %vm956, %v3522, 0.0
        %3538 = vadd.xlane.f32.xlu0 %v3537
        %v3539 = vpop.xlane.xlu0 %3538
        %v3540 = vsel %vm956, %v3524, 0.0
        %3541 = vadd.xlane.f32.xlu0 %v3540
        %v3542 = vpop.xlane.xlu0 %3541
        %v3543 = vsel %vm956, %v3526, 0.0
        %3544 = vadd.xlane.f32.xlu0 %v3543
        %v3545 = vpop.xlane.xlu0 %3544
        %v3546 = vsel %vm956, %v3528, 0.0
        %3547 = vadd.xlane.f32.xlu0 %v3546
        %v3548 = vpop.xlane.xlu0 %3547
        %v3549 = vsel %vm956, %v3530, 0.0
        %3550 = vadd.xlane.f32.xlu0 %v3549
        %v3551 = vpop.xlane.xlu0 %3550
        %v3552 = vsel %vm956, %v3532, 0.0
        %3553 = vadd.xlane.f32.xlu0 %v3552
        %v3554 = vpop.xlane.xlu0 %3553
        %v3555 = vsel %vm956, %v3534, 0.0
        %3556 = vadd.xlane.f32.xlu0 %v3555
        %v3557 = vpop.xlane.xlu0 %3556
        %v3558 = vsel %vm956, %v3536, 0.0
        %3559 = vadd.xlane.f32.xlu0 %v3558
        %v3560 = vpop.xlane.xlu0 %3559
        %v3561 = vrcp.pop %v3539
        %v3562 = vrcp.pop %v3542
        %v3563 = vrcp.pop %v3545
        %v3564 = vrcp.pop %v3548
        %v3565 = vrcp.pop %v3551
        %v3566 = vrcp.pop %v3554
        %v3567 = vrcp.pop %v3557
        %v3568 = vrcp.pop %v3560
        %v3569 = vmul.f32 %v3522, %v3561
        %v3570 = vmul.f32 %v3524, %v3562
        %v3571 = vmul.f32 %v3526, %v3563
        %v3572 = vmul.f32 %v3528, %v3564
        %v3573 = vmul.f32 %v3530, %v3565
        %v3574 = vmul.f32 %v3532, %v3566
        %v3575 = vmul.f32 %v3534, %v3567
        %v3576 = vmul.f32 %v3536, %v3568
        %s3577 = scalar_lea.vmem %s548, 64 [#allocation2]
        %3578 = vst.msk [vmem:[%s3577] sm:$0xff] %vm956, %v3569
        %3579 = vst.msk [vmem:[%s3577 + $0x8] sm:$0xff] %vm956, %v3570
        %3580 = vst.msk [vmem:[%s3577 + $0x10] sm:$0xff] %vm956, %v3571
        %3581 = vst.msk [vmem:[%s3577 + $0x18] sm:$0xff] %vm956, %v3572
        %3582 = vst.msk [vmem:[%s3577 + $0x20] sm:$0xff] %vm956, %v3573
        %3583 = vst.msk [vmem:[%s3577 + $0x28] sm:$0xff] %vm956, %v3574
        %3584 = vst.msk [vmem:[%s3577 + $0x30] sm:$0xff] %vm956, %v3575
        %3585 = vst.msk [vmem:[%s3577 + $0x38] sm:$0xff] %vm956, %v3576
        %v3587 = vsel %vm956, %v3011, 0
        %v3590 = vsel %vm956, %v3569, 0
        %v3593 = vsel %vm956, %v3570, 0
        %3595 = vmatprep.subr.mxu0 0.0
        %3596 = vmatpush1.xpose.msra.mxu0 0.0
        %3597 = vmatprep.subr.mxu0 0.0
        %3598 = vmatpush1.xpose.msra.mxu0 0.0
        %3599 = vmatprep.subr.mxu0 0.0
        %3600 = vmatpush1.xpose.msra.mxu0 0.0
        %3601 = vmatprep.subr.mxu0 0.0
        %3602 = vmatpush1.xpose.msra.mxu0 0.0
        %3603 = vmatprep.subr.mxu0 0.0
        %3604 = vmatpush1.xpose.msra.mxu0 0.0
        %3605 = vmatprep.subr.mxu0 0.0
        %3606 = vmatpush1.xpose.msra.mxu0 0.0
        %3607 = vmatprep.subr.mxu0 0.0
        %3608 = vmatpush1.xpose.msra.mxu0 0.0
        %3609 = vmatprep.subr.mxu0 0.0
        %3610 = vmatpush1.xpose.msra.mxu0 0.0
        %3611 = vmatprep.subr.mxu0 0.0
        %3612 = vmatpush1.xpose.msra.mxu0 0.0
        %3613 = vmatprep.subr.mxu0 0.0
        %3614 = vmatpush1.xpose.msra.mxu0 0.0
        %3615 = vmatprep.subr.mxu0 0.0
        %3616 = vmatpush1.xpose.msra.mxu0 0.0
        %3617 = vmatprep.subr.mxu0 0.0
        %3618 = vmatpush1.xpose.msra.mxu0 0.0
        %3619 = vmatprep.subr.mxu0 0.0
        %3620 = vmatpush1.xpose.msra.mxu0 0.0
        %3621 = vmatprep.subr.mxu0 0.0
        %3622 = vmatpush1.xpose.msra.mxu0 0.0
        %3623 = vmatprep.subr.mxu0 0.0
        %3624 = vmatpush1.xpose.msra.mxu0 %v3593
        %3625 = vmatprep.subr.mxu0 0.0
        %3626 = vmatpush1.xpose.msra.mxu0 %v3590
        %3627 = vmatprep.subr.mxu0 0.0
        %3628 = vmatpush2.xpose.msra.mxu0 0.0
        %3629 = vmatprep.subr.mxu0 0.0
        %3630 = vmatpush2.xpose.msra.mxu0 0.0
        %3631 = vmatprep.subr.mxu0 0.0
        %3632 = vmatpush2.xpose.msra.mxu0 0.0
        %3633 = vmatprep.subr.mxu0 0.0
        %3634 = vmatpush2.xpose.msra.mxu0 0.0
        %3635 = vmatprep.subr.mxu0 0.0
        %3636 = vmatpush2.xpose.msra.mxu0 0.0
        %3637 = vmatprep.subr.mxu0 0.0
        %3638 = vmatpush2.xpose.msra.mxu0 0.0
        %3639 = vmatprep.subr.mxu0 0.0
        %3640 = vmatpush2.xpose.msra.mxu0 0.0
        %3641 = vmatprep.subr.mxu0 0.0
        %3642 = vmatpush2.xpose.msra.mxu0 0.0
        %3643 = vmatprep.subr.mxu0 0.0
        %3644 = vmatpush2.xpose.msra.mxu0 0.0
        %3645 = vmatprep.subr.mxu0 0.0
        %3646 = vmatpush2.xpose.msra.mxu0 0.0
        %3647 = vmatprep.subr.mxu0 0.0
        %3648 = vmatpush2.xpose.msra.mxu0 0.0
        %3649 = vmatprep.subr.mxu0 0.0
        %3650 = vmatpush2.xpose.msra.mxu0 0.0
        %3651 = vmatprep.subr.mxu0 0.0
        %3652 = vmatpush2.xpose.msra.mxu0 0.0
        %3653 = vmatprep.subr.mxu0 0.0
        %3654 = vmatpush2.xpose.msra.mxu0 0.0
        %3655 = vmatprep.subr.mxu0 0.0
        %3656 = vmatpush2.xpose.msra.mxu0 0.0
        %3657 = vmatprep.subr.mxu0 0.0
        %3658 = vmatpush2.xpose.msra.mxu0 0.0
        %3659 = vmatprep.mubr.f32.mxu0 0.0
        %3660 = vmatmul.mubr.f32.gmra.mxu0 %v3587
        %v3661 = vpop.f32.mrf.mxu0
        %v3662 = vadd.f32 0.0, %v3661
        %v3663 = vpop.f32.mrf.mxu0
        %3664 = vdwg.mxu0
        %v3666 = vsel %vm956, %v3016, 0
        %v3669 = vsel %vm956, %v3571, 0
        %v3672 = vsel %vm956, %v3572, 0
        %3674 = vmatprep.subr.mxu0 0.0
        %3675 = vmatpush1.xpose.msra.mxu0 0.0
        %3676 = vmatprep.subr.mxu0 0.0
        %3677 = vmatpush1.xpose.msra.mxu0 0.0
        %3678 = vmatprep.subr.mxu0 0.0
        %3679 = vmatpush1.xpose.msra.mxu0 0.0
        %3680 = vmatprep.subr.mxu0 0.0
        %3681 = vmatpush1.xpose.msra.mxu0 0.0
        %3682 = vmatprep.subr.mxu0 0.0
        %3683 = vmatpush1.xpose.msra.mxu0 0.0
        %3684 = vmatprep.subr.mxu0 0.0
        %3685 = vmatpush1.xpose.msra.mxu0 0.0
        %3686 = vmatprep.subr.mxu0 0.0
        %3687 = vmatpush1.xpose.msra.mxu0 0.0
        %3688 = vmatprep.subr.mxu0 0.0
        %3689 = vmatpush1.xpose.msra.mxu0 0.0
        %3690 = vmatprep.subr.mxu0 0.0
        %3691 = vmatpush1.xpose.msra.mxu0 0.0
        %3692 = vmatprep.subr.mxu0 0.0
        %3693 = vmatpush1.xpose.msra.mxu0 0.0
        %3694 = vmatprep.subr.mxu0 0.0
        %3695 = vmatpush1.xpose.msra.mxu0 0.0
        %3696 = vmatprep.subr.mxu0 0.0
        %3697 = vmatpush1.xpose.msra.mxu0 0.0
        %3698 = vmatprep.subr.mxu0 0.0
        %3699 = vmatpush1.xpose.msra.mxu0 0.0
        %3700 = vmatprep.subr.mxu0 0.0
        %3701 = vmatpush1.xpose.msra.mxu0 0.0
        %3702 = vmatprep.subr.mxu0 0.0
        %3703 = vmatpush1.xpose.msra.mxu0 %v3672
        %3704 = vmatprep.subr.mxu0 0.0
        %3705 = vmatpush1.xpose.msra.mxu0 %v3669
        %3706 = vmatprep.subr.mxu0 0.0
        %3707 = vmatpush2.xpose.msra.mxu0 0.0
        %3708 = vmatprep.subr.mxu0 0.0
        %3709 = vmatpush2.xpose.msra.mxu0 0.0
        %3710 = vmatprep.subr.mxu0 0.0
        %3711 = vmatpush2.xpose.msra.mxu0 0.0
        %3712 = vmatprep.subr.mxu0 0.0
        %3713 = vmatpush2.xpose.msra.mxu0 0.0
        %3714 = vmatprep.subr.mxu0 0.0
        %3715 = vmatpush2.xpose.msra.mxu0 0.0
        %3716 = vmatprep.subr.mxu0 0.0
        %3717 = vmatpush2.xpose.msra.mxu0 0.0
        %3718 = vmatprep.subr.mxu0 0.0
        %3719 = vmatpush2.xpose.msra.mxu0 0.0
        %3720 = vmatprep.subr.mxu0 0.0
        %3721 = vmatpush2.xpose.msra.mxu0 0.0
        %3722 = vmatprep.subr.mxu0 0.0
        %3723 = vmatpush2.xpose.msra.mxu0 0.0
        %3724 = vmatprep.subr.mxu0 0.0
        %3725 = vmatpush2.xpose.msra.mxu0 0.0
        %3726 = vmatprep.subr.mxu0 0.0
        %3727 = vmatpush2.xpose.msra.mxu0 0.0
        %3728 = vmatprep.subr.mxu0 0.0
        %3729 = vmatpush2.xpose.msra.mxu0 0.0
        %3730 = vmatprep.subr.mxu0 0.0
        %3731 = vmatpush2.xpose.msra.mxu0 0.0
        %3732 = vmatprep.subr.mxu0 0.0
        %3733 = vmatpush2.xpose.msra.mxu0 0.0
        %3734 = vmatprep.subr.mxu0 0.0
        %3735 = vmatpush2.xpose.msra.mxu0 0.0
        %3736 = vmatprep.subr.mxu0 0.0
        %3737 = vmatpush2.xpose.msra.mxu0 0.0
        %3738 = vmatprep.mubr.f32.mxu0 0.0
        %3739 = vmatmul.mubr.f32.gmra.mxu0 %v3666
        %v3740 = vpop.f32.mrf.mxu0
        %v3741 = vadd.f32 0.0, %v3740
        %v3742 = vpop.f32.mrf.mxu0
        %3743 = vdwg.mxu0
        %v3745 = vsel %vm956, %v3021, 0
        %v3748 = vsel %vm956, %v3573, 0
        %v3751 = vsel %vm956, %v3574, 0
        %3753 = vmatprep.subr.mxu0 0.0
        %3754 = vmatpush1.xpose.msra.mxu0 0.0
        %3755 = vmatprep.subr.mxu0 0.0
        %3756 = vmatpush1.xpose.msra.mxu0 0.0
        %3757 = vmatprep.subr.mxu0 0.0
        %3758 = vmatpush1.xpose.msra.mxu0 0.0
        %3759 = vmatprep.subr.mxu0 0.0
        %3760 = vmatpush1.xpose.msra.mxu0 0.0
        %3761 = vmatprep.subr.mxu0 0.0
        %3762 = vmatpush1.xpose.msra.mxu0 0.0
        %3763 = vmatprep.subr.mxu0 0.0
        %3764 = vmatpush1.xpose.msra.mxu0 0.0
        %3765 = vmatprep.subr.mxu0 0.0
        %3766 = vmatpush1.xpose.msra.mxu0 0.0
        %3767 = vmatprep.subr.mxu0 0.0
        %3768 = vmatpush1.xpose.msra.mxu0 0.0
        %3769 = vmatprep.subr.mxu0 0.0
        %3770 = vmatpush1.xpose.msra.mxu0 0.0
        %3771 = vmatprep.subr.mxu0 0.0
        %3772 = vmatpush1.xpose.msra.mxu0 0.0
        %3773 = vmatprep.subr.mxu0 0.0
        %3774 = vmatpush1.xpose.msra.mxu0 0.0
        %3775 = vmatprep.subr.mxu0 0.0
        %3776 = vmatpush1.xpose.msra.mxu0 0.0
        %3777 = vmatprep.subr.mxu0 0.0
        %3778 = vmatpush1.xpose.msra.mxu0 0.0
        %3779 = vmatprep.subr.mxu0 0.0
        %3780 = vmatpush1.xpose.msra.mxu0 0.0
        %3781 = vmatprep.subr.mxu0 0.0
        %3782 = vmatpush1.xpose.msra.mxu0 %v3751
        %3783 = vmatprep.subr.mxu0 0.0
        %3784 = vmatpush1.xpose.msra.mxu0 %v3748
        %3785 = vmatprep.subr.mxu0 0.0
        %3786 = vmatpush2.xpose.msra.mxu0 0.0
        %3787 = vmatprep.subr.mxu0 0.0
        %3788 = vmatpush2.xpose.msra.mxu0 0.0
        %3789 = vmatprep.subr.mxu0 0.0
        %3790 = vmatpush2.xpose.msra.mxu0 0.0
        %3791 = vmatprep.subr.mxu0 0.0
        %3792 = vmatpush2.xpose.msra.mxu0 0.0
        %3793 = vmatprep.subr.mxu0 0.0
        %3794 = vmatpush2.xpose.msra.mxu0 0.0
        %3795 = vmatprep.subr.mxu0 0.0
        %3796 = vmatpush2.xpose.msra.mxu0 0.0
        %3797 = vmatprep.subr.mxu0 0.0
        %3798 = vmatpush2.xpose.msra.mxu0 0.0
        %3799 = vmatprep.subr.mxu0 0.0
        %3800 = vmatpush2.xpose.msra.mxu0 0.0
        %3801 = vmatprep.subr.mxu0 0.0
        %3802 = vmatpush2.xpose.msra.mxu0 0.0
        %3803 = vmatprep.subr.mxu0 0.0
        %3804 = vmatpush2.xpose.msra.mxu0 0.0
        %3805 = vmatprep.subr.mxu0 0.0
        %3806 = vmatpush2.xpose.msra.mxu0 0.0
        %3807 = vmatprep.subr.mxu0 0.0
        %3808 = vmatpush2.xpose.msra.mxu0 0.0
        %3809 = vmatprep.subr.mxu0 0.0
        %3810 = vmatpush2.xpose.msra.mxu0 0.0
        %3811 = vmatprep.subr.mxu0 0.0
        %3812 = vmatpush2.xpose.msra.mxu0 0.0
        %3813 = vmatprep.subr.mxu0 0.0
        %3814 = vmatpush2.xpose.msra.mxu0 0.0
        %3815 = vmatprep.subr.mxu0 0.0
        %3816 = vmatpush2.xpose.msra.mxu0 0.0
        %3817 = vmatprep.mubr.f32.mxu0 0.0
        %3818 = vmatmul.mubr.f32.gmra.mxu0 %v3745
        %v3819 = vpop.f32.mrf.mxu0
        %v3820 = vadd.f32 0.0, %v3819
        %v3821 = vpop.f32.mrf.mxu0
        %3822 = vdwg.mxu0
        %v3824 = vsel %vm956, %v3026, 0
        %v3827 = vsel %vm956, %v3575, 0
        %v3830 = vsel %vm956, %v3576, 0
        %3832 = vmatprep.subr.mxu0 0.0
        %3833 = vmatpush1.xpose.msra.mxu0 0.0
        %3834 = vmatprep.subr.mxu0 0.0
        %3835 = vmatpush1.xpose.msra.mxu0 0.0
        %3836 = vmatprep.subr.mxu0 0.0
        %3837 = vmatpush1.xpose.msra.mxu0 0.0
        %3838 = vmatprep.subr.mxu0 0.0
        %3839 = vmatpush1.xpose.msra.mxu0 0.0
        %3840 = vmatprep.subr.mxu0 0.0
        %3841 = vmatpush1.xpose.msra.mxu0 0.0
        %3842 = vmatprep.subr.mxu0 0.0
        %3843 = vmatpush1.xpose.msra.mxu0 0.0
        %3844 = vmatprep.subr.mxu0 0.0
        %3845 = vmatpush1.xpose.msra.mxu0 0.0
        %3846 = vmatprep.subr.mxu0 0.0
        %3847 = vmatpush1.xpose.msra.mxu0 0.0
        %3848 = vmatprep.subr.mxu0 0.0
        %3849 = vmatpush1.xpose.msra.mxu0 0.0
        %3850 = vmatprep.subr.mxu0 0.0
        %3851 = vmatpush1.xpose.msra.mxu0 0.0
        %3852 = vmatprep.subr.mxu0 0.0
        %3853 = vmatpush1.xpose.msra.mxu0 0.0
        %3854 = vmatprep.subr.mxu0 0.0
        %3855 = vmatpush1.xpose.msra.mxu0 0.0
        %3856 = vmatprep.subr.mxu0 0.0
        %3857 = vmatpush1.xpose.msra.mxu0 0.0
        %3858 = vmatprep.subr.mxu0 0.0
        %3859 = vmatpush1.xpose.msra.mxu0 0.0
        %3860 = vmatprep.subr.mxu0 0.0
        %3861 = vmatpush1.xpose.msra.mxu0 %v3830
        %3862 = vmatprep.subr.mxu0 0.0
        %3863 = vmatpush1.xpose.msra.mxu0 %v3827
        %3864 = vmatprep.subr.mxu0 0.0
        %3865 = vmatpush2.xpose.msra.mxu0 0.0
        %3866 = vmatprep.subr.mxu0 0.0
        %3867 = vmatpush2.xpose.msra.mxu0 0.0
        %3868 = vmatprep.subr.mxu0 0.0
        %3869 = vmatpush2.xpose.msra.mxu0 0.0
        %3870 = vmatprep.subr.mxu0 0.0
        %3871 = vmatpush2.xpose.msra.mxu0 0.0
        %3872 = vmatprep.subr.mxu0 0.0
        %3873 = vmatpush2.xpose.msra.mxu0 0.0
        %3874 = vmatprep.subr.mxu0 0.0
        %3875 = vmatpush2.xpose.msra.mxu0 0.0
        %3876 = vmatprep.subr.mxu0 0.0
        %3877 = vmatpush2.xpose.msra.mxu0 0.0
        %3878 = vmatprep.subr.mxu0 0.0
        %3879 = vmatpush2.xpose.msra.mxu0 0.0
        %3880 = vmatprep.subr.mxu0 0.0
        %3881 = vmatpush2.xpose.msra.mxu0 0.0
        %3882 = vmatprep.subr.mxu0 0.0
        %3883 = vmatpush2.xpose.msra.mxu0 0.0
        %3884 = vmatprep.subr.mxu0 0.0
        %3885 = vmatpush2.xpose.msra.mxu0 0.0
        %3886 = vmatprep.subr.mxu0 0.0
        %3887 = vmatpush2.xpose.msra.mxu0 0.0
        %3888 = vmatprep.subr.mxu0 0.0
        %3889 = vmatpush2.xpose.msra.mxu0 0.0
        %3890 = vmatprep.subr.mxu0 0.0
        %3891 = vmatpush2.xpose.msra.mxu0 0.0
        %3892 = vmatprep.subr.mxu0 0.0
        %3893 = vmatpush2.xpose.msra.mxu0 0.0
        %3894 = vmatprep.subr.mxu0 0.0
        %3895 = vmatpush2.xpose.msra.mxu0 0.0
        %3896 = vmatprep.mubr.f32.mxu0 0.0
        %3897 = vmatmul.mubr.f32.gmra.mxu0 %v3824
        %v3898 = vpop.f32.mrf.mxu0
        %v3899 = vadd.f32 0.0, %v3898
        %v3900 = vpop.f32.mrf.mxu0
        %3901 = vdwg.mxu0
        %s3902 = scalar_lea.vmem %s7, 32
        %v3903 = vld [vmem:[%s3902] sm:$0xff]
        %v3904 = vld [vmem:[%s3902 + $0x8] sm:$0xff]
        %v3905 = vld [vmem:[%s3902 + $0x10] sm:$0xff]
        %v3906 = vld [vmem:[%s3902 + $0x18] sm:$0xff]
        %v3908 = vsel %vm689, %v3903, 0
        %v3911 = vsel %vm689, %v3904, 0
        %v3914 = vsel %vm689, %v3905, 0
        %v3917 = vsel %vm689, %v3906, 0
        %3919 = vmatprep.subr.mxu0 0.0
        %3920 = vmatpush1.msra.mxu0 0.0
        %3921 = vmatprep.subr.mxu0 0.0
        %3922 = vmatpush1.msra.mxu0 0.0
        %3923 = vmatprep.subr.mxu0 0.0
        %3924 = vmatpush1.msra.mxu0 0.0
        %3925 = vmatprep.subr.mxu0 0.0
        %3926 = vmatpush1.msra.mxu0 0.0
        %3927 = vmatprep.subr.mxu0 0.0
        %3928 = vmatpush1.msra.mxu0 0.0
        %3929 = vmatprep.subr.mxu0 0.0
        %3930 = vmatpush1.msra.mxu0 0.0
        %3931 = vmatprep.subr.mxu0 0.0
        %3932 = vmatpush1.msra.mxu0 0.0
        %3933 = vmatprep.subr.mxu0 0.0
        %3934 = vmatpush1.msra.mxu0 0.0
        %3935 = vmatprep.subr.mxu0 0.0
        %3936 = vmatpush1.msra.mxu0 0.0
        %3937 = vmatprep.subr.mxu0 0.0
        %3938 = vmatpush1.msra.mxu0 0.0
        %3939 = vmatprep.subr.mxu0 0.0
        %3940 = vmatpush1.msra.mxu0 0.0
        %3941 = vmatprep.subr.mxu0 0.0
        %3942 = vmatpush1.msra.mxu0 0.0
        %3943 = vmatprep.subr.mxu0 0.0
        %3944 = vmatpush1.msra.mxu0 %v3899
        %3945 = vmatprep.subr.mxu0 0.0
        %3946 = vmatpush1.msra.mxu0 %v3820
        %3947 = vmatprep.subr.mxu0 0.0
        %3948 = vmatpush1.msra.mxu0 %v3741
        %3949 = vmatprep.subr.mxu0 0.0
        %3950 = vmatpush1.msra.mxu0 %v3662
        %3951 = vmatprep.subr.mxu0 0.0
        %3952 = vmatpush2.msra.mxu0 0.0
        %3953 = vmatprep.subr.mxu0 0.0
        %3954 = vmatpush2.msra.mxu0 0.0
        %3955 = vmatprep.subr.mxu0 0.0
        %3956 = vmatpush2.msra.mxu0 0.0
        %3957 = vmatprep.subr.mxu0 0.0
        %3958 = vmatpush2.msra.mxu0 0.0
        %3959 = vmatprep.subr.mxu0 0.0
        %3960 = vmatpush2.msra.mxu0 0.0
        %3961 = vmatprep.subr.mxu0 0.0
        %3962 = vmatpush2.msra.mxu0 0.0
        %3963 = vmatprep.subr.mxu0 0.0
        %3964 = vmatpush2.msra.mxu0 0.0
        %3965 = vmatprep.subr.mxu0 0.0
        %3966 = vmatpush2.msra.mxu0 0.0
        %3967 = vmatprep.subr.mxu0 0.0
        %3968 = vmatpush2.msra.mxu0 0.0
        %3969 = vmatprep.subr.mxu0 0.0
        %3970 = vmatpush2.msra.mxu0 0.0
        %3971 = vmatprep.subr.mxu0 0.0
        %3972 = vmatpush2.msra.mxu0 0.0
        %3973 = vmatprep.subr.mxu0 0.0
        %3974 = vmatpush2.msra.mxu0 0.0
        %3975 = vmatprep.subr.mxu0 0.0
        %3976 = vmatpush2.msra.mxu0 0.0
        %3977 = vmatprep.subr.mxu0 0.0
        %3978 = vmatpush2.msra.mxu0 0.0
        %3979 = vmatprep.subr.mxu0 0.0
        %3980 = vmatpush2.msra.mxu0 0.0
        %3981 = vmatprep.subr.mxu0 0.0
        %3982 = vmatpush2.msra.mxu0 0.0
        %3983 = vmatprep.mubr.f32.mxu0 0.0
        %3984 = vmatmul.mubr.f32.gmra.mxu0 %v3908
        %v3985 = vpop.f32.mrf.mxu0
        %v3986 = vadd.f32 %v2785, %v3985
        %v3987 = vpop.f32.mrf.mxu0
        %3988 = vmatprep.mubr.f32.mxu0 0.0
        %3989 = vmatmul.mubr.f32.gmra.mxu0 %v3911
        %v3990 = vpop.f32.mrf.mxu0
        %v3991 = vadd.f32 %v2786, %v3990
        %v3992 = vpop.f32.mrf.mxu0
        %3993 = vmatprep.mubr.f32.mxu0 0.0
        %3994 = vmatmul.mubr.f32.gmra.mxu0 %v3914
        %v3995 = vpop.f32.mrf.mxu0
        %v3996 = vadd.f32 %v2787, %v3995
        %v3997 = vpop.f32.mrf.mxu0
        %3998 = vmatprep.mubr.f32.mxu0 0.0
        %3999 = vmatmul.mubr.f32.gmra.mxu0 %v3917
        %v4000 = vpop.f32.mrf.mxu0
        %v4001 = vadd.f32 %v2788, %v4000
        %v4002 = vpop.f32.mrf.mxu0
        %4003 = vdwg.mxu0
        %s4004 = scalar_lea.vmem %s9, 16
        %v4005 = vld [vmem:[%s4004] sm:$0xff]
        %v4006 = vld [vmem:[%s4004 + $0x8] sm:$0xff]
        %v4008 = vsel %vm585, %v3986, 0
        %v4011 = vsel %vm585, %v3991, 0
        %v4014 = vsel %vm585, %v3996, 0
        %v4017 = vsel %vm585, %v4001, 0
        %4019 = vmatprep.subr.mxu0 0.0
        %4020 = vmatpush1.msra.mxu0 0.0
        %4021 = vmatprep.subr.mxu0 0.0
        %4022 = vmatpush1.msra.mxu0 0.0
        %4023 = vmatprep.subr.mxu0 0.0
        %4024 = vmatpush1.msra.mxu0 0.0
        %4025 = vmatprep.subr.mxu0 0.0
        %4026 = vmatpush1.msra.mxu0 0.0
        %4027 = vmatprep.subr.mxu0 0.0
        %4028 = vmatpush1.msra.mxu0 0.0
        %4029 = vmatprep.subr.mxu0 0.0
        %4030 = vmatpush1.msra.mxu0 0.0
        %4031 = vmatprep.subr.mxu0 0.0
        %4032 = vmatpush1.msra.mxu0 0.0
        %4033 = vmatprep.subr.mxu0 0.0
        %4034 = vmatpush1.msra.mxu0 0.0
        %4035 = vmatprep.subr.mxu0 0.0
        %4036 = vmatpush1.msra.mxu0 0.0
        %4037 = vmatprep.subr.mxu0 0.0
        %4038 = vmatpush1.msra.mxu0 0.0
        %4039 = vmatprep.subr.mxu0 0.0
        %4040 = vmatpush1.msra.mxu0 0.0
        %4041 = vmatprep.subr.mxu0 0.0
        %4042 = vmatpush1.msra.mxu0 0.0
        %4043 = vmatprep.subr.mxu0 0.0
        %4044 = vmatpush1.msra.mxu0 0.0
        %4045 = vmatprep.subr.mxu0 0.0
        %4046 = vmatpush1.msra.mxu0 0.0
        %4047 = vmatprep.subr.mxu0 0.0
        %4048 = vmatpush1.msra.mxu0 %v4006
        %4049 = vmatprep.subr.mxu0 0.0
        %4050 = vmatpush1.msra.mxu0 %v4005
        %4051 = vmatprep.subr.mxu0 0.0
        %4052 = vmatpush2.msra.mxu0 0.0
        %4053 = vmatprep.subr.mxu0 0.0
        %4054 = vmatpush2.msra.mxu0 0.0
        %4055 = vmatprep.subr.mxu0 0.0
        %4056 = vmatpush2.msra.mxu0 0.0
        %4057 = vmatprep.subr.mxu0 0.0
        %4058 = vmatpush2.msra.mxu0 0.0
        %4059 = vmatprep.subr.mxu0 0.0
        %4060 = vmatpush2.msra.mxu0 0.0
        %4061 = vmatprep.subr.mxu0 0.0
        %4062 = vmatpush2.msra.mxu0 0.0
        %4063 = vmatprep.subr.mxu0 0.0
        %4064 = vmatpush2.msra.mxu0 0.0
        %4065 = vmatprep.subr.mxu0 0.0
        %4066 = vmatpush2.msra.mxu0 0.0
        %4067 = vmatprep.subr.mxu0 0.0
        %4068 = vmatpush2.msra.mxu0 0.0
        %4069 = vmatprep.subr.mxu0 0.0
        %4070 = vmatpush2.msra.mxu0 0.0
        %4071 = vmatprep.subr.mxu0 0.0
        %4072 = vmatpush2.msra.mxu0 0.0
        %4073 = vmatprep.subr.mxu0 0.0
        %4074 = vmatpush2.msra.mxu0 0.0
        %4075 = vmatprep.subr.mxu0 0.0
        %4076 = vmatpush2.msra.mxu0 0.0
        %4077 = vmatprep.subr.mxu0 0.0
        %4078 = vmatpush2.msra.mxu0 0.0
        %4079 = vmatprep.subr.mxu0 0.0
        %4080 = vmatpush2.msra.mxu0 0.0
        %4081 = vmatprep.subr.mxu0 0.0
        %4082 = vmatpush2.msra.mxu0 0.0
        %4083 = vmatprep.mubr.f32.mxu0 0.0
        %4084 = vmatmul.mubr.f32.gmra.mxu0 %v4008
        %v4085 = vpop.f32.mrf.mxu0
        %v4086 = vadd.f32 0.0, %v4085
        %v4087 = vpop.f32.mrf.mxu0
        %4088 = vmatprep.mubr.f32.mxu0 0.0
        %4089 = vmatmul.mubr.f32.gmra.mxu0 %v4011
        %v4090 = vpop.f32.mrf.mxu0
        %v4091 = vadd.f32 0.0, %v4090
        %v4092 = vpop.f32.mrf.mxu0
        %4093 = vmatprep.mubr.f32.mxu0 0.0
        %4094 = vmatmul.mubr.f32.gmra.mxu0 %v4014
        %v4095 = vpop.f32.mrf.mxu0
        %v4096 = vadd.f32 0.0, %v4095
        %v4097 = vpop.f32.mrf.mxu0
        %4098 = vmatprep.mubr.f32.mxu0 0.0
        %4099 = vmatmul.mubr.f32.gmra.mxu0 %v4017
        %v4100 = vpop.f32.mrf.mxu0
        %v4101 = vadd.f32 0.0, %v4100
        %v4102 = vpop.f32.mrf.mxu0
        %4103 = vdwg.mxu0
        %4108 = vrot.lane.b32.xlu0 %v4086, 112
        %v4109 = vpop.permute.xlu0 %4108
        %4110 = vrot.lane.b32.xlu0 %v4091, 112
        %v4111 = vpop.permute.xlu0 %4110
        %4112 = vrot.lane.b32.xlu0 %v4096, 112
        %v4113 = vpop.permute.xlu0 %4112
        %4114 = vrot.lane.b32.xlu0 %v4101, 112
        %v4115 = vpop.permute.xlu0 %4114
        %4120 = vrot.lane.b32.xlu0 %v4086, 96
        %v4121 = vpop.permute.xlu0 %4120
        %4122 = vrot.lane.b32.xlu0 %v4091, 96
        %v4123 = vpop.permute.xlu0 %4122
        %4124 = vrot.lane.b32.xlu0 %v4096, 96
        %v4125 = vpop.permute.xlu0 %4124
        %4126 = vrot.lane.b32.xlu0 %v4101, 96
        %v4127 = vpop.permute.xlu0 %4126
        %s4132 = scalar_lea.vmem %s8, 64
        %v4133 = vld [vmem:[%s4132] sm:$0xff]
        %v4134 = vld [vmem:[%s4132 + $0x8] sm:$0xff]
        %v4135 = vld [vmem:[%s4132 + $0x10] sm:$0xff]
        %v4136 = vld [vmem:[%s4132 + $0x18] sm:$0xff]
        %v4137 = vld [vmem:[%s4132 + $0x20] sm:$0xff]
        %v4138 = vld [vmem:[%s4132 + $0x28] sm:$0xff]
        %v4139 = vld [vmem:[%s4132 + $0x30] sm:$0xff]
        %v4140 = vld [vmem:[%s4132 + $0x38] sm:$0xff]
        %v4142 = vsel %vm2033, %v4133, 0
        %v4145 = vsel %vm2033, %v4134, 0
        %v4148 = vsel %vm2033, %v4135, 0
        %v4151 = vsel %vm2033, %v4136, 0
        %v4154 = vsel %vm2033, %v4137, 0
        %v4157 = vsel %vm2033, %v4138, 0
        %v4160 = vsel %vm2033, %v4139, 0
        %v4163 = vsel %vm2033, %v4140, 0
        %4165 = vmatprep.subr.mxu0 0.0
        %4166 = vmatpush1.msra.mxu0 0.0
        %4167 = vmatprep.subr.mxu0 0.0
        %4168 = vmatpush1.msra.mxu0 0.0
        %4169 = vmatprep.subr.mxu0 0.0
        %4170 = vmatpush1.msra.mxu0 0.0
        %4171 = vmatprep.subr.mxu0 0.0
        %4172 = vmatpush1.msra.mxu0 0.0
        %4173 = vmatprep.subr.mxu0 0.0
        %4174 = vmatpush1.msra.mxu0 %v4127
        %4175 = vmatprep.subr.mxu0 0.0
        %4176 = vmatpush1.msra.mxu0 %v4125
        %4177 = vmatprep.subr.mxu0 0.0
        %4178 = vmatpush1.msra.mxu0 %v4123
        %4179 = vmatprep.subr.mxu0 0.0
        %4180 = vmatpush1.msra.mxu0 %v4121
        %4181 = vmatprep.subr.mxu0 0.0
        %4182 = vmatpush1.msra.mxu0 %v4115
        %4183 = vmatprep.subr.mxu0 0.0
        %4184 = vmatpush1.msra.mxu0 %v4113
        %4185 = vmatprep.subr.mxu0 0.0
        %4186 = vmatpush1.msra.mxu0 %v4111
        %4187 = vmatprep.subr.mxu0 0.0
        %4188 = vmatpush1.msra.mxu0 %v4109
        %4189 = vmatprep.subr.mxu0 0.0
        %4190 = vmatpush1.msra.mxu0 %v4101
        %4191 = vmatprep.subr.mxu0 0.0
        %4192 = vmatpush1.msra.mxu0 %v4096
        %4193 = vmatprep.subr.mxu0 0.0
        %4194 = vmatpush1.msra.mxu0 %v4091
        %4195 = vmatprep.subr.mxu0 0.0
        %4196 = vmatpush1.msra.mxu0 %v4086
        %4197 = vmatprep.subr.mxu0 0.0
        %4198 = vmatpush2.msra.mxu0 0.0
        %4199 = vmatprep.subr.mxu0 0.0
        %4200 = vmatpush2.msra.mxu0 0.0
        %4201 = vmatprep.subr.mxu0 0.0
        %4202 = vmatpush2.msra.mxu0 0.0
        %4203 = vmatprep.subr.mxu0 0.0
        %4204 = vmatpush2.msra.mxu0 0.0
        %4205 = vmatprep.subr.mxu0 0.0
        %4206 = vmatpush2.msra.mxu0 0.0
        %4207 = vmatprep.subr.mxu0 0.0
        %4208 = vmatpush2.msra.mxu0 0.0
        %4209 = vmatprep.subr.mxu0 0.0
        %4210 = vmatpush2.msra.mxu0 0.0
        %4211 = vmatprep.subr.mxu0 0.0
        %4212 = vmatpush2.msra.mxu0 0.0
        %4213 = vmatprep.subr.mxu0 0.0
        %4214 = vmatpush2.msra.mxu0 0.0
        %4215 = vmatprep.subr.mxu0 0.0
        %4216 = vmatpush2.msra.mxu0 0.0
        %4217 = vmatprep.subr.mxu0 0.0
        %4218 = vmatpush2.msra.mxu0 0.0
        %4219 = vmatprep.subr.mxu0 0.0
        %4220 = vmatpush2.msra.mxu0 0.0
        %4221 = vmatprep.subr.mxu0 0.0
        %4222 = vmatpush2.msra.mxu0 0.0
        %4223 = vmatprep.subr.mxu0 0.0
        %4224 = vmatpush2.msra.mxu0 0.0
        %4225 = vmatprep.subr.mxu0 0.0
        %4226 = vmatpush2.msra.mxu0 0.0
        %4227 = vmatprep.subr.mxu0 0.0
        %4228 = vmatpush2.msra.mxu0 0.0
        %4229 = vmatprep.mubr.f32.mxu0 0.0
        %4230 = vmatmul.mubr.f32.gmra.mxu0 %v4142
        %v4231 = vpop.f32.mrf.mxu0
        %v4232 = vadd.f32 0.0, %v4231
        %v4233 = vpop.f32.mrf.mxu0
        %4234 = vmatprep.mubr.f32.mxu0 0.0
        %4235 = vmatmul.mubr.f32.gmra.mxu0 %v4145
        %v4236 = vpop.f32.mrf.mxu0
        %v4237 = vadd.f32 0.0, %v4236
        %v4238 = vpop.f32.mrf.mxu0
        %4239 = vmatprep.mubr.f32.mxu0 0.0
        %4240 = vmatmul.mubr.f32.gmra.mxu0 %v4148
        %v4241 = vpop.f32.mrf.mxu0
        %v4242 = vadd.f32 0.0, %v4241
        %v4243 = vpop.f32.mrf.mxu0
        %4244 = vmatprep.mubr.f32.mxu0 0.0
        %4245 = vmatmul.mubr.f32.gmra.mxu0 %v4151
        %v4246 = vpop.f32.mrf.mxu0
        %v4247 = vadd.f32 0.0, %v4246
        %v4248 = vpop.f32.mrf.mxu0
        %4249 = vmatprep.mubr.f32.mxu0 0.0
        %4250 = vmatmul.mubr.f32.gmra.mxu0 %v4154
        %v4251 = vpop.f32.mrf.mxu0
        %v4252 = vadd.f32 0.0, %v4251
        %v4253 = vpop.f32.mrf.mxu0
        %4254 = vmatprep.mubr.f32.mxu0 0.0
        %4255 = vmatmul.mubr.f32.gmra.mxu0 %v4157
        %v4256 = vpop.f32.mrf.mxu0
        %v4257 = vadd.f32 0.0, %v4256
        %v4258 = vpop.f32.mrf.mxu0
        %4259 = vmatprep.mubr.f32.mxu0 0.0
        %4260 = vmatmul.mubr.f32.gmra.mxu0 %v4160
        %v4261 = vpop.f32.mrf.mxu0
        %v4262 = vadd.f32 0.0, %v4261
        %v4263 = vpop.f32.mrf.mxu0
        %4264 = vmatprep.mubr.f32.mxu0 0.0
        %4265 = vmatmul.mubr.f32.gmra.mxu0 %v4163
        %v4266 = vpop.f32.mrf.mxu0
        %v4267 = vadd.f32 0.0, %v4266
        %v4268 = vpop.f32.mrf.mxu0
        %4269 = vdwg.mxu0
        %s4270 = scalar_lea.vmem %s10, 64
        %v4271 = vld [vmem:[%s4270] sm:$0xff]
        %v4272 = vld [vmem:[%s4270 + $0x8] sm:$0xff]
        %v4273 = vld [vmem:[%s4270 + $0x10] sm:$0xff]
        %v4274 = vld [vmem:[%s4270 + $0x18] sm:$0xff]
        %v4275 = vld [vmem:[%s4270 + $0x20] sm:$0xff]
        %v4276 = vld [vmem:[%s4270 + $0x28] sm:$0xff]
        %v4277 = vld [vmem:[%s4270 + $0x30] sm:$0xff]
        %v4278 = vld [vmem:[%s4270 + $0x38] sm:$0xff]
        %s4279 = scalar_lea.vmem %s11, 64
        %v4280 = vld [vmem:[%s4279] sm:$0xff]
        %v4281 = vld [vmem:[%s4279 + $0x8] sm:$0xff]
        %v4282 = vld [vmem:[%s4279 + $0x10] sm:$0xff]
        %v4283 = vld [vmem:[%s4279 + $0x18] sm:$0xff]
        %v4284 = vld [vmem:[%s4279 + $0x20] sm:$0xff]
        %v4285 = vld [vmem:[%s4279 + $0x28] sm:$0xff]
        %v4286 = vld [vmem:[%s4279 + $0x30] sm:$0xff]
        %v4287 = vld [vmem:[%s4279 + $0x38] sm:$0xff]
        %v4288 = vsel %vm585, %v4232, 0.0
        %4289 = vadd.xlane.f32.xlu0 %v4288
        %v4290 = vpop.xlane.xlu0 %4289
        %v4291 = vsel %vm585, %v4237, 0.0
        %4292 = vadd.xlane.f32.xlu0 %v4291
        %v4293 = vpop.xlane.xlu0 %4292
        %v4294 = vsel %vm585, %v4242, 0.0
        %4295 = vadd.xlane.f32.xlu0 %v4294
        %v4296 = vpop.xlane.xlu0 %4295
        %v4297 = vsel %vm585, %v4247, 0.0
        %4298 = vadd.xlane.f32.xlu0 %v4297
        %v4299 = vpop.xlane.xlu0 %4298
        %v4300 = vsel %vm585, %v4252, 0.0
        %4301 = vadd.xlane.f32.xlu0 %v4300
        %v4302 = vpop.xlane.xlu0 %4301
        %v4303 = vsel %vm585, %v4257, 0.0
        %4304 = vadd.xlane.f32.xlu0 %v4303
        %v4305 = vpop.xlane.xlu0 %4304
        %v4306 = vsel %vm585, %v4262, 0.0
        %4307 = vadd.xlane.f32.xlu0 %v4306
        %v4308 = vpop.xlane.xlu0 %4307
        %v4309 = vsel %vm585, %v4267, 0.0
        %4310 = vadd.xlane.f32.xlu0 %v4309
        %v4311 = vpop.xlane.xlu0 %4310
        %v4312 = vadd.f32 %v4290, %v4293
        %v4313 = vrot.slane %v4312, 4
        %v4314 = vadd.f32 %v4312, %v4313
        %v4315 = vrot.slane %v4314, 2
        %v4316 = vadd.f32 %v4314, %v4315
        %v4317 = vrot.slane %v4316, 1
        %v4318 = vadd.f32 %v4316, %v4317
        %v4319 = vadd.f32 %v4296, %v4299
        %v4320 = vrot.slane %v4319, 4
        %v4321 = vadd.f32 %v4319, %v4320
        %v4322 = vrot.slane %v4321, 2
        %v4323 = vadd.f32 %v4321, %v4322
        %v4324 = vrot.slane %v4323, 1
        %v4325 = vadd.f32 %v4323, %v4324
        %v4326 = vadd.f32 %v4302, %v4305
        %v4327 = vrot.slane %v4326, 4
        %v4328 = vadd.f32 %v4326, %v4327
        %v4329 = vrot.slane %v4328, 2
        %v4330 = vadd.f32 %v4328, %v4329
        %v4331 = vrot.slane %v4330, 1
        %v4332 = vadd.f32 %v4330, %v4331
        %v4333 = vadd.f32 %v4308, %v4311
        %v4334 = vrot.slane %v4333, 4
        %v4335 = vadd.f32 %v4333, %v4334
        %v4336 = vrot.slane %v4335, 2
        %v4337 = vadd.f32 %v4335, %v4336
        %v4338 = vrot.slane %v4337, 1
        %v4339 = vadd.f32 %v4337, %v4338
        %v4340 = vmul.f32 %v4318, 0.00390625
        %v4341 = vmul.f32 %v4325, 0.00390625
        %v4342 = vmul.f32 %v4332, 0.00390625
        %v4343 = vmul.f32 %v4339, 0.00390625
        %v4344 = vsub.f32 %v4232, %v4340
        %v4345 = vsub.f32 %v4237, %v4340
        %v4346 = vsub.f32 %v4242, %v4341
        %v4347 = vsub.f32 %v4247, %v4341
        %v4348 = vsub.f32 %v4252, %v4342
        %v4349 = vsub.f32 %v4257, %v4342
        %v4350 = vsub.f32 %v4262, %v4343
        %v4351 = vsub.f32 %v4267, %v4343
        %v4352 = vmul.f32 %v4344, %v4344
        %v4353 = vmul.f32 %v4345, %v4345
        %v4354 = vmul.f32 %v4346, %v4346
        %v4355 = vmul.f32 %v4347, %v4347
        %v4356 = vmul.f32 %v4348, %v4348
        %v4357 = vmul.f32 %v4349, %v4349
        %v4358 = vmul.f32 %v4350, %v4350
        %v4359 = vmul.f32 %v4351, %v4351
        %v4360 = vsel %vm585, %v4352, 0.0
        %4361 = vadd.xlane.f32.xlu0 %v4360
        %v4362 = vpop.xlane.xlu0 %4361
        %v4363 = vsel %vm585, %v4353, 0.0
        %4364 = vadd.xlane.f32.xlu0 %v4363
        %v4365 = vpop.xlane.xlu0 %4364
        %v4366 = vsel %vm585, %v4354, 0.0
        %4367 = vadd.xlane.f32.xlu0 %v4366
        %v4368 = vpop.xlane.xlu0 %4367
        %v4369 = vsel %vm585, %v4355, 0.0
        %4370 = vadd.xlane.f32.xlu0 %v4369
        %v4371 = vpop.xlane.xlu0 %4370
        %v4372 = vsel %vm585, %v4356, 0.0
        %4373 = vadd.xlane.f32.xlu0 %v4372
        %v4374 = vpop.xlane.xlu0 %4373
        %v4375 = vsel %vm585, %v4357, 0.0
        %4376 = vadd.xlane.f32.xlu0 %v4375
        %v4377 = vpop.xlane.xlu0 %4376
        %v4378 = vsel %vm585, %v4358, 0.0
        %4379 = vadd.xlane.f32.xlu0 %v4378
        %v4380 = vpop.xlane.xlu0 %4379
        %v4381 = vsel %vm585, %v4359, 0.0
        %4382 = vadd.xlane.f32.xlu0 %v4381
        %v4383 = vpop.xlane.xlu0 %4382
        %v4384 = vadd.f32 %v4362, %v4365
        %v4385 = vrot.slane %v4384, 4
        %v4386 = vadd.f32 %v4384, %v4385
        %v4387 = vrot.slane %v4386, 2
        %v4388 = vadd.f32 %v4386, %v4387
        %v4389 = vrot.slane %v4388, 1
        %v4390 = vadd.f32 %v4388, %v4389
        %v4391 = vadd.f32 %v4368, %v4371
        %v4392 = vrot.slane %v4391, 4
        %v4393 = vadd.f32 %v4391, %v4392
        %v4394 = vrot.slane %v4393, 2
        %v4395 = vadd.f32 %v4393, %v4394
        %v4396 = vrot.slane %v4395, 1
        %v4397 = vadd.f32 %v4395, %v4396
        %v4398 = vadd.f32 %v4374, %v4377
        %v4399 = vrot.slane %v4398, 4
        %v4400 = vadd.f32 %v4398, %v4399
        %v4401 = vrot.slane %v4400, 2
        %v4402 = vadd.f32 %v4400, %v4401
        %v4403 = vrot.slane %v4402, 1
        %v4404 = vadd.f32 %v4402, %v4403
        %v4405 = vadd.f32 %v4380, %v4383
        %v4406 = vrot.slane %v4405, 4
        %v4407 = vadd.f32 %v4405, %v4406
        %v4408 = vrot.slane %v4407, 2
        %v4409 = vadd.f32 %v4407, %v4408
        %v4410 = vrot.slane %v4409, 1
        %v4411 = vadd.f32 %v4409, %v4410
        %v4412 = vmul.f32 %v4390, 0.00390625
        %v4413 = vmul.f32 %v4397, 0.00390625
        %v4414 = vmul.f32 %v4404, 0.00390625
        %v4415 = vmul.f32 %v4411, 0.00390625
        %v4416 = vadd.f32 %v4412, 1e-05
        %v4417 = vadd.f32 %v4413, 1e-05
        %v4418 = vadd.f32 %v4414, 1e-05
        %v4419 = vadd.f32 %v4415, 1e-05
        %v4420 = vrsqrt.pop %v4416
        %v4421 = vrsqrt.pop %v4417
        %v4422 = vrsqrt.pop %v4418
        %v4423 = vrsqrt.pop %v4419
        %v4424 = vmul.f32 %v4344, %v4420
        %v4425 = vmul.f32 %v4345, %v4420
        %v4426 = vmul.f32 %v4346, %v4421
        %v4427 = vmul.f32 %v4347, %v4421
        %v4428 = vmul.f32 %v4348, %v4422
        %v4429 = vmul.f32 %v4349, %v4422
        %v4430 = vmul.f32 %v4350, %v4423
        %v4431 = vmul.f32 %v4351, %v4423
        %4433 = vset.pattern.permute.xlu0 0
        %4434 = vperm.xlu0 %4433, %v4271
        %v4435 = vpop.permute.xlu0 %4434
        %4438 = vset.pattern.permute.xlu0 0
        %4439 = vperm.xlu0 %4438, %v4272
        %v4440 = vpop.permute.xlu0 %4439
        %4443 = vset.pattern.permute.xlu0 0
        %4444 = vperm.xlu0 %4443, %v4273
        %v4445 = vpop.permute.xlu0 %4444
        %4448 = vset.pattern.permute.xlu0 0
        %4449 = vperm.xlu0 %4448, %v4274
        %v4450 = vpop.permute.xlu0 %4449
        %4453 = vset.pattern.permute.xlu0 0
        %4454 = vperm.xlu0 %4453, %v4275
        %v4455 = vpop.permute.xlu0 %4454
        %4458 = vset.pattern.permute.xlu0 0
        %4459 = vperm.xlu0 %4458, %v4276
        %v4460 = vpop.permute.xlu0 %4459
        %4463 = vset.pattern.permute.xlu0 0
        %4464 = vperm.xlu0 %4463, %v4277
        %v4465 = vpop.permute.xlu0 %4464
        %4468 = vset.pattern.permute.xlu0 0
        %4469 = vperm.xlu0 %4468, %v4278
        %v4470 = vpop.permute.xlu0 %4469
        %v4472 = vmul.f32 %v4424, %v4435
        %v4473 = vmul.f32 %v4425, %v4440
        %v4474 = vmul.f32 %v4426, %v4445
        %v4475 = vmul.f32 %v4427, %v4450
        %v4476 = vmul.f32 %v4428, %v4455
        %v4477 = vmul.f32 %v4429, %v4460
        %v4478 = vmul.f32 %v4430, %v4465
        %v4479 = vmul.f32 %v4431, %v4470
        %4481 = vset.pattern.permute.xlu0 0
        %4482 = vperm.xlu0 %4481, %v4280
        %v4483 = vpop.permute.xlu0 %4482
        %4486 = vset.pattern.permute.xlu0 0
        %4487 = vperm.xlu0 %4486, %v4281
        %v4488 = vpop.permute.xlu0 %4487
        %4491 = vset.pattern.permute.xlu0 0
        %4492 = vperm.xlu0 %4491, %v4282
        %v4493 = vpop.permute.xlu0 %4492
        %4496 = vset.pattern.permute.xlu0 0
        %4497 = vperm.xlu0 %4496, %v4283
        %v4498 = vpop.permute.xlu0 %4497
        %4501 = vset.pattern.permute.xlu0 0
        %4502 = vperm.xlu0 %4501, %v4284
        %v4503 = vpop.permute.xlu0 %4502
        %4506 = vset.pattern.permute.xlu0 0
        %4507 = vperm.xlu0 %4506, %v4285
        %v4508 = vpop.permute.xlu0 %4507
        %4511 = vset.pattern.permute.xlu0 0
        %4512 = vperm.xlu0 %4511, %v4286
        %v4513 = vpop.permute.xlu0 %4512
        %4516 = vset.pattern.permute.xlu0 0
        %4517 = vperm.xlu0 %4516, %v4287
        %v4518 = vpop.permute.xlu0 %4517
        %v4520 = vadd.f32 %v4472, %v4483
        %v4521 = vadd.f32 %v4473, %v4488
        %v4522 = vadd.f32 %v4474, %v4493
        %v4523 = vadd.f32 %v4475, %v4498
        %v4524 = vadd.f32 %v4476, %v4503
        %v4525 = vadd.f32 %v4477, %v4508
        %v4526 = vadd.f32 %v4478, %v4513
        %v4527 = vadd.f32 %v4479, %v4518
        %v4528 = vmax.f32 %v4520, 0.0
        %v4529 = vmax.f32 %v4521, 0.0
        %v4530 = vmax.f32 %v4522, 0.0
        %v4531 = vmax.f32 %v4523, 0.0
        %v4532 = vmax.f32 %v4524, 0.0
        %v4533 = vmax.f32 %v4525, 0.0
        %v4534 = vmax.f32 %v4526, 0.0
        %v4535 = vmax.f32 %v4527, 0.0
        %s4536 = scalar_lea.vmem %s12, 32
        %v4537 = vld [vmem:[%s4536] sm:$0xff]
        %v4538 = vld [vmem:[%s4536 + $0x8] sm:$0xff]
        %v4539 = vld [vmem:[%s4536 + $0x10] sm:$0xff]
        %v4540 = vld [vmem:[%s4536 + $0x18] sm:$0xff]
        %v4542 = vsel %vm2431, %v4537, 0
        %v4545 = vsel %vm2431, %v4538, 0
        %v4548 = vsel %vm2431, %v4539, 0
        %v4551 = vsel %vm2431, %v4540, 0
        %4553 = vmatprep.subr.mxu0 0.0
        %4554 = vmatpush1.msra.mxu0 0.0
        %4555 = vmatprep.subr.mxu0 0.0
        %4556 = vmatpush1.msra.mxu0 0.0
        %4557 = vmatprep.subr.mxu0 0.0
        %4558 = vmatpush1.msra.mxu0 0.0
        %4559 = vmatprep.subr.mxu0 0.0
        %4560 = vmatpush1.msra.mxu0 0.0
        %4561 = vmatprep.subr.mxu0 0.0
        %4562 = vmatpush1.msra.mxu0 0.0
        %4563 = vmatprep.subr.mxu0 0.0
        %4564 = vmatpush1.msra.mxu0 0.0
        %4565 = vmatprep.subr.mxu0 0.0
        %4566 = vmatpush1.msra.mxu0 0.0
        %4567 = vmatprep.subr.mxu0 0.0
        %4568 = vmatpush1.msra.mxu0 0.0
        %4569 = vmatprep.subr.mxu0 0.0
        %4570 = vmatpush1.msra.mxu0 %v4535
        %4571 = vmatprep.subr.mxu0 0.0
        %4572 = vmatpush1.msra.mxu0 %v4534
        %4573 = vmatprep.subr.mxu0 0.0
        %4574 = vmatpush1.msra.mxu0 %v4533
        %4575 = vmatprep.subr.mxu0 0.0
        %4576 = vmatpush1.msra.mxu0 %v4532
        %4577 = vmatprep.subr.mxu0 0.0
        %4578 = vmatpush1.msra.mxu0 %v4531
        %4579 = vmatprep.subr.mxu0 0.0
        %4580 = vmatpush1.msra.mxu0 %v4530
        %4581 = vmatprep.subr.mxu0 0.0
        %4582 = vmatpush1.msra.mxu0 %v4529
        %4583 = vmatprep.subr.mxu0 0.0
        %4584 = vmatpush1.msra.mxu0 %v4528
        %4585 = vmatprep.subr.mxu0 0.0
        %4586 = vmatpush2.msra.mxu0 0.0
        %4587 = vmatprep.subr.mxu0 0.0
        %4588 = vmatpush2.msra.mxu0 0.0
        %4589 = vmatprep.subr.mxu0 0.0
        %4590 = vmatpush2.msra.mxu0 0.0
        %4591 = vmatprep.subr.mxu0 0.0
        %4592 = vmatpush2.msra.mxu0 0.0
        %4593 = vmatprep.subr.mxu0 0.0
        %4594 = vmatpush2.msra.mxu0 0.0
        %4595 = vmatprep.subr.mxu0 0.0
        %4596 = vmatpush2.msra.mxu0 0.0
        %4597 = vmatprep.subr.mxu0 0.0
        %4598 = vmatpush2.msra.mxu0 0.0
        %4599 = vmatprep.subr.mxu0 0.0
        %4600 = vmatpush2.msra.mxu0 0.0
        %4601 = vmatprep.subr.mxu0 0.0
        %4602 = vmatpush2.msra.mxu0 0.0
        %4603 = vmatprep.subr.mxu0 0.0
        %4604 = vmatpush2.msra.mxu0 0.0
        %4605 = vmatprep.subr.mxu0 0.0
        %4606 = vmatpush2.msra.mxu0 0.0
        %4607 = vmatprep.subr.mxu0 0.0
        %4608 = vmatpush2.msra.mxu0 0.0
        %4609 = vmatprep.subr.mxu0 0.0
        %4610 = vmatpush2.msra.mxu0 0.0
        %4611 = vmatprep.subr.mxu0 0.0
        %4612 = vmatpush2.msra.mxu0 0.0
        %4613 = vmatprep.subr.mxu0 0.0
        %4614 = vmatpush2.msra.mxu0 0.0
        %4615 = vmatprep.subr.mxu0 0.0
        %4616 = vmatpush2.msra.mxu0 0.0
        %4617 = vmatprep.mubr.f32.mxu0 0.0
        %4618 = vmatmul.mubr.f32.gmra.mxu0 %v4542
        %v4619 = vpop.f32.mrf.mxu0
        %v4620 = vadd.f32 0.0, %v4619
        %v4621 = vpop.f32.mrf.mxu0
        %4622 = vmatprep.mubr.f32.mxu0 0.0
        %4623 = vmatmul.mubr.f32.gmra.mxu0 %v4545
        %v4624 = vpop.f32.mrf.mxu0
        %v4625 = vadd.f32 0.0, %v4624
        %v4626 = vpop.f32.mrf.mxu0
        %4627 = vmatprep.mubr.f32.mxu0 0.0
        %4628 = vmatmul.mubr.f32.gmra.mxu0 %v4548
        %v4629 = vpop.f32.mrf.mxu0
        %v4630 = vadd.f32 0.0, %v4629
        %v4631 = vpop.f32.mrf.mxu0
        %4632 = vmatprep.mubr.f32.mxu0 0.0
        %4633 = vmatmul.mubr.f32.gmra.mxu0 %v4551
        %v4634 = vpop.f32.mrf.mxu0
        %v4635 = vadd.f32 0.0, %v4634
        %v4636 = vpop.f32.mrf.mxu0
        %4637 = vdwg.mxu0
        %s4638 = scalar_lea.vmem %s13, 32
        %v4639 = vld [vmem:[%s4638] sm:$0xff]
        %v4640 = vld [vmem:[%s4638 + $0x8] sm:$0xff]
        %v4641 = vld [vmem:[%s4638 + $0x10] sm:$0xff]
        %v4642 = vld [vmem:[%s4638 + $0x18] sm:$0xff]
        %s4643 = scalar_lea.vmem %s14, 32
        %v4644 = vld [vmem:[%s4643] sm:$0xff]
        %v4645 = vld [vmem:[%s4643 + $0x8] sm:$0xff]
        %v4646 = vld [vmem:[%s4643 + $0x10] sm:$0xff]
        %v4647 = vld [vmem:[%s4643 + $0x18] sm:$0xff]
        %v4648 = vsel %vm585, %v4620, 0.0
        %4649 = vadd.xlane.f32.xlu0 %v4648
        %v4650 = vpop.xlane.xlu0 %4649
        %v4651 = vsel %vm585, %v4625, 0.0
        %4652 = vadd.xlane.f32.xlu0 %v4651
        %v4653 = vpop.xlane.xlu0 %4652
        %v4654 = vsel %vm585, %v4630, 0.0
        %4655 = vadd.xlane.f32.xlu0 %v4654
        %v4656 = vpop.xlane.xlu0 %4655
        %v4657 = vsel %vm585, %v4635, 0.0
        %4658 = vadd.xlane.f32.xlu0 %v4657
        %v4659 = vpop.xlane.xlu0 %4658
        %v4660 = vrot.slane %v4650, 4
        %v4661 = vadd.f32 %v4650, %v4660
        %v4662 = vrot.slane %v4661, 2
        %v4663 = vadd.f32 %v4661, %v4662
        %v4664 = vrot.slane %v4663, 1
        %v4665 = vadd.f32 %v4663, %v4664
        %v4666 = vrot.slane %v4653, 4
        %v4667 = vadd.f32 %v4653, %v4666
        %v4668 = vrot.slane %v4667, 2
        %v4669 = vadd.f32 %v4667, %v4668
        %v4670 = vrot.slane %v4669, 1
        %v4671 = vadd.f32 %v4669, %v4670
        %v4672 = vrot.slane %v4656, 4
        %v4673 = vadd.f32 %v4656, %v4672
        %v4674 = vrot.slane %v4673, 2
        %v4675 = vadd.f32 %v4673, %v4674
        %v4676 = vrot.slane %v4675, 1
        %v4677 = vadd.f32 %v4675, %v4676
        %v4678 = vrot.slane %v4659, 4
        %v4679 = vadd.f32 %v4659, %v4678
        %v4680 = vrot.slane %v4679, 2
        %v4681 = vadd.f32 %v4679, %v4680
        %v4682 = vrot.slane %v4681, 1
        %v4683 = vadd.f32 %v4681, %v4682
        %v4684 = vmul.f32 %v4665, 0.0078125
        %v4685 = vmul.f32 %v4671, 0.0078125
        %v4686 = vmul.f32 %v4677, 0.0078125
        %v4687 = vmul.f32 %v4683, 0.0078125
        %v4688 = vsub.f32 %v4620, %v4684
        %v4689 = vsub.f32 %v4625, %v4685
        %v4690 = vsub.f32 %v4630, %v4686
        %v4691 = vsub.f32 %v4635, %v4687
        %v4692 = vmul.f32 %v4688, %v4688
        %v4693 = vmul.f32 %v4689, %v4689
        %v4694 = vmul.f32 %v4690, %v4690
        %v4695 = vmul.f32 %v4691, %v4691
        %v4696 = vsel %vm585, %v4692, 0.0
        %4697 = vadd.xlane.f32.xlu0 %v4696
        %v4698 = vpop.xlane.xlu0 %4697
        %v4699 = vsel %vm585, %v4693, 0.0
        %4700 = vadd.xlane.f32.xlu0 %v4699
        %v4701 = vpop.xlane.xlu0 %4700
        %v4702 = vsel %vm585, %v4694, 0.0
        %4703 = vadd.xlane.f32.xlu0 %v4702
        %v4704 = vpop.xlane.xlu0 %4703
        %v4705 = vsel %vm585, %v4695, 0.0
        %4706 = vadd.xlane.f32.xlu0 %v4705
        %v4707 = vpop.xlane.xlu0 %4706
        %v4708 = vrot.slane %v4698, 4
        %v4709 = vadd.f32 %v4698, %v4708
        %v4710 = vrot.slane %v4709, 2
        %v4711 = vadd.f32 %v4709, %v4710
        %v4712 = vrot.slane %v4711, 1
        %v4713 = vadd.f32 %v4711, %v4712
        %v4714 = vrot.slane %v4701, 4
        %v4715 = vadd.f32 %v4701, %v4714
        %v4716 = vrot.slane %v4715, 2
        %v4717 = vadd.f32 %v4715, %v4716
        %v4718 = vrot.slane %v4717, 1
        %v4719 = vadd.f32 %v4717, %v4718
        %v4720 = vrot.slane %v4704, 4
        %v4721 = vadd.f32 %v4704, %v4720
        %v4722 = vrot.slane %v4721, 2
        %v4723 = vadd.f32 %v4721, %v4722
        %v4724 = vrot.slane %v4723, 1
        %v4725 = vadd.f32 %v4723, %v4724
        %v4726 = vrot.slane %v4707, 4
        %v4727 = vadd.f32 %v4707, %v4726
        %v4728 = vrot.slane %v4727, 2
        %v4729 = vadd.f32 %v4727, %v4728
        %v4730 = vrot.slane %v4729, 1
        %v4731 = vadd.f32 %v4729, %v4730
        %v4732 = vmul.f32 %v4713, 0.0078125
        %v4733 = vmul.f32 %v4719, 0.0078125
        %v4734 = vmul.f32 %v4725, 0.0078125
        %v4735 = vmul.f32 %v4731, 0.0078125
        %v4736 = vadd.f32 %v4732, 1e-05
        %v4737 = vadd.f32 %v4733, 1e-05
        %v4738 = vadd.f32 %v4734, 1e-05
        %v4739 = vadd.f32 %v4735, 1e-05
        %v4740 = vrsqrt.pop %v4736
        %v4741 = vrsqrt.pop %v4737
        %v4742 = vrsqrt.pop %v4738
        %v4743 = vrsqrt.pop %v4739
        %v4744 = vmul.f32 %v4688, %v4740
        %v4745 = vmul.f32 %v4689, %v4741
        %v4746 = vmul.f32 %v4690, %v4742
        %v4747 = vmul.f32 %v4691, %v4743
        %4749 = vset.pattern.permute.xlu0 0
        %4750 = vperm.xlu0 %4749, %v4639
        %v4751 = vpop.permute.xlu0 %4750
        %4754 = vset.pattern.permute.xlu0 0
        %4755 = vperm.xlu0 %4754, %v4640
        %v4756 = vpop.permute.xlu0 %4755
        %4759 = vset.pattern.permute.xlu0 0
        %4760 = vperm.xlu0 %4759, %v4641
        %v4761 = vpop.permute.xlu0 %4760
        %4764 = vset.pattern.permute.xlu0 0
        %4765 = vperm.xlu0 %4764, %v4642
        %v4766 = vpop.permute.xlu0 %4765
        %v4768 = vmul.f32 %v4744, %v4751
        %v4769 = vmul.f32 %v4745, %v4756
        %v4770 = vmul.f32 %v4746, %v4761
        %v4771 = vmul.f32 %v4747, %v4766
        %4773 = vset.pattern.permute.xlu0 0
        %4774 = vperm.xlu0 %4773, %v4644
        %v4775 = vpop.permute.xlu0 %4774
        %4778 = vset.pattern.permute.xlu0 0
        %4779 = vperm.xlu0 %4778, %v4645
        %v4780 = vpop.permute.xlu0 %4779
        %4783 = vset.pattern.permute.xlu0 0
        %4784 = vperm.xlu0 %4783, %v4646
        %v4785 = vpop.permute.xlu0 %4784
        %4788 = vset.pattern.permute.xlu0 0
        %4789 = vperm.xlu0 %4788, %v4647
        %v4790 = vpop.permute.xlu0 %4789
        %v4792 = vadd.f32 %v4768, %v4775
        %v4793 = vadd.f32 %v4769, %v4780
        %v4794 = vadd.f32 %v4770, %v4785
        %v4795 = vadd.f32 %v4771, %v4790
        %v4796 = vadd.f32 %v3986, %v4792
        %v4797 = vadd.f32 %v3991, %v4793
        %v4798 = vadd.f32 %v3996, %v4794
        %v4799 = vadd.f32 %v4001, %v4795
        %4800 = vst.msk [vmem:[%s568] sm:$0xff] %vm585, %v4796
        %4801 = vst.msk [vmem:[%s568 + $0x8] sm:$0xff] %vm585, %v4797
        %4802 = vst.msk [vmem:[%s568 + $0x10] sm:$0xff] %vm585, %v4798
        %4803 = vst.msk [vmem:[%s568 + $0x18] sm:$0xff] %vm585, %v4799
        %p4804 = scmp.lt.s32.totalorder %s28, 1
        %s4805 = scalar_select %p4804, %s28, 1
        %s4806 = smul.addr %s4805, 4
        %s4807 = smul.addr %s4806, 8
        %s4808 = scalar_lea.vmem %s15, %s4807
        %s4809 = sand.u32 %s392, 1
        %s4810 = sand.u32 %s392, 1
        %s4811 = smul.addr %s4810, 128
        %s4812 = scalar_lea.vmem [#allocation2], %s4811
        // Predicated region
        $region81: #{tpu_custom_call.1} parent=79 // pred_check
          %p4813 = pneg %p376
        $region82: #{tpu_custom_call.1} parent=79 // pred_check_branch
          %4815 = sbr.rel (%p4813) target = $region84
        $region83: #{tpu_custom_call.1} parent=79 // pred_region
          _
        $region84: #{tpu_custom_call.1} parent=79 // pred_fallthru
          _
        // Predicated region
        $region85: #{tpu_custom_call.1} parent=79 // pred_check
          %p4816 = pneg %p402
        $region86: #{tpu_custom_call.1} parent=79 // pred_check_branch
          %4818 = sbr.rel (%p4816) target = $region88
        $region87: #{tpu_custom_call.1} parent=79 // pred_region
          %s4819 = smul.addr %s28, 8
          %s4820 = smul.addr %s4819, 8
          %s4821 = scalar_lea.vmem %s16, %s4820
          // Predicated region
          $region89: #{tpu_custom_call.1} parent=87 // pred_check
            _
          $region90: #{tpu_custom_call.1} parent=87 // pred_check_branch
            %4823 = sbr.rel (0) target = $region92
          $region91: #{tpu_custom_call.1} parent=87 // pred_region
            // Predicated region
            $region93: #{tpu_custom_call.1} parent=91 // pred_check
              _
            $region94: #{tpu_custom_call.1} parent=91 // pred_check_branch
              %4825 = sbr.rel (0) target = $region96
            $region95: #{tpu_custom_call.1} parent=91 // pred_region
              // Predicated region
              $region108: #{tpu_custom_call.1} parent=95 // pred_check
                _
              $region109: #{tpu_custom_call.1} parent=95 // pred_check_branch
                %4871 = sbr.rel (0) target = $region111
              $region110: #{tpu_custom_call.1} parent=95 // pred_region
                loop: start=0, step=1, limit=1
                $region112: #{tpu_custom_call.1} parent=110 // loop_pre_header
                  _
                $region113: #{tpu_custom_call.1} parent=110 // loop_header
                  %s4873 = sphi 0, %s4877
                  %p4874 = scmp.ge.s32.totalorder %s4873, 1
                  %s4878 = sphi %s4812, %s4812
                  %s4879 = sphi %s4821, %s4821
                $region114: #{tpu_custom_call.1} parent=110 // loop_header_branch
                  %4876 = sbr.rel (%p4874) target = $region118
                $region115: #{tpu_custom_call.1} parent=110 // loop_body
                  %v4880 = vld [vmem:[%s4878] sm:$0xff]
                  %4881 = vst [vmem:[%s4879] sm:$0xff] %v4880
                  %v4882 = vld [vmem:[%s4878 + $0x8] sm:$0xff]
                  %4883 = vst [vmem:[%s4879 + $0x8] sm:$0xff] %v4882
                  %v4884 = vld [vmem:[%s4878 + $0x10] sm:$0xff]
                  %4885 = vst [vmem:[%s4879 + $0x10] sm:$0xff] %v4884
                  %v4886 = vld [vmem:[%s4878 + $0x18] sm:$0xff]
                  %4887 = vst [vmem:[%s4879 + $0x18] sm:$0xff] %v4886
                  %v4888 = vld [vmem:[%s4878 + $0x20] sm:$0xff]
                  %4889 = vst [vmem:[%s4879 + $0x20] sm:$0xff] %v4888
                  %v4890 = vld [vmem:[%s4878 + $0x28] sm:$0xff]
                  %4891 = vst [vmem:[%s4879 + $0x28] sm:$0xff] %v4890
                  %v4892 = vld [vmem:[%s4878 + $0x30] sm:$0xff]
                  %4893 = vst [vmem:[%s4879 + $0x30] sm:$0xff] %v4892
                  %v4894 = vld [vmem:[%s4878 + $0x38] sm:$0xff]
                  %4895 = vst [vmem:[%s4879 + $0x38] sm:$0xff] %v4894
                  %v4896 = vld [vmem:[%s4878 + $0x40] sm:$0xff]
                  %4897 = vst [vmem:[%s4879 + $0x80] sm:$0xff] %v4896
                  %v4898 = vld [vmem:[%s4878 + $0x48] sm:$0xff]
                  %4899 = vst [vmem:[%s4879 + $0x88] sm:$0xff] %v4898
                  %v4900 = vld [vmem:[%s4878 + $0x50] sm:$0xff]
                  %4901 = vst [vmem:[%s4879 + $0x90] sm:$0xff] %v4900
                  %v4902 = vld [vmem:[%s4878 + $0x58] sm:$0xff]
                  %4903 = vst [vmem:[%s4879 + $0x98] sm:$0xff] %v4902
                  %v4904 = vld [vmem:[%s4878 + $0x60] sm:$0xff]
                  %4905 = vst [vmem:[%s4879 + $0xa0] sm:$0xff] %v4904
                  %v4906 = vld [vmem:[%s4878 + $0x68] sm:$0xff]
                  %4907 = vst [vmem:[%s4879 + $0xa8] sm:$0xff] %v4906
                  %v4908 = vld [vmem:[%s4878 + $0x70] sm:$0xff]
                  %4909 = vst [vmem:[%s4879 + $0xb0] sm:$0xff] %v4908
                  %v4910 = vld [vmem:[%s4878 + $0x78] sm:$0xff]
                  %4911 = vst [vmem:[%s4879 + $0xb8] sm:$0xff] %v4910
                $region116: #{tpu_custom_call.1} parent=110 // loop_footer
                  %s4877 = sadd.s32 1, %s4873
                $region117: #{tpu_custom_call.1} parent=110 // loop_footer_branch
                  %4872 = sbr.rel target = $region113
                $region118: #{tpu_custom_call.1} parent=110 // loop_exit
                  _
              $region111: #{tpu_custom_call.1} parent=95 // pred_fallthru
                _
              // Predicated region
              $region119: #{tpu_custom_call.1} parent=95 // pred_check
                _
              $region120: #{tpu_custom_call.1} parent=95 // pred_check_branch
                %4913 = sbr.rel target = $region122
              $region121: #{tpu_custom_call.1} parent=95 // pred_region
                _
              $region122: #{tpu_custom_call.1} parent=95 // pred_fallthru
                _
            $region96: #{tpu_custom_call.1} parent=91 // pred_fallthru
              _
            // Predicated region
            $region97: #{tpu_custom_call.1} parent=91 // pred_check
              _
            $region98: #{tpu_custom_call.1} parent=91 // pred_check_branch
              %4827 = sbr.rel target = $region100
            $region99: #{tpu_custom_call.1} parent=91 // pred_region
              %s4829 = ssub.s32 256, 1
              loop: start=0, step=1, limit=1
              $region101: #{tpu_custom_call.1} parent=99 // loop_pre_header
                _
              $region102: #{tpu_custom_call.1} parent=99 // loop_header
                %s4831 = sphi 0, %s4835
                %p4832 = scmp.ge.s32.totalorder %s4831, 1
                %s4836 = sphi %s4812, %s4812
                %s4837 = sphi %s4821, %s4821
              $region103: #{tpu_custom_call.1} parent=99 // loop_header_branch
                %4834 = sbr.rel (%p4832) target = $region107
              $region104: #{tpu_custom_call.1} parent=99 // loop_body
                %v4838 = vld [vmem:[%s4836] sm:%s4829]
                %4839 = vst [vmem:[%s4837] sm:%s4829] %v4838
                %v4840 = vld [vmem:[%s4836 + $0x8] sm:%s4829]
                %4841 = vst [vmem:[%s4837 + $0x8] sm:%s4829] %v4840
                %v4842 = vld [vmem:[%s4836 + $0x10] sm:%s4829]
                %4843 = vst [vmem:[%s4837 + $0x10] sm:%s4829] %v4842
                %v4844 = vld [vmem:[%s4836 + $0x18] sm:%s4829]
                %4845 = vst [vmem:[%s4837 + $0x18] sm:%s4829] %v4844
                %v4846 = vld [vmem:[%s4836 + $0x20] sm:%s4829]
                %4847 = vst [vmem:[%s4837 + $0x20] sm:%s4829] %v4846
                %v4848 = vld [vmem:[%s4836 + $0x28] sm:%s4829]
                %4849 = vst [vmem:[%s4837 + $0x28] sm:%s4829] %v4848
                %v4850 = vld [vmem:[%s4836 + $0x30] sm:%s4829]
                %4851 = vst [vmem:[%s4837 + $0x30] sm:%s4829] %v4850
                %v4852 = vld [vmem:[%s4836 + $0x38] sm:%s4829]
                %4853 = vst [vmem:[%s4837 + $0x38] sm:%s4829] %v4852
                %v4854 = vld [vmem:[%s4836 + $0x40] sm:%s4829]
                %4855 = vst [vmem:[%s4837 + $0x80] sm:%s4829] %v4854
                %v4856 = vld [vmem:[%s4836 + $0x48] sm:%s4829]
                %4857 = vst [vmem:[%s4837 + $0x88] sm:%s4829] %v4856
                %v4858 = vld [vmem:[%s4836 + $0x50] sm:%s4829]
                %4859 = vst [vmem:[%s4837 + $0x90] sm:%s4829] %v4858
                %v4860 = vld [vmem:[%s4836 + $0x58] sm:%s4829]
                %4861 = vst [vmem:[%s4837 + $0x98] sm:%s4829] %v4860
                %v4862 = vld [vmem:[%s4836 + $0x60] sm:%s4829]
                %4863 = vst [vmem:[%s4837 + $0xa0] sm:%s4829] %v4862
                %v4864 = vld [vmem:[%s4836 + $0x68] sm:%s4829]
                %4865 = vst [vmem:[%s4837 + $0xa8] sm:%s4829] %v4864
                %v4866 = vld [vmem:[%s4836 + $0x70] sm:%s4829]
                %4867 = vst [vmem:[%s4837 + $0xb0] sm:%s4829] %v4866
                %v4868 = vld [vmem:[%s4836 + $0x78] sm:%s4829]
                %4869 = vst [vmem:[%s4837 + $0xb8] sm:%s4829] %v4868
              $region105: #{tpu_custom_call.1} parent=99 // loop_footer
                %s4835 = sadd.s32 1, %s4831
              $region106: #{tpu_custom_call.1} parent=99 // loop_footer_branch
                %4830 = sbr.rel target = $region102
              $region107: #{tpu_custom_call.1} parent=99 // loop_exit
                _
            $region100: #{tpu_custom_call.1} parent=91 // pred_fallthru
              _
          $region92: #{tpu_custom_call.1} parent=87 // pred_fallthru
            _
          %4914 = vnop
        $region88: #{tpu_custom_call.1} parent=79 // pred_fallthru
          _
      $region80: #{tpu_custom_call.1} parent=5 // pred_fallthru
        _
      %p4915 = scmp.le.s32.totalorder 2, %s23
      // Predicated region
      $region123: #{tpu_custom_call.1} parent=5 // pred_check
        %p4916 = pneg %p4915
      $region124: #{tpu_custom_call.1} parent=5 // pred_check_branch
        %4918 = sbr.rel (%p4916) target = $region126
      $region125: #{tpu_custom_call.1} parent=5 // pred_region
        %s4919 = ssub.s32 %s23, 2
        // Predicated region
        $region127: #{tpu_custom_call.1} parent=125 // pred_check
          %p4920 = pneg %p382
        $region128: #{tpu_custom_call.1} parent=125 // pred_check_branch
          %4922 = sbr.rel (%p4920) target = $region130
        $region129: #{tpu_custom_call.1} parent=125 // pred_region
          %p4923 = scmp.lt.s32.totalorder %s29, 1
          %s4924 = scalar_select %p4923, %s29, 1
          %s4925 = smul.addr %s4924, 4
          %s4926 = smul.addr %s4925, 8
          %s4927 = scalar_lea.vmem %s15, %s4926
        $region130: #{tpu_custom_call.1} parent=125 // pred_fallthru
          _
        // Predicated region
        $region131: #{tpu_custom_call.1} parent=125 // pred_check
          %p4928 = pneg %p408
        $region132: #{tpu_custom_call.1} parent=125 // pred_check_branch
          %4930 = sbr.rel (%p4928) target = $region134
        $region133: #{tpu_custom_call.1} parent=125 // pred_region
          %s4931 = sand.u32 %s393, 1
          %s4932 = sand.u32 %s393, 1
          %s4933 = smul.addr %s4932, 128
          %s4934 = scalar_lea.vmem [#allocation2], %s4933
        $region134: #{tpu_custom_call.1} parent=125 // pred_fallthru
          _
      $region126: #{tpu_custom_call.1} parent=5 // pred_fallthru
        _
    $region6: #{tpu_custom_call.1} parent=1 // loop_footer
      %s27 = sadd.s32 1, %s23
    $region7: #{tpu_custom_call.1} parent=1 // loop_footer_branch
      %22 = sbr.rel target = $region3
    $region8: #{tpu_custom_call.1} parent=1 // loop_exit
      _

</llo_original>
